<compile_context>
chip_gen: v6e
topology: v6e:2x2x1
jax: 0.10.0
libtpu: 0.0.40
codegen_flags: <defaults>
</compile_context>

<pallas_src>
import jax
import jax.numpy as jnp
from jax.experimental import pallas as pl
from jax.experimental.pallas import tpu as pltpu


def _make_resblock_kernel(C, H, W, Bt):
    HW = H * W
    eps = 1e-5
    TAPS = [(kh, kw) for kh in range(3) for kw in range(3)]

    def kernel(x_ref, emb_ref, mask_ref, par_ref, w_ref, out_ref, im_ref):
        # Packed per-channel params: [gn1_w, gn1_b, b1, gn2_w, gn2_b, b2, 0, 0].
        par = par_ref[...]                       # (C, 8) f32
        gn1_w, gn1_b, b1 = par[:, 0:1], par[:, 1:2], par[:, 2:3]
        gn2_w, gn2_b, b2 = par[:, 3:4], par[:, 4:5], par[:, 5:6]

        # Per-tap validity masks (rolls are circular -> mask row AND column edges).
        masks = mask_ref[...]                    # (9, HW) f32
        mask_rows = [masks[t:t + 1, :] for t in range(9)]

        def group_norm_silu(h, w, b):
            # GroupNorm(32, 32) == per-channel stats over spatial; one-pass variance.
            mean = jnp.mean(h, axis=-1, keepdims=True)
            var = jnp.mean(h * h, axis=-1, keepdims=True) - mean * mean
            hn = (h - mean) * jax.lax.rsqrt(var + eps)
            hn = hn * w + b
            return hn * jax.nn.sigmoid(hn)

        def build_taps(h, b):
            # h: (C, HW) f32 activations of batch item b.  Nine circularly rolled
            # copies, masked to reproduce zero padding, stored as bf16 at lane
            # offset b*HW (multiple of 128 -> aligned stores).
            for t, (kh, kw) in enumerate(TAPS):
                s = (kh - 1) * W + (kw - 1)
                if s == 0:
                    tap = h                               # center tap: no roll/mask
                else:
                    tap = pltpu.roll(h, shift=(-s) % HW, axis=1) * mask_rows[t]
                im_ref[t * C:(t + 1) * C, b * HW:(b + 1) * HW] = tap.astype(jnp.bfloat16)

        # ---- in_layers: GroupNorm + SiLU + im2col taps, per packed batch item ----
        for b in range(Bt):
            hb = group_norm_silu(x_ref[b].astype(jnp.float32), gn1_w, gn1_b)
            build_taps(hb, b)
        # One fat MXU matmul: (C, 9C) bf16 @ (9C, Bt*HW) bf16 -> f32.
        h = jnp.dot(w_ref[0], im_ref[...], preferred_element_type=jnp.float32) + b1

        # ---- emb add (emb_layers hoisted to wrapper) + out_layers GN/SiLU/taps ----
        for b in range(Bt):
            hb = h[:, b * HW:(b + 1) * HW] + emb_ref[b]
            hb = group_norm_silu(hb, gn2_w, gn2_b)
            build_taps(hb, b)
        h = jnp.dot(w_ref[1], im_ref[...], preferred_element_type=jnp.float32) + b2

        # ---- skip_connection = Identity: residual add, per packed batch item ----
        for b in range(Bt):
            out_ref[b] = (x_ref[b].astype(jnp.float32)
                          + h[:, b * HW:(b + 1) * HW]).astype(out_ref.dtype)

    return kernel


def resblock_forward(x_nchw, emb, params, *, max_bt=8):
    """Pallas implementation. x_nchw: (B, C, H, W), emb: (B, E) -> (B, C, H, W)."""
    B, C, H, W = x_nchw.shape
    assert C == 32, "kernel assumes GroupNorm(32, C) with one channel per group"
    HW = H * W

    # Batch packing: largest Bt (<= max_bt) dividing B that still leaves >= 2 grid
    # steps (megacore sharding + DMA/compute overlap on v7x).
    Bt = 1
    for bt in range(1, min(B, max_bt) + 1):
        if B % bt == 0 and (B // bt >= 2 or B == 1):
            Bt = bt
    grid_b = B // Bt

    # NCHW -> (B, C, H*W): free reshape; flattened spatial is the lane axis.
    x_flat = x_nchw.reshape(B, C, HW)

    # emb_layers (SiLU + Linear) hoisted out of the kernel: tiny batched matmul.
    e = emb.astype(jnp.float32)
    e = e * jax.nn.sigmoid(e)
    emb_out = (e @ params["we"].T.astype(jnp.float32)
               + params["be"].astype(jnp.float32)).reshape(B, C, 1)

    # Conv weights (Cout, Cin, 3, 3) -> (Cout, 9*Cin) with tap order t = kh*3 + kw;
    # both convs stacked into one bf16 input (MXU-native, one DMA descriptor).
    w1m = jnp.transpose(params["w1"], (0, 2, 3, 1)).reshape(C, 9 * C)
    w2m = jnp.transpose(params["w2"], (0, 2, 3, 1)).reshape(C, 9 * C)
    w_pack = jnp.stack([w1m, w2m], axis=0).astype(jnp.bfloat16)

    # Per-tap validity masks over the flattened spatial axis.  The rolls in the
    # kernel are circular, so both row and column out-of-bounds taps are masked;
    # this reproduces the conv's zero padding exactly.
    pos = jnp.arange(HW, dtype=jnp.int32)
    row, col = pos // W, pos % W
    mask_list = []
    for kh in range(3):
        for kw in range(3):
            rr, cc = row + (kh - 1), col + (kw - 1)
            mask_list.append((rr >= 0) & (rr < H) & (cc >= 0) & (cc < W))
    masks = jnp.stack(mask_list, axis=0).astype(jnp.float32)       # (9, HW)

    # Six tiny per-channel vectors folded into one (C, 8) input.
    f32 = lambda v: v.astype(jnp.float32)
    zeros = jnp.zeros((C,), jnp.float32)
    par = jnp.stack([f32(params["gn1_w"]), f32(params["gn1_b"]), f32(params["b1"]),
                     f32(params["gn2_w"]), f32(params["gn2_b"]), f32(params["b2"]),
                     zeros, zeros], axis=1)                        # (C, 8)

    kernel = _make_resblock_kernel(C, H, W, Bt)

    cost = pl.CostEstimate(
        flops=2 * 2 * C * (9 * C) * B * HW,          # two 3x3 convs as matmuls
        transcendentals=2 * B * C * HW,              # two SiLUs over the activations
        bytes_accessed=(2 * B * C * HW + B * C) * 4 + 2 * 9 * C * C * 2,
    )

    out_flat = pl.pallas_call(
        kernel,
        out_shape=jax.ShapeDtypeStruct((B, C, HW), x_nchw.dtype),
        grid_spec=pltpu.PrefetchScalarGridSpec(
            num_scalar_prefetch=0,
            grid=(grid_b,),
            in_specs=[
                pl.BlockSpec((Bt, C, HW), lambda g: (g, 0, 0)),    # x (flattened)
                pl.BlockSpec((Bt, C, 1), lambda g: (g, 0, 0)),     # precomputed emb_out
                pl.BlockSpec((9, HW), lambda g: (0, 0)),           # tap validity masks
                pl.BlockSpec((C, 8), lambda g: (0, 0)),            # packed per-channel params
                pl.BlockSpec((2, C, 9 * C), lambda g: (0, 0, 0)),  # conv weights (bf16)
            ],
            out_specs=pl.BlockSpec((Bt, C, HW), lambda g: (g, 0, 0)),
            scratch_shapes=[
                pltpu.VMEM((9 * C, Bt * HW), jnp.bfloat16),        # bf16 im2col buffer
            ],
        ),
        compiler_params=pltpu.CompilerParams(
            dimension_semantics=("parallel",)),
        cost_estimate=cost,
    )(x_flat, emb_out, masks, par, w_pack)

    return out_flat.reshape(B, C, H, W)


def resblock_reference(x, emb, params):
    """Pure-JAX f32 reference (mirrors the PyTorch forward) for validation."""
    eps = 1e-5

    def groupnorm(h, w, b):  # groups == channels -> per-channel over spatial
        mean = h.mean(axis=(2, 3), keepdims=True)
        var = ((h - mean) ** 2).mean(axis=(2, 3), keepdims=True)
        hn = (h - mean) / jnp.sqrt(var + eps)
        return hn * w[None, :, None, None] + b[None, :, None, None]

    silu = lambda v: v * jax.nn.sigmoid(v)

    def conv(h, w, b):
        y = jax.lax.conv_general_dilated(
            h, w, (1, 1), ((1, 1), (1, 1)),
            dimension_numbers=("NCHW", "OIHW", "NCHW"))
        return y + b[None, :, None, None]

    h = conv(silu(groupnorm(x, params["gn1_w"], params["gn1_b"])),
             params["w1"], params["b1"])
    emb_out = silu(emb) @ params["we"].T + params["be"]            # (B, C)
    h = h + emb_out[:, :, None, None]
    h = conv(silu(groupnorm(h, params["gn2_w"], params["gn2_b"])),
             params["w2"], params["b2"])
    return x + h


if __name__ == "__main__":
    # B=4 exercises batch packing (Bt=2) while keeping a 2-step grid (megacore).
    B, C, H, W, E = 4, 32, 16, 16, 32

    key = jax.random.PRNGKey(0)
    ks = jax.random.split(key, 14)
    x = jax.random.normal(ks[0], (B, C, H, W), jnp.float32)
    emb = jax.random.normal(ks[1], (B, E), jnp.float32)

    params = {
        # GroupNorm affine params (perturbed so the test is non-trivial)
        "gn1_w": 1.0 + 0.1 * jax.random.normal(ks[2], (C,), jnp.float32),
        "gn1_b": 0.1 * jax.random.normal(ks[3], (C,), jnp.float32),
        # in_layers conv: (Cout, Cin, 3, 3)
        "w1": 0.1 * jax.random.normal(ks[4], (C, C, 3, 3), jnp.float32),
        "b1": 0.1 * jax.random.normal(ks[5], (C,), jnp.float32),
        # emb Linear: weight (out, in), bias (out,)
        "we": 0.1 * jax.random.normal(ks[6], (C, E), jnp.float32),
        "be": 0.1 * jax.random.normal(ks[7], (C,), jnp.float32),
        "gn2_w": 1.0 + 0.1 * jax.random.normal(ks[8], (C,), jnp.float32),
        "gn2_b": 0.1 * jax.random.normal(ks[9], (C,), jnp.float32),
        # out_layers conv
        "w2": 0.1 * jax.random.normal(ks[10], (C, C, 3, 3), jnp.float32),
        "b2": 0.1 * jax.random.normal(ks[11], (C,), jnp.float32),
    }

    out = resblock_forward(x, emb, params)
    out = jax.block_until_ready(out)

    ref = jax.block_until_ready(resblock_reference(x, emb, params))
    assert out.shape == (B, C, H, W)
    # bf16 MXU operands with f32 accumulation -> slightly looser tolerance than f32.
    assert jnp.allclose(out, ref, atol=3e-2, rtol=3e-2), (
        f"max abs err {jnp.max(jnp.abs(out - ref))}")

    print("KERNEL_OK")
</pallas_src>

<mosaic_0001>
module attributes {stable_mosaic.version = 11 : i64} {
  func.func @kernel(%arg0: i32, %arg1: memref<2x32x256xf32, #tpu.memory_space<vmem>>, %arg2: memref<2x32x1xf32, #tpu.memory_space<vmem>>, %arg3: memref<9x256xf32, #tpu.memory_space<vmem>>, %arg4: memref<32x8xf32, #tpu.memory_space<vmem>>, %arg5: memref<2x32x288xbf16, #tpu.memory_space<vmem>>, %arg6: memref<2x32x256xf32, #tpu.memory_space<vmem>>, %arg7: memref<288x512xbf16, #tpu.memory_space<vmem>>) attributes {dimension_semantics = [#tpu.dimension_semantics<parallel>], iteration_bounds = array<i64: 2>, scalar_prefetch = 0 : i64, scratch_operands = 1 : i64, tpu.core_type = #tpu.core_type<tc>, window_params = [{transform_indices = @transform_0, window_bounds = array<i64: 2, 32, 256>}, {transform_indices = @transform_1, window_bounds = array<i64: 2, 32, 1>}, {pipeline_mode = #tpu.pipeline_mode<synchronous>, transform_indices = @transform_2, window_bounds = array<i64: 9, 256>}, {pipeline_mode = #tpu.pipeline_mode<synchronous>, transform_indices = @transform_3, window_bounds = array<i64: 32, 8>}, {pipeline_mode = #tpu.pipeline_mode<synchronous>, transform_indices = @transform_4, window_bounds = array<i64: 2, 32, 288>}, {transform_indices = @transform_5, window_bounds = array<i64: 2, 32, 256>}]} {
    %c0 = arith.constant 0 : index
    %c0_0 = arith.constant 0 : index
    %0 = vector.load %arg4[%c0, %c0_0] : memref<32x8xf32, #tpu.memory_space<vmem>>, vector<32x8xf32>
    %1 = vector.extract_strided_slice %0 {offsets = [0, 0], sizes = [32, 1], strides = [1, 1]} : vector<32x8xf32> to vector<32x1xf32>
    %2 = vector.extract_strided_slice %0 {offsets = [0, 1], sizes = [32, 1], strides = [1, 1]} : vector<32x8xf32> to vector<32x1xf32>
    %3 = vector.extract_strided_slice %0 {offsets = [0, 2], sizes = [32, 1], strides = [1, 1]} : vector<32x8xf32> to vector<32x1xf32>
    %4 = vector.extract_strided_slice %0 {offsets = [0, 3], sizes = [32, 1], strides = [1, 1]} : vector<32x8xf32> to vector<32x1xf32>
    %5 = vector.extract_strided_slice %0 {offsets = [0, 4], sizes = [32, 1], strides = [1, 1]} : vector<32x8xf32> to vector<32x1xf32>
    %6 = vector.extract_strided_slice %0 {offsets = [0, 5], sizes = [32, 1], strides = [1, 1]} : vector<32x8xf32> to vector<32x1xf32>
    %c0_1 = arith.constant 0 : index
    %c0_2 = arith.constant 0 : index
    %7 = vector.load %arg3[%c0_1, %c0_2] : memref<9x256xf32, #tpu.memory_space<vmem>>, vector<9x256xf32>
    %8 = vector.extract_strided_slice %7 {offsets = [0, 0], sizes = [1, 256], strides = [1, 1]} : vector<9x256xf32> to vector<1x256xf32>
    %9 = vector.extract_strided_slice %7 {offsets = [1, 0], sizes = [1, 256], strides = [1, 1]} : vector<9x256xf32> to vector<1x256xf32>
    %10 = vector.extract_strided_slice %7 {offsets = [2, 0], sizes = [1, 256], strides = [1, 1]} : vector<9x256xf32> to vector<1x256xf32>
    %11 = vector.extract_strided_slice %7 {offsets = [3, 0], sizes = [1, 256], strides = [1, 1]} : vector<9x256xf32> to vector<1x256xf32>
    %12 = vector.extract_strided_slice %7 {offsets = [5, 0], sizes = [1, 256], strides = [1, 1]} : vector<9x256xf32> to vector<1x256xf32>
    %13 = vector.extract_strided_slice %7 {offsets = [6, 0], sizes = [1, 256], strides = [1, 1]} : vector<9x256xf32> to vector<1x256xf32>
    %14 = vector.extract_strided_slice %7 {offsets = [7, 0], sizes = [1, 256], strides = [1, 1]} : vector<9x256xf32> to vector<1x256xf32>
    %15 = vector.extract_strided_slice %7 {offsets = [8, 0], sizes = [1, 256], strides = [1, 1]} : vector<9x256xf32> to vector<1x256xf32>
    %c0_3 = arith.constant 0 : index
    %c0_4 = arith.constant 0 : index
    %c0_5 = arith.constant 0 : index
    %16 = vector.load %arg1[%c0_3, %c0_4, %c0_5] : memref<2x32x256xf32, #tpu.memory_space<vmem>>, vector<1x32x256xf32>
    %17 = vector.shape_cast %16 : vector<1x32x256xf32> to vector<32x256xf32>
    %cst = arith.constant dense<0.000000e+00> : vector<32xf32>
    %18 = vector.multi_reduction <add>, %17, %cst [1] : vector<32x256xf32> to vector<32xf32>
    %19 = vector.shape_cast %18 : vector<32xf32> to vector<32x1xf32>
    %cst_6 = arith.constant 2.560000e+02 : f32
    %20 = vector.broadcast %cst_6 : f32 to vector<32x1xf32>
    %21 = arith.divf %19, %20 : vector<32x1xf32>
    %22 = arith.mulf %17, %17 : vector<32x256xf32>
    %cst_7 = arith.constant dense<0.000000e+00> : vector<32xf32>
    %23 = vector.multi_reduction <add>, %22, %cst_7 [1] : vector<32x256xf32> to vector<32xf32>
    %24 = vector.shape_cast %23 : vector<32xf32> to vector<32x1xf32>
    %cst_8 = arith.constant 2.560000e+02 : f32
    %25 = vector.broadcast %cst_8 : f32 to vector<32x1xf32>
    %26 = arith.divf %24, %25 : vector<32x1xf32>
    %27 = arith.mulf %21, %21 : vector<32x1xf32>
    %28 = arith.subf %26, %27 : vector<32x1xf32>
    %29 = vector.broadcast %21 : vector<32x1xf32> to vector<32x256xf32>
    %30 = arith.subf %17, %29 : vector<32x256xf32>
    %cst_9 = arith.constant 9.99999974E-6 : f32
    %31 = vector.broadcast %cst_9 : f32 to vector<32x1xf32>
    %32 = arith.addf %28, %31 : vector<32x1xf32>
    %33 = math.rsqrt %32 : vector<32x1xf32>
    %34 = vector.broadcast %33 : vector<32x1xf32> to vector<32x256xf32>
    %35 = arith.mulf %30, %34 : vector<32x256xf32>
    %36 = vector.broadcast %1 : vector<32x1xf32> to vector<32x256xf32>
    %37 = arith.mulf %35, %36 : vector<32x256xf32>
    %38 = vector.broadcast %2 : vector<32x1xf32> to vector<32x256xf32>
    %39 = arith.addf %37, %38 : vector<32x256xf32>
    %40 = arith.negf %39 : vector<32x256xf32>
    %41 = math.exp %40 : vector<32x256xf32>
    %cst_10 = arith.constant 1.000000e+00 : f32
    %42 = vector.broadcast %cst_10 : f32 to vector<32x256xf32>
    %43 = arith.addf %42, %41 : vector<32x256xf32>
    %44 = arith.divf %42, %43 : vector<32x256xf32>
    %45 = arith.mulf %39, %44 : vector<32x256xf32>
    %c17_i32 = arith.constant 17 : i32
    %46 = tpu.dynamic_rotate %45 by %c17_i32 dim 1 : vector<32x256xf32>, i32 -> vector<32x256xf32>
    %47 = vector.broadcast %8 : vector<1x256xf32> to vector<32x256xf32>
    %48 = arith.mulf %46, %47 : vector<32x256xf32>
    %49 = arith.truncf %48 : vector<32x256xf32> to vector<32x256xbf16>
    %c0_11 = arith.constant 0 : index
    %c0_12 = arith.constant 0 : index
    %50 = vector.load %arg7[%c0_11, %c0_12] : memref<288x512xbf16, #tpu.memory_space<vmem>>, vector<32x256xbf16>
    tpu.vector_store %arg7[%c0_11, %c0_12], %49 {strides = array<i32>} : memref<288x512xbf16, #tpu.memory_space<vmem>>, vector<32x256xbf16>,
    %c16_i32 = arith.constant 16 : i32
    %51 = tpu.dynamic_rotate %45 by %c16_i32 dim 1 : vector<32x256xf32>, i32 -> vector<32x256xf32>
    %52 = vector.broadcast %9 : vector<1x256xf32> to vector<32x256xf32>
    %53 = arith.mulf %51, %52 : vector<32x256xf32>
    %54 = arith.truncf %53 : vector<32x256xf32> to vector<32x256xbf16>
    %c32 = arith.constant 32 : index
    %c0_13 = arith.constant 0 : index
    %55 = vector.load %arg7[%c32, %c0_13] : memref<288x512xbf16, #tpu.memory_space<vmem>>, vector<32x256xbf16>
    tpu.vector_store %arg7[%c32, %c0_13], %54 {strides = array<i32>} : memref<288x512xbf16, #tpu.memory_space<vmem>>, vector<32x256xbf16>,
    %c15_i32 = arith.constant 15 : i32
    %56 = tpu.dynamic_rotate %45 by %c15_i32 dim 1 : vector<32x256xf32>, i32 -> vector<32x256xf32>
    %57 = vector.broadcast %10 : vector<1x256xf32> to vector<32x256xf32>
    %58 = arith.mulf %56, %57 : vector<32x256xf32>
    %59 = arith.truncf %58 : vector<32x256xf32> to vector<32x256xbf16>
    %c64 = arith.constant 64 : index
    %c0_14 = arith.constant 0 : index
    %60 = vector.load %arg7[%c64, %c0_14] : memref<288x512xbf16, #tpu.memory_space<vmem>>, vector<32x256xbf16>
    tpu.vector_store %arg7[%c64, %c0_14], %59 {strides = array<i32>} : memref<288x512xbf16, #tpu.memory_space<vmem>>, vector<32x256xbf16>,
    %c1_i32 = arith.constant 1 : i32
    %61 = tpu.dynamic_rotate %45 by %c1_i32 dim 1 : vector<32x256xf32>, i32 -> vector<32x256xf32>
    %62 = vector.broadcast %11 : vector<1x256xf32> to vector<32x256xf32>
    %63 = arith.mulf %61, %62 : vector<32x256xf32>
    %64 = arith.truncf %63 : vector<32x256xf32> to vector<32x256xbf16>
    %c96 = arith.constant 96 : index
    %c0_15 = arith.constant 0 : index
    %65 = vector.load %arg7[%c96, %c0_15] : memref<288x512xbf16, #tpu.memory_space<vmem>>, vector<32x256xbf16>
    tpu.vector_store %arg7[%c96, %c0_15], %64 {strides = array<i32>} : memref<288x512xbf16, #tpu.memory_space<vmem>>, vector<32x256xbf16>,
    %66 = arith.truncf %45 : vector<32x256xf32> to vector<32x256xbf16>
    %c128 = arith.constant 128 : index
    %c0_16 = arith.constant 0 : index
    %67 = vector.load %arg7[%c128, %c0_16] : memref<288x512xbf16, #tpu.memory_space<vmem>>, vector<32x256xbf16>
    tpu.vector_store %arg7[%c128, %c0_16], %66 {strides = array<i32>} : memref<288x512xbf16, #tpu.memory_space<vmem>>, vector<32x256xbf16>,
    %c255_i32 = arith.constant 255 : i32
    %68 = tpu.dynamic_rotate %45 by %c255_i32 dim 1 : vector<32x256xf32>, i32 -> vector<32x256xf32>
    %69 = vector.broadcast %12 : vector<1x256xf32> to vector<32x256xf32>
    %70 = arith.mulf %68, %69 : vector<32x256xf32>
    %71 = arith.truncf %70 : vector<32x256xf32> to vector<32x256xbf16>
    %c160 = arith.constant 160 : index
    %c0_17 = arith.constant 0 : index
    %72 = vector.load %arg7[%c160, %c0_17] : memref<288x512xbf16, #tpu.memory_space<vmem>>, vector<32x256xbf16>
    tpu.vector_store %arg7[%c160, %c0_17], %71 {strides = array<i32>} : memref<288x512xbf16, #tpu.memory_space<vmem>>, vector<32x256xbf16>,
    %c241_i32 = arith.constant 241 : i32
    %73 = tpu.dynamic_rotate %45 by %c241_i32 dim 1 : vector<32x256xf32>, i32 -> vector<32x256xf32>
    %74 = vector.broadcast %13 : vector<1x256xf32> to vector<32x256xf32>
    %75 = arith.mulf %73, %74 : vector<32x256xf32>
    %76 = arith.truncf %75 : vector<32x256xf32> to vector<32x256xbf16>
    %c192 = arith.constant 192 : index
    %c0_18 = arith.constant 0 : index
    %77 = vector.load %arg7[%c192, %c0_18] : memref<288x512xbf16, #tpu.memory_space<vmem>>, vector<32x256xbf16>
    tpu.vector_store %arg7[%c192, %c0_18], %76 {strides = array<i32>} : memref<288x512xbf16, #tpu.memory_space<vmem>>, vector<32x256xbf16>,
    %c240_i32 = arith.constant 240 : i32
    %78 = tpu.dynamic_rotate %45 by %c240_i32 dim 1 : vector<32x256xf32>, i32 -> vector<32x256xf32>
    %79 = vector.broadcast %14 : vector<1x256xf32> to vector<32x256xf32>
    %80 = arith.mulf %78, %79 : vector<32x256xf32>
    %81 = arith.truncf %80 : vector<32x256xf32> to vector<32x256xbf16>
    %c224 = arith.constant 224 : index
    %c0_19 = arith.constant 0 : index
    %82 = vector.load %arg7[%c224, %c0_19] : memref<288x512xbf16, #tpu.memory_space<vmem>>, vector<32x256xbf16>
    tpu.vector_store %arg7[%c224, %c0_19], %81 {strides = array<i32>} : memref<288x512xbf16, #tpu.memory_space<vmem>>, vector<32x256xbf16>,
    %c239_i32 = arith.constant 239 : i32
    %83 = tpu.dynamic_rotate %45 by %c239_i32 dim 1 : vector<32x256xf32>, i32 -> vector<32x256xf32>
    %84 = vector.broadcast %15 : vector<1x256xf32> to vector<32x256xf32>
    %85 = arith.mulf %83, %84 : vector<32x256xf32>
    %86 = arith.truncf %85 : vector<32x256xf32> to vector<32x256xbf16>
    %c256 = arith.constant 256 : index
    %c0_20 = arith.constant 0 : index
    %87 = vector.load %arg7[%c256, %c0_20] : memref<288x512xbf16, #tpu.memory_space<vmem>>, vector<32x256xbf16>
    tpu.vector_store %arg7[%c256, %c0_20], %86 {strides = array<i32>} : memref<288x512xbf16, #tpu.memory_space<vmem>>, vector<32x256xbf16>,
    %c1 = arith.constant 1 : index
    %c0_21 = arith.constant 0 : index
    %c0_22 = arith.constant 0 : index
    %88 = vector.load %arg1[%c1, %c0_21, %c0_22] : memref<2x32x256xf32, #tpu.memory_space<vmem>>, vector<1x32x256xf32>
    %89 = vector.shape_cast %88 : vector<1x32x256xf32> to vector<32x256xf32>
    %cst_23 = arith.constant dense<0.000000e+00> : vector<32xf32>
    %90 = vector.multi_reduction <add>, %89, %cst_23 [1] : vector<32x256xf32> to vector<32xf32>
    %91 = vector.shape_cast %90 : vector<32xf32> to vector<32x1xf32>
    %cst_24 = arith.constant 2.560000e+02 : f32
    %92 = vector.broadcast %cst_24 : f32 to vector<32x1xf32>
    %93 = arith.divf %91, %92 : vector<32x1xf32>
    %94 = arith.mulf %89, %89 : vector<32x256xf32>
    %cst_25 = arith.constant dense<0.000000e+00> : vector<32xf32>
    %95 = vector.multi_reduction <add>, %94, %cst_25 [1] : vector<32x256xf32> to vector<32xf32>
    %96 = vector.shape_cast %95 : vector<32xf32> to vector<32x1xf32>
    %cst_26 = arith.constant 2.560000e+02 : f32
    %97 = vector.broadcast %cst_26 : f32 to vector<32x1xf32>
    %98 = arith.divf %96, %97 : vector<32x1xf32>
    %99 = arith.mulf %93, %93 : vector<32x1xf32>
    %100 = arith.subf %98, %99 : vector<32x1xf32>
    %101 = vector.broadcast %93 : vector<32x1xf32> to vector<32x256xf32>
    %102 = arith.subf %89, %101 : vector<32x256xf32>
    %cst_27 = arith.constant 9.99999974E-6 : f32
    %103 = vector.broadcast %cst_27 : f32 to vector<32x1xf32>
    %104 = arith.addf %100, %103 : vector<32x1xf32>
    %105 = math.rsqrt %104 : vector<32x1xf32>
    %106 = vector.broadcast %105 : vector<32x1xf32> to vector<32x256xf32>
    %107 = arith.mulf %102, %106 : vector<32x256xf32>
    %108 = vector.broadcast %1 : vector<32x1xf32> to vector<32x256xf32>
    %109 = arith.mulf %107, %108 : vector<32x256xf32>
    %110 = vector.broadcast %2 : vector<32x1xf32> to vector<32x256xf32>
    %111 = arith.addf %109, %110 : vector<32x256xf32>
    %112 = arith.negf %111 : vector<32x256xf32>
    %113 = math.exp %112 : vector<32x256xf32>
    %cst_28 = arith.constant 1.000000e+00 : f32
    %114 = vector.broadcast %cst_28 : f32 to vector<32x256xf32>
    %115 = arith.addf %114, %113 : vector<32x256xf32>
    %116 = arith.divf %114, %115 : vector<32x256xf32>
    %117 = arith.mulf %111, %116 : vector<32x256xf32>
    %c17_i32_29 = arith.constant 17 : i32
    %118 = tpu.dynamic_rotate %117 by %c17_i32_29 dim 1 : vector<32x256xf32>, i32 -> vector<32x256xf32>
    %119 = vector.broadcast %8 : vector<1x256xf32> to vector<32x256xf32>
    %120 = arith.mulf %118, %119 : vector<32x256xf32>
    %121 = arith.truncf %120 : vector<32x256xf32> to vector<32x256xbf16>
    %c0_30 = arith.constant 0 : index
    %c256_31 = arith.constant 256 : index
    %122 = vector.load %arg7[%c0_30, %c256_31] : memref<288x512xbf16, #tpu.memory_space<vmem>>, vector<32x256xbf16>
    tpu.vector_store %arg7[%c0_30, %c256_31], %121 {strides = array<i32>} : memref<288x512xbf16, #tpu.memory_space<vmem>>, vector<32x256xbf16>,
    %c16_i32_32 = arith.constant 16 : i32
    %123 = tpu.dynamic_rotate %117 by %c16_i32_32 dim 1 : vector<32x256xf32>, i32 -> vector<32x256xf32>
    %124 = vector.broadcast %9 : vector<1x256xf32> to vector<32x256xf32>
    %125 = arith.mulf %123, %124 : vector<32x256xf32>
    %126 = arith.truncf %125 : vector<32x256xf32> to vector<32x256xbf16>
    %c32_33 = arith.constant 32 : index
    %c256_34 = arith.constant 256 : index
    %127 = vector.load %arg7[%c32_33, %c256_34] : memref<288x512xbf16, #tpu.memory_space<vmem>>, vector<32x256xbf16>
    tpu.vector_store %arg7[%c32_33, %c256_34], %126 {strides = array<i32>} : memref<288x512xbf16, #tpu.memory_space<vmem>>, vector<32x256xbf16>,
    %c15_i32_35 = arith.constant 15 : i32
    %128 = tpu.dynamic_rotate %117 by %c15_i32_35 dim 1 : vector<32x256xf32>, i32 -> vector<32x256xf32>
    %129 = vector.broadcast %10 : vector<1x256xf32> to vector<32x256xf32>
    %130 = arith.mulf %128, %129 : vector<32x256xf32>
    %131 = arith.truncf %130 : vector<32x256xf32> to vector<32x256xbf16>
    %c64_36 = arith.constant 64 : index
    %c256_37 = arith.constant 256 : index
    %132 = vector.load %arg7[%c64_36, %c256_37] : memref<288x512xbf16, #tpu.memory_space<vmem>>, vector<32x256xbf16>
    tpu.vector_store %arg7[%c64_36, %c256_37], %131 {strides = array<i32>} : memref<288x512xbf16, #tpu.memory_space<vmem>>, vector<32x256xbf16>,
    %c1_i32_38 = arith.constant 1 : i32
    %133 = tpu.dynamic_rotate %117 by %c1_i32_38 dim 1 : vector<32x256xf32>, i32 -> vector<32x256xf32>
    %134 = vector.broadcast %11 : vector<1x256xf32> to vector<32x256xf32>
    %135 = arith.mulf %133, %134 : vector<32x256xf32>
    %136 = arith.truncf %135 : vector<32x256xf32> to vector<32x256xbf16>
    %c96_39 = arith.constant 96 : index
    %c256_40 = arith.constant 256 : index
    %137 = vector.load %arg7[%c96_39, %c256_40] : memref<288x512xbf16, #tpu.memory_space<vmem>>, vector<32x256xbf16>
    tpu.vector_store %arg7[%c96_39, %c256_40], %136 {strides = array<i32>} : memref<288x512xbf16, #tpu.memory_space<vmem>>, vector<32x256xbf16>,
    %138 = arith.truncf %117 : vector<32x256xf32> to vector<32x256xbf16>
    %c128_41 = arith.constant 128 : index
    %c256_42 = arith.constant 256 : index
    %139 = vector.load %arg7[%c128_41, %c256_42] : memref<288x512xbf16, #tpu.memory_space<vmem>>, vector<32x256xbf16>
    tpu.vector_store %arg7[%c128_41, %c256_42], %138 {strides = array<i32>} : memref<288x512xbf16, #tpu.memory_space<vmem>>, vector<32x256xbf16>,
    %c255_i32_43 = arith.constant 255 : i32
    %140 = tpu.dynamic_rotate %117 by %c255_i32_43 dim 1 : vector<32x256xf32>, i32 -> vector<32x256xf32>
    %141 = vector.broadcast %12 : vector<1x256xf32> to vector<32x256xf32>
    %142 = arith.mulf %140, %141 : vector<32x256xf32>
    %143 = arith.truncf %142 : vector<32x256xf32> to vector<32x256xbf16>
    %c160_44 = arith.constant 160 : index
    %c256_45 = arith.constant 256 : index
    %144 = vector.load %arg7[%c160_44, %c256_45] : memref<288x512xbf16, #tpu.memory_space<vmem>>, vector<32x256xbf16>
    tpu.vector_store %arg7[%c160_44, %c256_45], %143 {strides = array<i32>} : memref<288x512xbf16, #tpu.memory_space<vmem>>, vector<32x256xbf16>,
    %c241_i32_46 = arith.constant 241 : i32
    %145 = tpu.dynamic_rotate %117 by %c241_i32_46 dim 1 : vector<32x256xf32>, i32 -> vector<32x256xf32>
    %146 = vector.broadcast %13 : vector<1x256xf32> to vector<32x256xf32>
    %147 = arith.mulf %145, %146 : vector<32x256xf32>
    %148 = arith.truncf %147 : vector<32x256xf32> to vector<32x256xbf16>
    %c192_47 = arith.constant 192 : index
    %c256_48 = arith.constant 256 : index
    %149 = vector.load %arg7[%c192_47, %c256_48] : memref<288x512xbf16, #tpu.memory_space<vmem>>, vector<32x256xbf16>
    tpu.vector_store %arg7[%c192_47, %c256_48], %148 {strides = array<i32>} : memref<288x512xbf16, #tpu.memory_space<vmem>>, vector<32x256xbf16>,
    %c240_i32_49 = arith.constant 240 : i32
    %150 = tpu.dynamic_rotate %117 by %c240_i32_49 dim 1 : vector<32x256xf32>, i32 -> vector<32x256xf32>
    %151 = vector.broadcast %14 : vector<1x256xf32> to vector<32x256xf32>
    %152 = arith.mulf %150, %151 : vector<32x256xf32>
    %153 = arith.truncf %152 : vector<32x256xf32> to vector<32x256xbf16>
    %c224_50 = arith.constant 224 : index
    %c256_51 = arith.constant 256 : index
    %154 = vector.load %arg7[%c224_50, %c256_51] : memref<288x512xbf16, #tpu.memory_space<vmem>>, vector<32x256xbf16>
    tpu.vector_store %arg7[%c224_50, %c256_51], %153 {strides = array<i32>} : memref<288x512xbf16, #tpu.memory_space<vmem>>, vector<32x256xbf16>,
    %c239_i32_52 = arith.constant 239 : i32
    %155 = tpu.dynamic_rotate %117 by %c239_i32_52 dim 1 : vector<32x256xf32>, i32 -> vector<32x256xf32>
    %156 = vector.broadcast %15 : vector<1x256xf32> to vector<32x256xf32>
    %157 = arith.mulf %155, %156 : vector<32x256xf32>
    %158 = arith.truncf %157 : vector<32x256xf32> to vector<32x256xbf16>
    %c256_53 = arith.constant 256 : index
    %c256_54 = arith.constant 256 : index
    %159 = vector.load %arg7[%c256_53, %c256_54] : memref<288x512xbf16, #tpu.memory_space<vmem>>, vector<32x256xbf16>
    tpu.vector_store %arg7[%c256_53, %c256_54], %158 {strides = array<i32>} : memref<288x512xbf16, #tpu.memory_space<vmem>>, vector<32x256xbf16>,
    %c0_55 = arith.constant 0 : index
    %c0_56 = arith.constant 0 : index
    %c0_57 = arith.constant 0 : index
    %160 = vector.load %arg5[%c0_55, %c0_56, %c0_57] : memref<2x32x288xbf16, #tpu.memory_space<vmem>>, vector<1x32x288xbf16>
    %161 = vector.shape_cast %160 : vector<1x32x288xbf16> to vector<32x288xbf16>
    %c0_58 = arith.constant 0 : index
    %c0_59 = arith.constant 0 : index
    %162 = vector.load %arg7[%c0_58, %c0_59] : memref<288x512xbf16, #tpu.memory_space<vmem>>, vector<288x512xbf16>
    %cst_60 = arith.constant dense<0.000000e+00> : vector<32x512xf32>
    %163 = tpu.matmul %161, %162, %cst_60 {dimension_numbers = #tpu.dot_dimension_numbers<[1], [0], [0], [1], [0, 0, 1, 1], [], []>} : vector<32x288xbf16>, vector<288x512xbf16>, vector<32x512xf32> -> vector<32x512xf32>
    %164 = vector.broadcast %3 : vector<32x1xf32> to vector<32x512xf32>
    %165 = arith.addf %163, %164 : vector<32x512xf32>
    %166 = vector.extract_strided_slice %165 {offsets = [0, 0], sizes = [32, 256], strides = [1, 1]} : vector<32x512xf32> to vector<32x256xf32>
    %c0_61 = arith.constant 0 : index
    %c0_62 = arith.constant 0 : index
    %c0_63 = arith.constant 0 : index
    %167 = vector.load %arg2[%c0_61, %c0_62, %c0_63] : memref<2x32x1xf32, #tpu.memory_space<vmem>>, vector<1x32x1xf32>
    %168 = vector.shape_cast %167 : vector<1x32x1xf32> to vector<32x1xf32>
    %169 = vector.broadcast %168 : vector<32x1xf32> to vector<32x256xf32>
    %170 = arith.addf %166, %169 : vector<32x256xf32>
    %cst_64 = arith.constant dense<0.000000e+00> : vector<32xf32>
    %171 = vector.multi_reduction <add>, %170, %cst_64 [1] : vector<32x256xf32> to vector<32xf32>
    %172 = vector.shape_cast %171 : vector<32xf32> to vector<32x1xf32>
    %cst_65 = arith.constant 2.560000e+02 : f32
    %173 = vector.broadcast %cst_65 : f32 to vector<32x1xf32>
    %174 = arith.divf %172, %173 : vector<32x1xf32>
    %175 = arith.mulf %170, %170 : vector<32x256xf32>
    %cst_66 = arith.constant dense<0.000000e+00> : vector<32xf32>
    %176 = vector.multi_reduction <add>, %175, %cst_66 [1] : vector<32x256xf32> to vector<32xf32>
    %177 = vector.shape_cast %176 : vector<32xf32> to vector<32x1xf32>
    %cst_67 = arith.constant 2.560000e+02 : f32
    %178 = vector.broadcast %cst_67 : f32 to vector<32x1xf32>
    %179 = arith.divf %177, %178 : vector<32x1xf32>
    %180 = arith.mulf %174, %174 : vector<32x1xf32>
    %181 = arith.subf %179, %180 : vector<32x1xf32>
    %182 = vector.broadcast %174 : vector<32x1xf32> to vector<32x256xf32>
    %183 = arith.subf %170, %182 : vector<32x256xf32>
    %cst_68 = arith.constant 9.99999974E-6 : f32
    %184 = vector.broadcast %cst_68 : f32 to vector<32x1xf32>
    %185 = arith.addf %181, %184 : vector<32x1xf32>
    %186 = math.rsqrt %185 : vector<32x1xf32>
    %187 = vector.broadcast %186 : vector<32x1xf32> to vector<32x256xf32>
    %188 = arith.mulf %183, %187 : vector<32x256xf32>
    %189 = vector.broadcast %4 : vector<32x1xf32> to vector<32x256xf32>
    %190 = arith.mulf %188, %189 : vector<32x256xf32>
    %191 = vector.broadcast %5 : vector<32x1xf32> to vector<32x256xf32>
    %192 = arith.addf %190, %191 : vector<32x256xf32>
    %193 = arith.negf %192 : vector<32x256xf32>
    %194 = math.exp %193 : vector<32x256xf32>
    %cst_69 = arith.constant 1.000000e+00 : f32
    %195 = vector.broadcast %cst_69 : f32 to vector<32x256xf32>
    %196 = arith.addf %195, %194 : vector<32x256xf32>
    %197 = arith.divf %195, %196 : vector<32x256xf32>
    %198 = arith.mulf %192, %197 : vector<32x256xf32>
    %c17_i32_70 = arith.constant 17 : i32
    %199 = tpu.dynamic_rotate %198 by %c17_i32_70 dim 1 : vector<32x256xf32>, i32 -> vector<32x256xf32>
    %200 = vector.broadcast %8 : vector<1x256xf32> to vector<32x256xf32>
    %201 = arith.mulf %199, %200 : vector<32x256xf32>
    %202 = arith.truncf %201 : vector<32x256xf32> to vector<32x256xbf16>
    %c0_71 = arith.constant 0 : index
    %c0_72 = arith.constant 0 : index
    %203 = vector.load %arg7[%c0_71, %c0_72] : memref<288x512xbf16, #tpu.memory_space<vmem>>, vector<32x256xbf16>
    tpu.vector_store %arg7[%c0_71, %c0_72], %202 {strides = array<i32>} : memref<288x512xbf16, #tpu.memory_space<vmem>>, vector<32x256xbf16>,
    %c16_i32_73 = arith.constant 16 : i32
    %204 = tpu.dynamic_rotate %198 by %c16_i32_73 dim 1 : vector<32x256xf32>, i32 -> vector<32x256xf32>
    %205 = vector.broadcast %9 : vector<1x256xf32> to vector<32x256xf32>
    %206 = arith.mulf %204, %205 : vector<32x256xf32>
    %207 = arith.truncf %206 : vector<32x256xf32> to vector<32x256xbf16>
    %c32_74 = arith.constant 32 : index
    %c0_75 = arith.constant 0 : index
    %208 = vector.load %arg7[%c32_74, %c0_75] : memref<288x512xbf16, #tpu.memory_space<vmem>>, vector<32x256xbf16>
    tpu.vector_store %arg7[%c32_74, %c0_75], %207 {strides = array<i32>} : memref<288x512xbf16, #tpu.memory_space<vmem>>, vector<32x256xbf16>,
    %c15_i32_76 = arith.constant 15 : i32
    %209 = tpu.dynamic_rotate %198 by %c15_i32_76 dim 1 : vector<32x256xf32>, i32 -> vector<32x256xf32>
    %210 = vector.broadcast %10 : vector<1x256xf32> to vector<32x256xf32>
    %211 = arith.mulf %209, %210 : vector<32x256xf32>
    %212 = arith.truncf %211 : vector<32x256xf32> to vector<32x256xbf16>
    %c64_77 = arith.constant 64 : index
    %c0_78 = arith.constant 0 : index
    %213 = vector.load %arg7[%c64_77, %c0_78] : memref<288x512xbf16, #tpu.memory_space<vmem>>, vector<32x256xbf16>
    tpu.vector_store %arg7[%c64_77, %c0_78], %212 {strides = array<i32>} : memref<288x512xbf16, #tpu.memory_space<vmem>>, vector<32x256xbf16>,
    %c1_i32_79 = arith.constant 1 : i32
    %214 = tpu.dynamic_rotate %198 by %c1_i32_79 dim 1 : vector<32x256xf32>, i32 -> vector<32x256xf32>
    %215 = vector.broadcast %11 : vector<1x256xf32> to vector<32x256xf32>
    %216 = arith.mulf %214, %215 : vector<32x256xf32>
    %217 = arith.truncf %216 : vector<32x256xf32> to vector<32x256xbf16>
    %c96_80 = arith.constant 96 : index
    %c0_81 = arith.constant 0 : index
    %218 = vector.load %arg7[%c96_80, %c0_81] : memref<288x512xbf16, #tpu.memory_space<vmem>>, vector<32x256xbf16>
    tpu.vector_store %arg7[%c96_80, %c0_81], %217 {strides = array<i32>} : memref<288x512xbf16, #tpu.memory_space<vmem>>, vector<32x256xbf16>,
    %219 = arith.truncf %198 : vector<32x256xf32> to vector<32x256xbf16>
    %c128_82 = arith.constant 128 : index
    %c0_83 = arith.constant 0 : index
    %220 = vector.load %arg7[%c128_82, %c0_83] : memref<288x512xbf16, #tpu.memory_space<vmem>>, vector<32x256xbf16>
    tpu.vector_store %arg7[%c128_82, %c0_83], %219 {strides = array<i32>} : memref<288x512xbf16, #tpu.memory_space<vmem>>, vector<32x256xbf16>,
    %c255_i32_84 = arith.constant 255 : i32
    %221 = tpu.dynamic_rotate %198 by %c255_i32_84 dim 1 : vector<32x256xf32>, i32 -> vector<32x256xf32>
    %222 = vector.broadcast %12 : vector<1x256xf32> to vector<32x256xf32>
    %223 = arith.mulf %221, %222 : vector<32x256xf32>
    %224 = arith.truncf %223 : vector<32x256xf32> to vector<32x256xbf16>
    %c160_85 = arith.constant 160 : index
    %c0_86 = arith.constant 0 : index
    %225 = vector.load %arg7[%c160_85, %c0_86] : memref<288x512xbf16, #tpu.memory_space<vmem>>, vector<32x256xbf16>
    tpu.vector_store %arg7[%c160_85, %c0_86], %224 {strides = array<i32>} : memref<288x512xbf16, #tpu.memory_space<vmem>>, vector<32x256xbf16>,
    %c241_i32_87 = arith.constant 241 : i32
    %226 = tpu.dynamic_rotate %198 by %c241_i32_87 dim 1 : vector<32x256xf32>, i32 -> vector<32x256xf32>
    %227 = vector.broadcast %13 : vector<1x256xf32> to vector<32x256xf32>
    %228 = arith.mulf %226, %227 : vector<32x256xf32>
    %229 = arith.truncf %228 : vector<32x256xf32> to vector<32x256xbf16>
    %c192_88 = arith.constant 192 : index
    %c0_89 = arith.constant 0 : index
    %230 = vector.load %arg7[%c192_88, %c0_89] : memref<288x512xbf16, #tpu.memory_space<vmem>>, vector<32x256xbf16>
    tpu.vector_store %arg7[%c192_88, %c0_89], %229 {strides = array<i32>} : memref<288x512xbf16, #tpu.memory_space<vmem>>, vector<32x256xbf16>,
    %c240_i32_90 = arith.constant 240 : i32
    %231 = tpu.dynamic_rotate %198 by %c240_i32_90 dim 1 : vector<32x256xf32>, i32 -> vector<32x256xf32>
    %232 = vector.broadcast %14 : vector<1x256xf32> to vector<32x256xf32>
    %233 = arith.mulf %231, %232 : vector<32x256xf32>
    %234 = arith.truncf %233 : vector<32x256xf32> to vector<32x256xbf16>
    %c224_91 = arith.constant 224 : index
    %c0_92 = arith.constant 0 : index
    %235 = vector.load %arg7[%c224_91, %c0_92] : memref<288x512xbf16, #tpu.memory_space<vmem>>, vector<32x256xbf16>
    tpu.vector_store %arg7[%c224_91, %c0_92], %234 {strides = array<i32>} : memref<288x512xbf16, #tpu.memory_space<vmem>>, vector<32x256xbf16>,
    %c239_i32_93 = arith.constant 239 : i32
    %236 = tpu.dynamic_rotate %198 by %c239_i32_93 dim 1 : vector<32x256xf32>, i32 -> vector<32x256xf32>
    %237 = vector.broadcast %15 : vector<1x256xf32> to vector<32x256xf32>
    %238 = arith.mulf %236, %237 : vector<32x256xf32>
    %239 = arith.truncf %238 : vector<32x256xf32> to vector<32x256xbf16>
    %c256_94 = arith.constant 256 : index
    %c0_95 = arith.constant 0 : index
    %240 = vector.load %arg7[%c256_94, %c0_95] : memref<288x512xbf16, #tpu.memory_space<vmem>>, vector<32x256xbf16>
    tpu.vector_store %arg7[%c256_94, %c0_95], %239 {strides = array<i32>} : memref<288x512xbf16, #tpu.memory_space<vmem>>, vector<32x256xbf16>,
    %241 = vector.extract_strided_slice %165 {offsets = [0, 256], sizes = [32, 256], strides = [1, 1]} : vector<32x512xf32> to vector<32x256xf32>
    %c1_96 = arith.constant 1 : index
    %c0_97 = arith.constant 0 : index
    %c0_98 = arith.constant 0 : index
    %242 = vector.load %arg2[%c1_96, %c0_97, %c0_98] : memref<2x32x1xf32, #tpu.memory_space<vmem>>, vector<1x32x1xf32>
    %243 = vector.shape_cast %242 : vector<1x32x1xf32> to vector<32x1xf32>
    %244 = vector.broadcast %243 : vector<32x1xf32> to vector<32x256xf32>
    %245 = arith.addf %241, %244 : vector<32x256xf32>
    %cst_99 = arith.constant dense<0.000000e+00> : vector<32xf32>
    %246 = vector.multi_reduction <add>, %245, %cst_99 [1] : vector<32x256xf32> to vector<32xf32>
    %247 = vector.shape_cast %246 : vector<32xf32> to vector<32x1xf32>
    %cst_100 = arith.constant 2.560000e+02 : f32
    %248 = vector.broadcast %cst_100 : f32 to vector<32x1xf32>
    %249 = arith.divf %247, %248 : vector<32x1xf32>
    %250 = arith.mulf %245, %245 : vector<32x256xf32>
    %cst_101 = arith.constant dense<0.000000e+00> : vector<32xf32>
    %251 = vector.multi_reduction <add>, %250, %cst_101 [1] : vector<32x256xf32> to vector<32xf32>
    %252 = vector.shape_cast %251 : vector<32xf32> to vector<32x1xf32>
    %cst_102 = arith.constant 2.560000e+02 : f32
    %253 = vector.broadcast %cst_102 : f32 to vector<32x1xf32>
    %254 = arith.divf %252, %253 : vector<32x1xf32>
    %255 = arith.mulf %249, %249 : vector<32x1xf32>
    %256 = arith.subf %254, %255 : vector<32x1xf32>
    %257 = vector.broadcast %249 : vector<32x1xf32> to vector<32x256xf32>
    %258 = arith.subf %245, %257 : vector<32x256xf32>
    %cst_103 = arith.constant 9.99999974E-6 : f32
    %259 = vector.broadcast %cst_103 : f32 to vector<32x1xf32>
    %260 = arith.addf %256, %259 : vector<32x1xf32>
    %261 = math.rsqrt %260 : vector<32x1xf32>
    %262 = vector.broadcast %261 : vector<32x1xf32> to vector<32x256xf32>
    %263 = arith.mulf %258, %262 : vector<32x256xf32>
    %264 = vector.broadcast %4 : vector<32x1xf32> to vector<32x256xf32>
    %265 = arith.mulf %263, %264 : vector<32x256xf32>
    %266 = vector.broadcast %5 : vector<32x1xf32> to vector<32x256xf32>
    %267 = arith.addf %265, %266 : vector<32x256xf32>
    %268 = arith.negf %267 : vector<32x256xf32>
    %269 = math.exp %268 : vector<32x256xf32>
    %cst_104 = arith.constant 1.000000e+00 : f32
    %270 = vector.broadcast %cst_104 : f32 to vector<32x256xf32>
    %271 = arith.addf %270, %269 : vector<32x256xf32>
    %272 = arith.divf %270, %271 : vector<32x256xf32>
    %273 = arith.mulf %267, %272 : vector<32x256xf32>
    %c17_i32_105 = arith.constant 17 : i32
    %274 = tpu.dynamic_rotate %273 by %c17_i32_105 dim 1 : vector<32x256xf32>, i32 -> vector<32x256xf32>
    %275 = vector.broadcast %8 : vector<1x256xf32> to vector<32x256xf32>
    %276 = arith.mulf %274, %275 : vector<32x256xf32>
    %277 = arith.truncf %276 : vector<32x256xf32> to vector<32x256xbf16>
    %c0_106 = arith.constant 0 : index
    %c256_107 = arith.constant 256 : index
    %278 = vector.load %arg7[%c0_106, %c256_107] : memref<288x512xbf16, #tpu.memory_space<vmem>>, vector<32x256xbf16>
    tpu.vector_store %arg7[%c0_106, %c256_107], %277 {strides = array<i32>} : memref<288x512xbf16, #tpu.memory_space<vmem>>, vector<32x256xbf16>,
    %c16_i32_108 = arith.constant 16 : i32
    %279 = tpu.dynamic_rotate %273 by %c16_i32_108 dim 1 : vector<32x256xf32>, i32 -> vector<32x256xf32>
    %280 = vector.broadcast %9 : vector<1x256xf32> to vector<32x256xf32>
    %281 = arith.mulf %279, %280 : vector<32x256xf32>
    %282 = arith.truncf %281 : vector<32x256xf32> to vector<32x256xbf16>
    %c32_109 = arith.constant 32 : index
    %c256_110 = arith.constant 256 : index
    %283 = vector.load %arg7[%c32_109, %c256_110] : memref<288x512xbf16, #tpu.memory_space<vmem>>, vector<32x256xbf16>
    tpu.vector_store %arg7[%c32_109, %c256_110], %282 {strides = array<i32>} : memref<288x512xbf16, #tpu.memory_space<vmem>>, vector<32x256xbf16>,
    %c15_i32_111 = arith.constant 15 : i32
    %284 = tpu.dynamic_rotate %273 by %c15_i32_111 dim 1 : vector<32x256xf32>, i32 -> vector<32x256xf32>
    %285 = vector.broadcast %10 : vector<1x256xf32> to vector<32x256xf32>
    %286 = arith.mulf %284, %285 : vector<32x256xf32>
    %287 = arith.truncf %286 : vector<32x256xf32> to vector<32x256xbf16>
    %c64_112 = arith.constant 64 : index
    %c256_113 = arith.constant 256 : index
    %288 = vector.load %arg7[%c64_112, %c256_113] : memref<288x512xbf16, #tpu.memory_space<vmem>>, vector<32x256xbf16>
    tpu.vector_store %arg7[%c64_112, %c256_113], %287 {strides = array<i32>} : memref<288x512xbf16, #tpu.memory_space<vmem>>, vector<32x256xbf16>,
    %c1_i32_114 = arith.constant 1 : i32
    %289 = tpu.dynamic_rotate %273 by %c1_i32_114 dim 1 : vector<32x256xf32>, i32 -> vector<32x256xf32>
    %290 = vector.broadcast %11 : vector<1x256xf32> to vector<32x256xf32>
    %291 = arith.mulf %289, %290 : vector<32x256xf32>
    %292 = arith.truncf %291 : vector<32x256xf32> to vector<32x256xbf16>
    %c96_115 = arith.constant 96 : index
    %c256_116 = arith.constant 256 : index
    %293 = vector.load %arg7[%c96_115, %c256_116] : memref<288x512xbf16, #tpu.memory_space<vmem>>, vector<32x256xbf16>
    tpu.vector_store %arg7[%c96_115, %c256_116], %292 {strides = array<i32>} : memref<288x512xbf16, #tpu.memory_space<vmem>>, vector<32x256xbf16>,
    %294 = arith.truncf %273 : vector<32x256xf32> to vector<32x256xbf16>
    %c128_117 = arith.constant 128 : index
    %c256_118 = arith.constant 256 : index
    %295 = vector.load %arg7[%c128_117, %c256_118] : memref<288x512xbf16, #tpu.memory_space<vmem>>, vector<32x256xbf16>
    tpu.vector_store %arg7[%c128_117, %c256_118], %294 {strides = array<i32>} : memref<288x512xbf16, #tpu.memory_space<vmem>>, vector<32x256xbf16>,
    %c255_i32_119 = arith.constant 255 : i32
    %296 = tpu.dynamic_rotate %273 by %c255_i32_119 dim 1 : vector<32x256xf32>, i32 -> vector<32x256xf32>
    %297 = vector.broadcast %12 : vector<1x256xf32> to vector<32x256xf32>
    %298 = arith.mulf %296, %297 : vector<32x256xf32>
    %299 = arith.truncf %298 : vector<32x256xf32> to vector<32x256xbf16>
    %c160_120 = arith.constant 160 : index
    %c256_121 = arith.constant 256 : index
    %300 = vector.load %arg7[%c160_120, %c256_121] : memref<288x512xbf16, #tpu.memory_space<vmem>>, vector<32x256xbf16>
    tpu.vector_store %arg7[%c160_120, %c256_121], %299 {strides = array<i32>} : memref<288x512xbf16, #tpu.memory_space<vmem>>, vector<32x256xbf16>,
    %c241_i32_122 = arith.constant 241 : i32
    %301 = tpu.dynamic_rotate %273 by %c241_i32_122 dim 1 : vector<32x256xf32>, i32 -> vector<32x256xf32>
    %302 = vector.broadcast %13 : vector<1x256xf32> to vector<32x256xf32>
    %303 = arith.mulf %301, %302 : vector<32x256xf32>
    %304 = arith.truncf %303 : vector<32x256xf32> to vector<32x256xbf16>
    %c192_123 = arith.constant 192 : index
    %c256_124 = arith.constant 256 : index
    %305 = vector.load %arg7[%c192_123, %c256_124] : memref<288x512xbf16, #tpu.memory_space<vmem>>, vector<32x256xbf16>
    tpu.vector_store %arg7[%c192_123, %c256_124], %304 {strides = array<i32>} : memref<288x512xbf16, #tpu.memory_space<vmem>>, vector<32x256xbf16>,
    %c240_i32_125 = arith.constant 240 : i32
    %306 = tpu.dynamic_rotate %273 by %c240_i32_125 dim 1 : vector<32x256xf32>, i32 -> vector<32x256xf32>
    %307 = vector.broadcast %14 : vector<1x256xf32> to vector<32x256xf32>
    %308 = arith.mulf %306, %307 : vector<32x256xf32>
    %309 = arith.truncf %308 : vector<32x256xf32> to vector<32x256xbf16>
    %c224_126 = arith.constant 224 : index
    %c256_127 = arith.constant 256 : index
    %310 = vector.load %arg7[%c224_126, %c256_127] : memref<288x512xbf16, #tpu.memory_space<vmem>>, vector<32x256xbf16>
    tpu.vector_store %arg7[%c224_126, %c256_127], %309 {strides = array<i32>} : memref<288x512xbf16, #tpu.memory_space<vmem>>, vector<32x256xbf16>,
    %c239_i32_128 = arith.constant 239 : i32
    %311 = tpu.dynamic_rotate %273 by %c239_i32_128 dim 1 : vector<32x256xf32>, i32 -> vector<32x256xf32>
    %312 = vector.broadcast %15 : vector<1x256xf32> to vector<32x256xf32>
    %313 = arith.mulf %311, %312 : vector<32x256xf32>
    %314 = arith.truncf %313 : vector<32x256xf32> to vector<32x256xbf16>
    %c256_129 = arith.constant 256 : index
    %c256_130 = arith.constant 256 : index
    %315 = vector.load %arg7[%c256_129, %c256_130] : memref<288x512xbf16, #tpu.memory_space<vmem>>, vector<32x256xbf16>
    tpu.vector_store %arg7[%c256_129, %c256_130], %314 {strides = array<i32>} : memref<288x512xbf16, #tpu.memory_space<vmem>>, vector<32x256xbf16>,
    %c1_131 = arith.constant 1 : index
    %c0_132 = arith.constant 0 : index
    %c0_133 = arith.constant 0 : index
    %316 = vector.load %arg5[%c1_131, %c0_132, %c0_133] : memref<2x32x288xbf16, #tpu.memory_space<vmem>>, vector<1x32x288xbf16>
    %317 = vector.shape_cast %316 : vector<1x32x288xbf16> to vector<32x288xbf16>
    %c0_134 = arith.constant 0 : index
    %c0_135 = arith.constant 0 : index
    %318 = vector.load %arg7[%c0_134, %c0_135] : memref<288x512xbf16, #tpu.memory_space<vmem>>, vector<288x512xbf16>
    %cst_136 = arith.constant dense<0.000000e+00> : vector<32x512xf32>
    %319 = tpu.matmul %317, %318, %cst_136 {dimension_numbers = #tpu.dot_dimension_numbers<[1], [0], [0], [1], [0, 0, 1, 1], [], []>} : vector<32x288xbf16>, vector<288x512xbf16>, vector<32x512xf32> -> vector<32x512xf32>
    %320 = vector.broadcast %6 : vector<32x1xf32> to vector<32x512xf32>
    %321 = arith.addf %319, %320 : vector<32x512xf32>
    %c0_137 = arith.constant 0 : index
    %c0_138 = arith.constant 0 : index
    %c0_139 = arith.constant 0 : index
    %322 = vector.load %arg1[%c0_137, %c0_138, %c0_139] : memref<2x32x256xf32, #tpu.memory_space<vmem>>, vector<1x32x256xf32>
    %323 = vector.shape_cast %322 : vector<1x32x256xf32> to vector<32x256xf32>
    %324 = vector.extract_strided_slice %321 {offsets = [0, 0], sizes = [32, 256], strides = [1, 1]} : vector<32x512xf32> to vector<32x256xf32>
    %325 = arith.addf %323, %324 : vector<32x256xf32>
    %c0_140 = arith.constant 0 : index
    %c0_141 = arith.constant 0 : index
    %c0_142 = arith.constant 0 : index
    %326 = vector.load %arg6[%c0_140, %c0_141, %c0_142] : memref<2x32x256xf32, #tpu.memory_space<vmem>>, vector<1x32x256xf32>
    %327 = vector.shape_cast %326 : vector<1x32x256xf32> to vector<32x256xf32>
    %328 = vector.shape_cast %325 : vector<32x256xf32> to vector<1x32x256xf32>
    tpu.vector_store %arg6[%c0_140, %c0_141, %c0_142], %328 {strides = array<i32>} : memref<2x32x256xf32, #tpu.memory_space<vmem>>, vector<1x32x256xf32>,
    %c1_143 = arith.constant 1 : index
    %c0_144 = arith.constant 0 : index
    %c0_145 = arith.constant 0 : index
    %329 = vector.load %arg1[%c1_143, %c0_144, %c0_145] : memref<2x32x256xf32, #tpu.memory_space<vmem>>, vector<1x32x256xf32>
    %330 = vector.shape_cast %329 : vector<1x32x256xf32> to vector<32x256xf32>
    %331 = vector.extract_strided_slice %321 {offsets = [0, 256], sizes = [32, 256], strides = [1, 1]} : vector<32x512xf32> to vector<32x256xf32>
    %332 = arith.addf %330, %331 : vector<32x256xf32>
    %c1_146 = arith.constant 1 : index
    %c0_147 = arith.constant 0 : index
    %c0_148 = arith.constant 0 : index
    %333 = vector.load %arg6[%c1_146, %c0_147, %c0_148] : memref<2x32x256xf32, #tpu.memory_space<vmem>>, vector<1x32x256xf32>
    %334 = vector.shape_cast %333 : vector<1x32x256xf32> to vector<32x256xf32>
    %335 = vector.shape_cast %332 : vector<32x256xf32> to vector<1x32x256xf32>
    tpu.vector_store %arg6[%c1_146, %c0_147, %c0_148], %335 {strides = array<i32>} : memref<2x32x256xf32, #tpu.memory_space<vmem>>, vector<1x32x256xf32>,
    return
  }
  func.func @transform_0(%arg0: i32) -> (i32, i32, i32) {
    %c0_i32 = arith.constant 0 : i32
    %c0_i32_0 = arith.constant 0 : i32
    %c0_i32_1 = arith.constant 0 : i32
    return %arg0, %c0_i32, %c0_i32_0 : i32, i32, i32
  }
  func.func @transform_1(%arg0: i32) -> (i32, i32, i32) {
    %c0_i32 = arith.constant 0 : i32
    %c0_i32_0 = arith.constant 0 : i32
    %c0_i32_1 = arith.constant 0 : i32
    return %arg0, %c0_i32, %c0_i32_0 : i32, i32, i32
  }
  func.func @transform_2(%arg0: i32) -> (i32, i32) {
    %c0_i32 = arith.constant 0 : i32
    %c0_i32_0 = arith.constant 0 : i32
    %c0_i32_1 = arith.constant 0 : i32
    return %c0_i32, %c0_i32_0 : i32, i32
  }
  func.func @transform_3(%arg0: i32) -> (i32, i32) {
    %c0_i32 = arith.constant 0 : i32
    %c0_i32_0 = arith.constant 0 : i32
    %c0_i32_1 = arith.constant 0 : i32
    return %c0_i32, %c0_i32_0 : i32, i32
  }
  func.func @transform_4(%arg0: i32) -> (i32, i32, i32) {
    %c0_i32 = arith.constant 0 : i32
    %c0_i32_0 = arith.constant 0 : i32
    %c0_i32_1 = arith.constant 0 : i32
    %c0_i32_2 = arith.constant 0 : i32
    return %c0_i32, %c0_i32_0, %c0_i32_1 : i32, i32, i32
  }
  func.func @transform_5(%arg0: i32) -> (i32, i32, i32) {
    %c0_i32 = arith.constant 0 : i32
    %c0_i32_0 = arith.constant 0 : i32
    %c0_i32_1 = arith.constant 0 : i32
    return %arg0, %c0_i32, %c0_i32_0 : i32, i32, i32
  }
}

</mosaic_0001>

<llo_original>
// kernel: tpu_custom_call.1
$region0: #{tpu_custom_call.1}
  #allocation0 [shape = 'u32[]', space=smem, size = 0x4, offset = 0x4, fixed_abs, tag = 'smem constant byte address 0x4 - core index']
  #allocation1 [shape = 'u32[144,128]{1,0:T(1,128)}', space=vmem, size = 0x12000, scoped, tag = 'internal scratch']
  #allocation2 [shape = 'bf16[288,512]{1,0:T(8,128)(2,1)}', space=vmem, size = 0x48000, scoped, tag = 'scratch operand']
  %s0 = inlined_call_operand.hbm [shape: f32[4,32,256], index: 0, kind: input, shape index: {}]
  %s1 = inlined_call_operand.vmem [shape: f32[4,32,1], index: 1, kind: input, shape index: {}]
  %s2 = inlined_call_operand.vmem [shape: f32[9,256], index: 2, kind: input, shape index: {}]
  %s3 = inlined_call_operand.vmem [shape: f32[32,8], index: 3, kind: input, shape index: {}]
  %s4 = inlined_call_operand.vmem [shape: bf16[2,32,288], index: 4, kind: input, shape index: {}]
  %s5 = inlined_call_operand.hbm [shape: f32[4,32,256], index: 5, kind: output, shape index: {}]
  %s6 = sld [smem:[#allocation0]]
  $region57: #{tpu_custom_call.1} parent=0
    _
  %s8 = ssub.s32 1, %s6
  %s9 = scalar_select 0, %s8, %s6
  $region1: #{tpu_custom_call.1} parent=0
    #allocation3 [shape = 'u8[131072]{0}', space=vmem, size = 0x20000, scoped, tag = 'input window, operand 0']
    #allocation4 [shape = 's32[2]{0}', space=sflag, size = 0x8, scoped, tag = 'scoped memory for tpu_custom_call.1']
    #allocation5 [shape = 's32[2]{0}', space=sflag, size = 0x8, scoped, tag = 'scoped memory for tpu_custom_call.1']
    #allocation6 [shape = 'u8[131072]{0}', space=vmem, size = 0x20000, scoped, tag = 'output window, operand 0']
    %10 = vsyncpa [#allocation4], 0
    %s11 = scalar_lea.sflag [#allocation4], 1
    %12 = vsyncpa %s11, 0
    %13 = vsyncpa [#allocation5], 0
    %s14 = scalar_lea.sflag [#allocation5], 1
    %15 = vsyncpa %s14, 0
    loop: start=0, step=1, limit=4
    $region2: #{tpu_custom_call.1} parent=1 // loop_pre_header
      _
    $region3: #{tpu_custom_call.1} parent=1 // loop_header
      %s17 = sphi 0, %s21
      %p18 = scmp.ge.s32.totalorder %s17, 4
      %s27 = sphi 0, %s29
      %s30 = sphi 0, %s27
      %s31 = sphi 0, %s30
      %s47 = sphi 0, %s31
      %s53 = sphi 0, %s55
      %s56 = sphi 0, %s53
      %s57 = sphi 0, %s56
      %s73 = sphi 0, %s57
      %s77 = sphi 0, %s77
      %s79 = sphi 0, %s77
      %s80 = sphi 0, %s79
      %s94 = sphi 0, %s80
      %s98 = sphi 0, %s98
      %s100 = sphi 0, %s98
      %s101 = sphi 0, %s100
      %s115 = sphi 0, %s101
      %s119 = sphi 0, %s119
      %s121 = sphi 0, %s119
      %s122 = sphi 0, %s121
      %s136 = sphi 0, %s122
      %s142 = sphi 0, %s144
      %s145 = sphi 0, %s142
      %s146 = sphi 0, %s145
      %s162 = sphi 0, %s146
    $region4: #{tpu_custom_call.1} parent=1 // loop_header_branch
      %20 = sbr.rel (%p18) target = $region8
    $region5: #{tpu_custom_call.1} parent=1 // loop_body
      %s22 = ssub.s32 %s17, 1
      %s23 = ssub.s32 %s17, 2
      %s24 = sadd.s32 %s17, 1
      %s25 = ssub.s32 %s17, %s24
      %p26 = scmp.eq.s32.totalorder %s25, 0
      %s28 = sadd.s32 %s27, 1
      %s29 = scalar_select %p26, %s27, %s28
      %p32 = pneg %p26
      %p33 = scmp.eq.s32.totalorder %s17, 1
      %p34 = por %p32, %p33
      %p35 = scmp.ne.s32.totalorder %s27, %s30
      %p36 = scmp.eq.s32.totalorder %s17, 0
      %p37 = por %p35, %p36
      %p38 = scmp.ne.s32.totalorder %s27, %s30
      %p39 = scmp.eq.s32.totalorder %s22, 1
      %p40 = por %p38, %p39
      %p41 = scmp.ne.s32.totalorder %s30, %s31
      %p42 = scmp.eq.s32.totalorder %s22, 0
      %p43 = por %p41, %p42
      %p44 = scmp.ne.s32.totalorder %s30, %s31
      %p45 = scmp.eq.s32.totalorder %s23, 1
      %p46 = por %p44, %p45
      %p48 = scmp.ne.s32.totalorder %s31, %s47
      %p49 = scmp.eq.s32.totalorder %s23, 0
      %p50 = por %p48, %p49
      %s51 = ssub.s32 %s17, %s24
      %p52 = scmp.eq.s32.totalorder %s51, 0
      %s54 = sadd.s32 %s53, 1
      %s55 = scalar_select %p52, %s53, %s54
      %p58 = pneg %p52
      %p59 = scmp.eq.s32.totalorder %s17, 1
      %p60 = por %p58, %p59
      %p61 = scmp.ne.s32.totalorder %s53, %s56
      %p62 = scmp.eq.s32.totalorder %s17, 0
      %p63 = por %p61, %p62
      %p64 = scmp.ne.s32.totalorder %s53, %s56
      %p65 = scmp.eq.s32.totalorder %s22, 1
      %p66 = por %p64, %p65
      %p67 = scmp.ne.s32.totalorder %s56, %s57
      %p68 = scmp.eq.s32.totalorder %s22, 0
      %p69 = por %p67, %p68
      %p70 = scmp.ne.s32.totalorder %s56, %s57
      %p71 = scmp.eq.s32.totalorder %s23, 1
      %p72 = por %p70, %p71
      %p74 = scmp.ne.s32.totalorder %s57, %s73
      %p75 = scmp.eq.s32.totalorder %s23, 0
      %p76 = por %p74, %p75
      %s78 = sadd.s32 %s77, 1
      %p81 = scmp.eq.s32.totalorder %s17, 1
      %p82 = scmp.ne.s32.totalorder %s77, %s79
      %p83 = scmp.eq.s32.totalorder %s17, 0
      %p84 = por %p82, %p83
      %p85 = scmp.ne.s32.totalorder %s77, %s79
      %p86 = scmp.eq.s32.totalorder %s22, 1
      %p87 = por %p85, %p86
      %p88 = scmp.ne.s32.totalorder %s79, %s80
      %p89 = scmp.eq.s32.totalorder %s22, 0
      %p90 = por %p88, %p89
      %p91 = scmp.ne.s32.totalorder %s79, %s80
      %p92 = scmp.eq.s32.totalorder %s23, 1
      %p93 = por %p91, %p92
      %p95 = scmp.ne.s32.totalorder %s80, %s94
      %p96 = scmp.eq.s32.totalorder %s23, 0
      %p97 = por %p95, %p96
      %s99 = sadd.s32 %s98, 1
      %p102 = scmp.eq.s32.totalorder %s17, 1
      %p103 = scmp.ne.s32.totalorder %s98, %s100
      %p104 = scmp.eq.s32.totalorder %s17, 0
      %p105 = por %p103, %p104
      %p106 = scmp.ne.s32.totalorder %s98, %s100
      %p107 = scmp.eq.s32.totalorder %s22, 1
      %p108 = por %p106, %p107
      %p109 = scmp.ne.s32.totalorder %s100, %s101
      %p110 = scmp.eq.s32.totalorder %s22, 0
      %p111 = por %p109, %p110
      %p112 = scmp.ne.s32.totalorder %s100, %s101
      %p113 = scmp.eq.s32.totalorder %s23, 1
      %p114 = por %p112, %p113
      %p116 = scmp.ne.s32.totalorder %s101, %s115
      %p117 = scmp.eq.s32.totalorder %s23, 0
      %p118 = por %p116, %p117
      %s120 = sadd.s32 %s119, 1
      %p123 = scmp.eq.s32.totalorder %s17, 1
      %p124 = scmp.ne.s32.totalorder %s119, %s121
      %p125 = scmp.eq.s32.totalorder %s17, 0
      %p126 = por %p124, %p125
      %p127 = scmp.ne.s32.totalorder %s119, %s121
      %p128 = scmp.eq.s32.totalorder %s22, 1
      %p129 = por %p127, %p128
      %p130 = scmp.ne.s32.totalorder %s121, %s122
      %p131 = scmp.eq.s32.totalorder %s22, 0
      %p132 = por %p130, %p131
      %p133 = scmp.ne.s32.totalorder %s121, %s122
      %p134 = scmp.eq.s32.totalorder %s23, 1
      %p135 = por %p133, %p134
      %p137 = scmp.ne.s32.totalorder %s122, %s136
      %p138 = scmp.eq.s32.totalorder %s23, 0
      %p139 = por %p137, %p138
      %s140 = ssub.s32 %s17, %s24
      %p141 = scmp.eq.s32.totalorder %s140, 0
      %s143 = sadd.s32 %s142, 1
      %s144 = scalar_select %p141, %s142, %s143
      %p147 = pneg %p141
      %p148 = scmp.eq.s32.totalorder %s17, 1
      %p149 = por %p147, %p148
      %p150 = scmp.ne.s32.totalorder %s142, %s145
      %p151 = scmp.eq.s32.totalorder %s17, 0
      %p152 = por %p150, %p151
      %p153 = scmp.ne.s32.totalorder %s142, %s145
      %p154 = scmp.eq.s32.totalorder %s22, 1
      %p155 = por %p153, %p154
      %p156 = scmp.ne.s32.totalorder %s145, %s146
      %p157 = scmp.eq.s32.totalorder %s22, 0
      %p158 = por %p156, %p157
      %p159 = scmp.ne.s32.totalorder %s145, %s146
      %p160 = scmp.eq.s32.totalorder %s23, 1
      %p161 = por %p159, %p160
      %p163 = scmp.ne.s32.totalorder %s146, %s162
      %p164 = scmp.eq.s32.totalorder %s23, 0
      %p165 = por %p163, %p164
      %p166 = scmp.le.s32.totalorder 1, %s17
      %p167 = scmp.lt.s32.totalorder %s17, 3
      %p168 = pnand %p166, %p167
      %p169 = pneg %p168
      // Predicated region
      $region9: #{tpu_custom_call.1} parent=5 // pred_check
        _
      $region10: #{tpu_custom_call.1} parent=5 // pred_check_branch
        %171 = sbr.rel (%p168) target = $region12
      $region11: #{tpu_custom_call.1} parent=5 // pred_region
        %s172 = ssub.s32 %s17, 1
        // Predicated region
        $region13: #{tpu_custom_call.1} parent=11 // pred_check
          %p173 = pneg %p90
        $region14: #{tpu_custom_call.1} parent=11 // pred_check_branch
          %175 = sbr.rel (%p173) target = $region16
        $region15: #{tpu_custom_call.1} parent=11 // pred_region
          _
        $region16: #{tpu_custom_call.1} parent=11 // pred_fallthru
          _
        // Predicated region
        $region17: #{tpu_custom_call.1} parent=11 // pred_check
          %p176 = pneg %p111
        $region18: #{tpu_custom_call.1} parent=11 // pred_check_branch
          %178 = sbr.rel (%p176) target = $region20
        $region19: #{tpu_custom_call.1} parent=11 // pred_region
          _
        $region20: #{tpu_custom_call.1} parent=11 // pred_fallthru
          _
        // Predicated region
        $region21: #{tpu_custom_call.1} parent=11 // pred_check
          %p179 = pneg %p132
        $region22: #{tpu_custom_call.1} parent=11 // pred_check_branch
          %181 = sbr.rel (%p179) target = $region24
        $region23: #{tpu_custom_call.1} parent=11 // pred_region
          _
        $region24: #{tpu_custom_call.1} parent=11 // pred_fallthru
          _
      $region12: #{tpu_custom_call.1} parent=5 // pred_fallthru
        _
      %p182 = scmp.lt.s32.totalorder %s17, 2
      // Predicated region
      $region25: #{tpu_custom_call.1} parent=5 // pred_check
        %p183 = pneg %p182
      $region26: #{tpu_custom_call.1} parent=5 // pred_check_branch
        %185 = sbr.rel (%p183) target = $region28
      $region27: #{tpu_custom_call.1} parent=5 // pred_region
        // Predicated region
        $region29: #{tpu_custom_call.1} parent=27 // pred_check
          %p186 = pneg %p37
        $region30: #{tpu_custom_call.1} parent=27 // pred_check_branch
          %188 = sbr.rel (%p186) target = $region32
        $region31: #{tpu_custom_call.1} parent=27 // pred_region
          %s189 = sand.u32 %s27, 1
          %s190 = scalar_lea.sflag [#allocation4], %s189
          %s191 = sand.u32 %s27, 1
          %s192 = smul.addr %s191, 128
          %s193 = scalar_lea.vmem [#allocation3], %s192
          %s194 = smul.u32 2, %s17
          %s196 = ssub.s32 2048, 2048
          %197 = vsyncadd %s190, %s196
          %s198 = smul.addr %s194, 8
          %s199 = smul.addr %s198, 128
          %s200 = scalar_lea.hbm %s0, %s199
          %s201 = sshll.u32 %s193, 4
          %s202 = int_to_ptr.vmem [resolvable:$true] %s201
          %207 = dma.hbm_to_vmem [thread:$0]  %s200, 2048, %s202, %s190, 256, 256, 16
        $region32: #{tpu_custom_call.1} parent=27 // pred_fallthru
          _
        // Predicated region
        $region33: #{tpu_custom_call.1} parent=27 // pred_check
          %p208 = pneg %p63
        $region34: #{tpu_custom_call.1} parent=27 // pred_check_branch
          %210 = sbr.rel (%p208) target = $region36
        $region35: #{tpu_custom_call.1} parent=27 // pred_region
          %s211 = smul.u32 2, %s17
          %p212 = scmp.lt.s32.totalorder %s211, 3
          %s213 = scalar_select %p212, %s211, 3
          %s214 = smul.addr %s213, 4
          %s215 = smul.addr %s214, 8
          %s216 = scalar_lea.vmem %s1, %s215
          %s217 = smul.u32 2, %s17
        $region36: #{tpu_custom_call.1} parent=27 // pred_fallthru
          _
      $region28: #{tpu_custom_call.1} parent=5 // pred_fallthru
        _
      %p218 = scmp.le.s32.totalorder 1, %s17
      %p219 = scmp.lt.s32.totalorder %s17, 3
      %p220 = pnand %p218, %p219
      %p221 = pneg %p220
      // Predicated region
      $region37: #{tpu_custom_call.1} parent=5 // pred_check
        _
      $region38: #{tpu_custom_call.1} parent=5 // pred_check_branch
        %223 = sbr.rel (%p220) target = $region40
      $region39: #{tpu_custom_call.1} parent=5 // pred_region
        %s224 = ssub.s32 %s17, 1
        %s225 = sand.u32 %s30, 1
        %s226 = scalar_lea.sflag [#allocation4], %s225
        %s227 = sand.u32 %s30, 1
        %s228 = smul.addr %s227, 128
        %s229 = scalar_lea.vmem [#allocation3], %s228
        // Predicated region
        $region41: #{tpu_custom_call.1} parent=39 // pred_check
          %p230 = pneg %p43
        $region42: #{tpu_custom_call.1} parent=39 // pred_check_branch
          %232 = sbr.rel (%p230) target = $region44
        $region43: #{tpu_custom_call.1} parent=39 // pred_region
          %233 = dma.done %s226, 2048
        $region44: #{tpu_custom_call.1} parent=39 // pred_fallthru
          _
        %s234 = sand.u32 %s30, 1
        %s235 = scalar_lea.sflag [#allocation4], %s234
        %s236 = sand.u32 %s30, 1
        %s237 = smul.addr %s236, 128
        %s238 = scalar_lea.vmem [#allocation3], %s237
        %p239 = pneg %p43
        %p240 = pneg %p40
        %s241 = smul.u32 2, %s22
        %p242 = scmp.lt.s32.totalorder %s241, 3
        %s243 = scalar_select %p242, %s241, 3
        %s244 = smul.addr %s243, 4
        %s245 = smul.addr %s244, 8
        %s246 = scalar_lea.vmem %s1, %s245
        %p247 = pneg %p69
        %p248 = pneg %p66
        %p249 = pneg %p90
        %p250 = pneg %p87
        %p251 = pneg %p111
        %p252 = pneg %p108
        %p253 = pneg %p132
        %p254 = pneg %p129
        %p255 = pneg %p158
        %p256 = pneg %p155
        %s257 = sand.u32 %s145, 1
        %s258 = scalar_lea.sflag [#allocation5], %s257
        %s259 = sand.u32 %s145, 1
        %s260 = smul.addr %s259, 128
        %s261 = scalar_lea.vmem [#allocation6], %s260
        %s262 = smul.u32 2, %s22
        %s263 = smul.u32 2, %s22
        %p264 = scmp.lt.s32.totalorder %s263, 3
        %s265 = scalar_select %p264, %s263, 3
        %s266 = smul.addr %s265, 4
        %s267 = smul.addr %s266, 8
        %s268 = scalar_lea.vmem %s1, %s267
        %s269 = smul.u32 2, %s22
        %s270 = smul.u32 2, %s22
        %v272 = vld [vmem:[%s3] sm:$0xff]
        %v273 = vld [vmem:[%s3 + $0x8] sm:$0xff]
        %v274 = vld [vmem:[%s3 + $0x10] sm:$0xff]
        %v275 = vld [vmem:[%s3 + $0x18] sm:$0xff]
        %v276 = vld [vmem:[%s2] sm:$0xff]
        %v277 = vld [vmem:[%s2 + $0x8] sm:$0xff]
        %v278 = vld [vmem:[%s2 + $0x10] sm:$0x1]
        %v279 = vld [vmem:[%s2 + $0x18] sm:$0x1]
        %v280 = vld [vmem:[%s229] sm:$0xff]
        %v281 = vld [vmem:[%s229 + $0x8] sm:$0xff]
        %v282 = vld [vmem:[%s229 + $0x10] sm:$0xff]
        %v283 = vld [vmem:[%s229 + $0x18] sm:$0xff]
        %v284 = vld [vmem:[%s229 + $0x20] sm:$0xff]
        %v285 = vld [vmem:[%s229 + $0x28] sm:$0xff]
        %v286 = vld [vmem:[%s229 + $0x30] sm:$0xff]
        %v287 = vld [vmem:[%s229 + $0x38] sm:$0xff]
        %v288 = vadd.f32 %v280, %v281
        %289 = vadd.xlane.f32.xlu0 %v288
        %v290 = vpop.xlane.xlu0 %289
        %v291 = vadd.f32 %v282, %v283
        %292 = vadd.xlane.f32.xlu0 %v291
        %v293 = vpop.xlane.xlu0 %292
        %v294 = vadd.f32 %v284, %v285
        %295 = vadd.xlane.f32.xlu0 %v294
        %v296 = vpop.xlane.xlu0 %295
        %v297 = vadd.f32 %v286, %v287
        %298 = vadd.xlane.f32.xlu0 %v297
        %v299 = vpop.xlane.xlu0 %298
        %v300 = vrcp.pop 256.0
        %v301 = vmul.f32 %v290, %v300
        %v302 = vmul.f32 %v293, %v300
        %v303 = vmul.f32 %v296, %v300
        %v304 = vmul.f32 %v299, %v300
        %v305 = vmul.f32 %v280, %v280
        %v306 = vmul.f32 %v281, %v281
        %v307 = vmul.f32 %v282, %v282
        %v308 = vmul.f32 %v283, %v283
        %v309 = vmul.f32 %v284, %v284
        %v310 = vmul.f32 %v285, %v285
        %v311 = vmul.f32 %v286, %v286
        %v312 = vmul.f32 %v287, %v287
        %v313 = vadd.f32 %v305, %v306
        %314 = vadd.xlane.f32.xlu0 %v313
        %v315 = vpop.xlane.xlu0 %314
        %v316 = vadd.f32 %v307, %v308
        %317 = vadd.xlane.f32.xlu0 %v316
        %v318 = vpop.xlane.xlu0 %317
        %v319 = vadd.f32 %v309, %v310
        %320 = vadd.xlane.f32.xlu0 %v319
        %v321 = vpop.xlane.xlu0 %320
        %v322 = vadd.f32 %v311, %v312
        %323 = vadd.xlane.f32.xlu0 %v322
        %v324 = vpop.xlane.xlu0 %323
        %v325 = vmul.f32 %v315, %v300
        %v326 = vmul.f32 %v318, %v300
        %v327 = vmul.f32 %v321, %v300
        %v328 = vmul.f32 %v324, %v300
        %v329 = vmul.f32 %v301, %v301
        %v330 = vmul.f32 %v302, %v302
        %v331 = vmul.f32 %v303, %v303
        %v332 = vmul.f32 %v304, %v304
        %v333 = vsub.f32 %v325, %v329
        %v334 = vsub.f32 %v326, %v330
        %v335 = vsub.f32 %v327, %v331
        %v336 = vsub.f32 %v328, %v332
        %v337 = vsub.f32 %v280, %v301
        %v338 = vsub.f32 %v281, %v301
        %v339 = vsub.f32 %v282, %v302
        %v340 = vsub.f32 %v283, %v302
        %v341 = vsub.f32 %v284, %v303
        %v342 = vsub.f32 %v285, %v303
        %v343 = vsub.f32 %v286, %v304
        %v344 = vsub.f32 %v287, %v304
        %v345 = vadd.f32 %v333, 1e-05
        %v346 = vadd.f32 %v334, 1e-05
        %v347 = vadd.f32 %v335, 1e-05
        %v348 = vadd.f32 %v336, 1e-05
        %v349 = vrsqrt.pop %v345
        %v350 = vrsqrt.pop %v346
        %v351 = vrsqrt.pop %v347
        %v352 = vrsqrt.pop %v348
        %v353 = vmul.f32 %v337, %v349
        %v354 = vmul.f32 %v338, %v349
        %v355 = vmul.f32 %v339, %v350
        %v356 = vmul.f32 %v340, %v350
        %v357 = vmul.f32 %v341, %v351
        %v358 = vmul.f32 %v342, %v351
        %v359 = vmul.f32 %v343, %v352
        %v360 = vmul.f32 %v344, %v352
        %362 = vset.pattern.permute.xlu0 0
        %363 = vperm.xlu0 %362, %v272
        %v364 = vpop.permute.xlu0 %363
        %367 = vset.pattern.permute.xlu0 0
        %368 = vperm.xlu0 %367, %v273
        %v369 = vpop.permute.xlu0 %368
        %372 = vset.pattern.permute.xlu0 0
        %373 = vperm.xlu0 %372, %v274
        %v374 = vpop.permute.xlu0 %373
        %377 = vset.pattern.permute.xlu0 0
        %378 = vperm.xlu0 %377, %v275
        %v379 = vpop.permute.xlu0 %378
        %v381 = vmul.f32 %v353, %v364
        %v382 = vmul.f32 %v354, %v364
        %v383 = vmul.f32 %v355, %v369
        %v384 = vmul.f32 %v356, %v369
        %v385 = vmul.f32 %v357, %v374
        %v386 = vmul.f32 %v358, %v374
        %v387 = vmul.f32 %v359, %v379
        %v388 = vmul.f32 %v360, %v379
        %389 = vset.pattern.permute.xlu0 1
        %390 = vperm.xlu0 %389, %v272
        %v391 = vpop.permute.xlu0 %390
        %393 = vset.pattern.permute.xlu0 1
        %394 = vperm.xlu0 %393, %v273
        %v395 = vpop.permute.xlu0 %394
        %397 = vset.pattern.permute.xlu0 1
        %398 = vperm.xlu0 %397, %v274
        %v399 = vpop.permute.xlu0 %398
        %401 = vset.pattern.permute.xlu0 1
        %402 = vperm.xlu0 %401, %v275
        %v403 = vpop.permute.xlu0 %402
        %v405 = vadd.f32 %v381, %v391
        %v406 = vadd.f32 %v382, %v391
        %v407 = vadd.f32 %v383, %v395
        %v408 = vadd.f32 %v384, %v395
        %v409 = vadd.f32 %v385, %v399
        %v410 = vadd.f32 %v386, %v399
        %v411 = vadd.f32 %v387, %v403
        %v412 = vadd.f32 %v388, %v403
        %v413 = vxor.u32 %v405, 2147483648
        %v414 = vxor.u32 %v406, 2147483648
        %v415 = vxor.u32 %v407, 2147483648
        %v416 = vxor.u32 %v408, 2147483648
        %v417 = vxor.u32 %v409, 2147483648
        %v418 = vxor.u32 %v410, 2147483648
        %v419 = vxor.u32 %v411, 2147483648
        %v420 = vxor.u32 %v412, 2147483648
        %v421 = vmul.f32 %v413, 1.442695
        %v422 = vpow.pop %v421
        %v423 = vmul.f32 %v414, 1.442695
        %v424 = vpow.pop %v423
        %v425 = vmul.f32 %v415, 1.442695
        %v426 = vpow.pop %v425
        %v427 = vmul.f32 %v416, 1.442695
        %v428 = vpow.pop %v427
        %v429 = vmul.f32 %v417, 1.442695
        %v430 = vpow.pop %v429
        %v431 = vmul.f32 %v418, 1.442695
        %v432 = vpow.pop %v431
        %v433 = vmul.f32 %v419, 1.442695
        %v434 = vpow.pop %v433
        %v435 = vmul.f32 %v420, 1.442695
        %v436 = vpow.pop %v435
        %v437 = vadd.f32 %v422, 1.0
        %v438 = vadd.f32 %v424, 1.0
        %v439 = vadd.f32 %v426, 1.0
        %v440 = vadd.f32 %v428, 1.0
        %v441 = vadd.f32 %v430, 1.0
        %v442 = vadd.f32 %v432, 1.0
        %v443 = vadd.f32 %v434, 1.0
        %v444 = vadd.f32 %v436, 1.0
        %v445 = vrcp.pop %v437
        %v446 = vmul.f32 1.0, %v445
        %v447 = vrcp.pop %v438
        %v448 = vmul.f32 1.0, %v447
        %v449 = vrcp.pop %v439
        %v450 = vmul.f32 1.0, %v449
        %v451 = vrcp.pop %v440
        %v452 = vmul.f32 1.0, %v451
        %v453 = vrcp.pop %v441
        %v454 = vmul.f32 1.0, %v453
        %v455 = vrcp.pop %v442
        %v456 = vmul.f32 1.0, %v455
        %v457 = vrcp.pop %v443
        %v458 = vmul.f32 1.0, %v457
        %v459 = vrcp.pop %v444
        %v460 = vmul.f32 1.0, %v459
        %v461 = vmul.f32 %v405, %v446
        %v462 = vmul.f32 %v406, %v448
        %v463 = vmul.f32 %v407, %v450
        %v464 = vmul.f32 %v408, %v452
        %v465 = vmul.f32 %v409, %v454
        %v466 = vmul.f32 %v410, %v456
        %v467 = vmul.f32 %v411, %v458
        %v468 = vmul.f32 %v412, %v460
        %469 = vrot.lane.b32.xlu0 %v461, 17
        %v470 = vpop.permute.xlu0 %469
        %471 = vrot.lane.b32.xlu0 %v463, 17
        %v472 = vpop.permute.xlu0 %471
        %473 = vrot.lane.b32.xlu0 %v465, 17
        %v474 = vpop.permute.xlu0 %473
        %475 = vrot.lane.b32.xlu0 %v467, 17
        %v476 = vpop.permute.xlu0 %475
        %477 = vrot.lane.b32.xlu0 %v462, 17
        %v478 = vpop.permute.xlu0 %477
        %479 = vrot.lane.b32.xlu0 %v464, 17
        %v480 = vpop.permute.xlu0 %479
        %481 = vrot.lane.b32.xlu0 %v466, 17
        %v482 = vpop.permute.xlu0 %481
        %483 = vrot.lane.b32.xlu0 %v468, 17
        %v484 = vpop.permute.xlu0 %483
        %v485 = vlaneseq
        %v486 = vand.u32 %v485, 127
        %vm487 = vcmp.lt.s32.totalorder %v486, 17
        %v488 = vsel %vm487, %v470, %v478
        %v489 = vsel %vm487, %v472, %v480
        %v490 = vsel %vm487, %v474, %v482
        %v491 = vsel %vm487, %v476, %v484
        %v492 = vsel %vm487, %v478, %v470
        %v493 = vsel %vm487, %v480, %v472
        %v494 = vsel %vm487, %v482, %v474
        %v495 = vsel %vm487, %v484, %v476
        %v496 = vlaneseq
        %v497 = vshrl.u32 %v496, 7
        %v498 = vsub.s32 0, %v497
        %v499 = vrot.slane %v276, %v498
        %v500 = vlaneseq
        %v501 = vshrl.u32 %v500, 7
        %v502 = vsub.s32 0, %v501
        %v503 = vrot.slane %v277, %v502
        %v504 = vmul.f32 %v492, %v499
        %v505 = vmul.f32 %v488, %v503
        %v506 = vmul.f32 %v493, %v499
        %v507 = vmul.f32 %v489, %v503
        %v508 = vmul.f32 %v494, %v499
        %v509 = vmul.f32 %v490, %v503
        %v510 = vmul.f32 %v495, %v499
        %v511 = vmul.f32 %v491, %v503
        %v512 = vpack.c.bf16 %v506, %v504
        %v513 = vpack.c.bf16 %v507, %v505
        %v514 = vpack.c.bf16 %v510, %v508
        %v515 = vpack.c.bf16 %v511, %v509
        %v520 = vunpack.c.l.b16 %v512
        %v521 = vunpack.c.l.b16 %v513
        %v522 = vunpack.c.h.b16 %v512
        %v523 = vunpack.c.h.b16 %v513
        %v524 = vunpack.c.l.b16 %v514
        %v525 = vunpack.c.l.b16 %v515
        %v526 = vunpack.c.h.b16 %v514
        %v527 = vunpack.c.h.b16 %v515
        %v528 = vpack.c.b16 %v521, %v520
        %v529 = vpack.c.b16 %v523, %v522
        %v530 = vpack.c.b16 %v525, %v524
        %v531 = vpack.c.b16 %v527, %v526
        %536 = vst [vmem:[#allocation2] sm:$0xff] %v528
        %537 = vst [vmem:[#allocation2 + $0x10] sm:$0xff] %v529
        %538 = vst [vmem:[#allocation2 + $0x20] sm:$0xff] %v530
        %539 = vst [vmem:[#allocation2 + $0x30] sm:$0xff] %v531
        %540 = vrot.lane.b32.xlu0 %v461, 16
        %v541 = vpop.permute.xlu0 %540
        %542 = vrot.lane.b32.xlu0 %v463, 16
        %v543 = vpop.permute.xlu0 %542
        %544 = vrot.lane.b32.xlu0 %v465, 16
        %v545 = vpop.permute.xlu0 %544
        %546 = vrot.lane.b32.xlu0 %v467, 16
        %v547 = vpop.permute.xlu0 %546
        %548 = vrot.lane.b32.xlu0 %v462, 16
        %v549 = vpop.permute.xlu0 %548
        %550 = vrot.lane.b32.xlu0 %v464, 16
        %v551 = vpop.permute.xlu0 %550
        %552 = vrot.lane.b32.xlu0 %v466, 16
        %v553 = vpop.permute.xlu0 %552
        %554 = vrot.lane.b32.xlu0 %v468, 16
        %v555 = vpop.permute.xlu0 %554
        %vm556 = vcmp.lt.s32.totalorder %v486, 16
        %v557 = vsel %vm556, %v541, %v549
        %v558 = vsel %vm556, %v543, %v551
        %v559 = vsel %vm556, %v545, %v553
        %v560 = vsel %vm556, %v547, %v555
        %v561 = vsel %vm556, %v549, %v541
        %v562 = vsel %vm556, %v551, %v543
        %v563 = vsel %vm556, %v553, %v545
        %v564 = vsel %vm556, %v555, %v547
        %v565 = vlaneseq
        %v566 = vshrl.u32 %v565, 7
        %v567 = vsub.s32 1, %v566
        %v568 = vrot.slane %v276, %v567
        %v569 = vlaneseq
        %v570 = vshrl.u32 %v569, 7
        %v571 = vsub.s32 1, %v570
        %v572 = vrot.slane %v277, %v571
        %v573 = vmul.f32 %v561, %v568
        %v574 = vmul.f32 %v557, %v572
        %v575 = vmul.f32 %v562, %v568
        %v576 = vmul.f32 %v558, %v572
        %v577 = vmul.f32 %v563, %v568
        %v578 = vmul.f32 %v559, %v572
        %v579 = vmul.f32 %v564, %v568
        %v580 = vmul.f32 %v560, %v572
        %v581 = vpack.c.bf16 %v575, %v573
        %v582 = vpack.c.bf16 %v576, %v574
        %v583 = vpack.c.bf16 %v579, %v577
        %v584 = vpack.c.bf16 %v580, %v578
        %v589 = vunpack.c.l.b16 %v581
        %v590 = vunpack.c.l.b16 %v582
        %v591 = vunpack.c.h.b16 %v581
        %v592 = vunpack.c.h.b16 %v582
        %v593 = vunpack.c.l.b16 %v583
        %v594 = vunpack.c.l.b16 %v584
        %v595 = vunpack.c.h.b16 %v583
        %v596 = vunpack.c.h.b16 %v584
        %v597 = vpack.c.b16 %v590, %v589
        %v598 = vpack.c.b16 %v592, %v591
        %v599 = vpack.c.b16 %v594, %v593
        %v600 = vpack.c.b16 %v596, %v595
        %605 = vst [vmem:[#allocation2 + $0x40] sm:$0xff] %v597
        %606 = vst [vmem:[#allocation2 + $0x50] sm:$0xff] %v598
        %607 = vst [vmem:[#allocation2 + $0x60] sm:$0xff] %v599
        %608 = vst [vmem:[#allocation2 + $0x70] sm:$0xff] %v600
        %609 = vrot.lane.b32.xlu0 %v461, 15
        %v610 = vpop.permute.xlu0 %609
        %611 = vrot.lane.b32.xlu0 %v463, 15
        %v612 = vpop.permute.xlu0 %611
        %613 = vrot.lane.b32.xlu0 %v465, 15
        %v614 = vpop.permute.xlu0 %613
        %615 = vrot.lane.b32.xlu0 %v467, 15
        %v616 = vpop.permute.xlu0 %615
        %617 = vrot.lane.b32.xlu0 %v462, 15
        %v618 = vpop.permute.xlu0 %617
        %619 = vrot.lane.b32.xlu0 %v464, 15
        %v620 = vpop.permute.xlu0 %619
        %621 = vrot.lane.b32.xlu0 %v466, 15
        %v622 = vpop.permute.xlu0 %621
        %623 = vrot.lane.b32.xlu0 %v468, 15
        %v624 = vpop.permute.xlu0 %623
        %vm625 = vcmp.lt.s32.totalorder %v486, 15
        %v626 = vsel %vm625, %v610, %v618
        %v627 = vsel %vm625, %v612, %v620
        %v628 = vsel %vm625, %v614, %v622
        %v629 = vsel %vm625, %v616, %v624
        %v630 = vsel %vm625, %v618, %v610
        %v631 = vsel %vm625, %v620, %v612
        %v632 = vsel %vm625, %v622, %v614
        %v633 = vsel %vm625, %v624, %v616
        %v634 = vlaneseq
        %v635 = vshrl.u32 %v634, 7
        %v636 = vsub.s32 2, %v635
        %v637 = vrot.slane %v276, %v636
        %v638 = vlaneseq
        %v639 = vshrl.u32 %v638, 7
        %v640 = vsub.s32 2, %v639
        %v641 = vrot.slane %v277, %v640
        %v642 = vmul.f32 %v630, %v637
        %v643 = vmul.f32 %v626, %v641
        %v644 = vmul.f32 %v631, %v637
        %v645 = vmul.f32 %v627, %v641
        %v646 = vmul.f32 %v632, %v637
        %v647 = vmul.f32 %v628, %v641
        %v648 = vmul.f32 %v633, %v637
        %v649 = vmul.f32 %v629, %v641
        %v650 = vpack.c.bf16 %v644, %v642
        %v651 = vpack.c.bf16 %v645, %v643
        %v652 = vpack.c.bf16 %v648, %v646
        %v653 = vpack.c.bf16 %v649, %v647
        %v658 = vunpack.c.l.b16 %v650
        %v659 = vunpack.c.l.b16 %v651
        %v660 = vunpack.c.h.b16 %v650
        %v661 = vunpack.c.h.b16 %v651
        %v662 = vunpack.c.l.b16 %v652
        %v663 = vunpack.c.l.b16 %v653
        %v664 = vunpack.c.h.b16 %v652
        %v665 = vunpack.c.h.b16 %v653
        %v666 = vpack.c.b16 %v659, %v658
        %v667 = vpack.c.b16 %v661, %v660
        %v668 = vpack.c.b16 %v663, %v662
        %v669 = vpack.c.b16 %v665, %v664
        %674 = vst [vmem:[#allocation2 + $0x80] sm:$0xff] %v666
        %675 = vst [vmem:[#allocation2 + $0x90] sm:$0xff] %v667
        %676 = vst [vmem:[#allocation2 + $0xa0] sm:$0xff] %v668
        %677 = vst [vmem:[#allocation2 + $0xb0] sm:$0xff] %v669
        %678 = vrot.lane.b32.xlu0 %v461, 1
        %v679 = vpop.permute.xlu0 %678
        %680 = vrot.lane.b32.xlu0 %v463, 1
        %v681 = vpop.permute.xlu0 %680
        %682 = vrot.lane.b32.xlu0 %v465, 1
        %v683 = vpop.permute.xlu0 %682
        %684 = vrot.lane.b32.xlu0 %v467, 1
        %v685 = vpop.permute.xlu0 %684
        %686 = vrot.lane.b32.xlu0 %v462, 1
        %v687 = vpop.permute.xlu0 %686
        %688 = vrot.lane.b32.xlu0 %v464, 1
        %v689 = vpop.permute.xlu0 %688
        %690 = vrot.lane.b32.xlu0 %v466, 1
        %v691 = vpop.permute.xlu0 %690
        %692 = vrot.lane.b32.xlu0 %v468, 1
        %v693 = vpop.permute.xlu0 %692
        %vm694 = vcmp.lt.s32.totalorder %v486, 1
        %v695 = vsel %vm694, %v679, %v687
        %v696 = vsel %vm694, %v681, %v689
        %v697 = vsel %vm694, %v683, %v691
        %v698 = vsel %vm694, %v685, %v693
        %v699 = vsel %vm694, %v687, %v679
        %v700 = vsel %vm694, %v689, %v681
        %v701 = vsel %vm694, %v691, %v683
        %v702 = vsel %vm694, %v693, %v685
        %v703 = vlaneseq
        %v704 = vshrl.u32 %v703, 7
        %v705 = vsub.s32 3, %v704
        %v706 = vrot.slane %v276, %v705
        %v707 = vlaneseq
        %v708 = vshrl.u32 %v707, 7
        %v709 = vsub.s32 3, %v708
        %v710 = vrot.slane %v277, %v709
        %v711 = vmul.f32 %v699, %v706
        %v712 = vmul.f32 %v695, %v710
        %v713 = vmul.f32 %v700, %v706
        %v714 = vmul.f32 %v696, %v710
        %v715 = vmul.f32 %v701, %v706
        %v716 = vmul.f32 %v697, %v710
        %v717 = vmul.f32 %v702, %v706
        %v718 = vmul.f32 %v698, %v710
        %v719 = vpack.c.bf16 %v713, %v711
        %v720 = vpack.c.bf16 %v714, %v712
        %v721 = vpack.c.bf16 %v717, %v715
        %v722 = vpack.c.bf16 %v718, %v716
        %v727 = vunpack.c.l.b16 %v719
        %v728 = vunpack.c.l.b16 %v720
        %v729 = vunpack.c.h.b16 %v719
        %v730 = vunpack.c.h.b16 %v720
        %v731 = vunpack.c.l.b16 %v721
        %v732 = vunpack.c.l.b16 %v722
        %v733 = vunpack.c.h.b16 %v721
        %v734 = vunpack.c.h.b16 %v722
        %v735 = vpack.c.b16 %v728, %v727
        %v736 = vpack.c.b16 %v730, %v729
        %v737 = vpack.c.b16 %v732, %v731
        %v738 = vpack.c.b16 %v734, %v733
        %743 = vst [vmem:[#allocation2 + $0xc0] sm:$0xff] %v735
        %744 = vst [vmem:[#allocation2 + $0xd0] sm:$0xff] %v736
        %745 = vst [vmem:[#allocation2 + $0xe0] sm:$0xff] %v737
        %746 = vst [vmem:[#allocation2 + $0xf0] sm:$0xff] %v738
        %v747 = vpack.c.bf16 %v463, %v461
        %v748 = vpack.c.bf16 %v464, %v462
        %v749 = vpack.c.bf16 %v467, %v465
        %v750 = vpack.c.bf16 %v468, %v466
        %v755 = vunpack.c.l.b16 %v747
        %v756 = vunpack.c.l.b16 %v748
        %v757 = vunpack.c.h.b16 %v747
        %v758 = vunpack.c.h.b16 %v748
        %v759 = vunpack.c.l.b16 %v749
        %v760 = vunpack.c.l.b16 %v750
        %v761 = vunpack.c.h.b16 %v749
        %v762 = vunpack.c.h.b16 %v750
        %v763 = vpack.c.b16 %v756, %v755
        %v764 = vpack.c.b16 %v758, %v757
        %v765 = vpack.c.b16 %v760, %v759
        %v766 = vpack.c.b16 %v762, %v761
        %771 = vst [vmem:[#allocation2 + $0x100] sm:$0xff] %v763
        %772 = vst [vmem:[#allocation2 + $0x110] sm:$0xff] %v764
        %773 = vst [vmem:[#allocation2 + $0x120] sm:$0xff] %v765
        %774 = vst [vmem:[#allocation2 + $0x130] sm:$0xff] %v766
        %775 = vrot.lane.b32.xlu0 %v461, 127
        %v776 = vpop.permute.xlu0 %775
        %777 = vrot.lane.b32.xlu0 %v463, 127
        %v778 = vpop.permute.xlu0 %777
        %779 = vrot.lane.b32.xlu0 %v465, 127
        %v780 = vpop.permute.xlu0 %779
        %781 = vrot.lane.b32.xlu0 %v467, 127
        %v782 = vpop.permute.xlu0 %781
        %783 = vrot.lane.b32.xlu0 %v462, 127
        %v784 = vpop.permute.xlu0 %783
        %785 = vrot.lane.b32.xlu0 %v464, 127
        %v786 = vpop.permute.xlu0 %785
        %787 = vrot.lane.b32.xlu0 %v466, 127
        %v788 = vpop.permute.xlu0 %787
        %789 = vrot.lane.b32.xlu0 %v468, 127
        %v790 = vpop.permute.xlu0 %789
        %vm791 = vcmp.lt.s32.totalorder %v486, 127
        %v792 = vsel %vm791, %v776, %v784
        %v793 = vsel %vm791, %v778, %v786
        %v794 = vsel %vm791, %v780, %v788
        %v795 = vsel %vm791, %v782, %v790
        %v796 = vsel %vm791, %v784, %v776
        %v797 = vsel %vm791, %v786, %v778
        %v798 = vsel %vm791, %v788, %v780
        %v799 = vsel %vm791, %v790, %v782
        %v800 = vlaneseq
        %v801 = vshrl.u32 %v800, 7
        %v802 = vsub.s32 5, %v801
        %v803 = vrot.slane %v276, %v802
        %v804 = vlaneseq
        %v805 = vshrl.u32 %v804, 7
        %v806 = vsub.s32 5, %v805
        %v807 = vrot.slane %v277, %v806
        %v808 = vmul.f32 %v792, %v803
        %v809 = vmul.f32 %v796, %v807
        %v810 = vmul.f32 %v793, %v803
        %v811 = vmul.f32 %v797, %v807
        %v812 = vmul.f32 %v794, %v803
        %v813 = vmul.f32 %v798, %v807
        %v814 = vmul.f32 %v795, %v803
        %v815 = vmul.f32 %v799, %v807
        %v816 = vpack.c.bf16 %v810, %v808
        %v817 = vpack.c.bf16 %v811, %v809
        %v818 = vpack.c.bf16 %v814, %v812
        %v819 = vpack.c.bf16 %v815, %v813
        %v824 = vunpack.c.l.b16 %v816
        %v825 = vunpack.c.l.b16 %v817
        %v826 = vunpack.c.h.b16 %v816
        %v827 = vunpack.c.h.b16 %v817
        %v828 = vunpack.c.l.b16 %v818
        %v829 = vunpack.c.l.b16 %v819
        %v830 = vunpack.c.h.b16 %v818
        %v831 = vunpack.c.h.b16 %v819
        %v832 = vpack.c.b16 %v825, %v824
        %v833 = vpack.c.b16 %v827, %v826
        %v834 = vpack.c.b16 %v829, %v828
        %v835 = vpack.c.b16 %v831, %v830
        %840 = vst [vmem:[#allocation2 + $0x140] sm:$0xff] %v832
        %841 = vst [vmem:[#allocation2 + $0x150] sm:$0xff] %v833
        %842 = vst [vmem:[#allocation2 + $0x160] sm:$0xff] %v834
        %843 = vst [vmem:[#allocation2 + $0x170] sm:$0xff] %v835
        %844 = vrot.lane.b32.xlu0 %v461, 113
        %v845 = vpop.permute.xlu0 %844
        %846 = vrot.lane.b32.xlu0 %v463, 113
        %v847 = vpop.permute.xlu0 %846
        %848 = vrot.lane.b32.xlu0 %v465, 113
        %v849 = vpop.permute.xlu0 %848
        %850 = vrot.lane.b32.xlu0 %v467, 113
        %v851 = vpop.permute.xlu0 %850
        %852 = vrot.lane.b32.xlu0 %v462, 113
        %v853 = vpop.permute.xlu0 %852
        %854 = vrot.lane.b32.xlu0 %v464, 113
        %v855 = vpop.permute.xlu0 %854
        %856 = vrot.lane.b32.xlu0 %v466, 113
        %v857 = vpop.permute.xlu0 %856
        %858 = vrot.lane.b32.xlu0 %v468, 113
        %v859 = vpop.permute.xlu0 %858
        %vm860 = vcmp.lt.s32.totalorder %v486, 113
        %v861 = vsel %vm860, %v845, %v853
        %v862 = vsel %vm860, %v847, %v855
        %v863 = vsel %vm860, %v849, %v857
        %v864 = vsel %vm860, %v851, %v859
        %v865 = vsel %vm860, %v853, %v845
        %v866 = vsel %vm860, %v855, %v847
        %v867 = vsel %vm860, %v857, %v849
        %v868 = vsel %vm860, %v859, %v851
        %v869 = vlaneseq
        %v870 = vshrl.u32 %v869, 7
        %v871 = vsub.s32 6, %v870
        %v872 = vrot.slane %v276, %v871
        %v873 = vlaneseq
        %v874 = vshrl.u32 %v873, 7
        %v875 = vsub.s32 6, %v874
        %v876 = vrot.slane %v277, %v875
        %v877 = vmul.f32 %v861, %v872
        %v878 = vmul.f32 %v865, %v876
        %v879 = vmul.f32 %v862, %v872
        %v880 = vmul.f32 %v866, %v876
        %v881 = vmul.f32 %v863, %v872
        %v882 = vmul.f32 %v867, %v876
        %v883 = vmul.f32 %v864, %v872
        %v884 = vmul.f32 %v868, %v876
        %v885 = vpack.c.bf16 %v879, %v877
        %v886 = vpack.c.bf16 %v880, %v878
        %v887 = vpack.c.bf16 %v883, %v881
        %v888 = vpack.c.bf16 %v884, %v882
        %v893 = vunpack.c.l.b16 %v885
        %v894 = vunpack.c.l.b16 %v886
        %v895 = vunpack.c.h.b16 %v885
        %v896 = vunpack.c.h.b16 %v886
        %v897 = vunpack.c.l.b16 %v887
        %v898 = vunpack.c.l.b16 %v888
        %v899 = vunpack.c.h.b16 %v887
        %v900 = vunpack.c.h.b16 %v888
        %v901 = vpack.c.b16 %v894, %v893
        %v902 = vpack.c.b16 %v896, %v895
        %v903 = vpack.c.b16 %v898, %v897
        %v904 = vpack.c.b16 %v900, %v899
        %909 = vst [vmem:[#allocation2 + $0x180] sm:$0xff] %v901
        %910 = vst [vmem:[#allocation2 + $0x190] sm:$0xff] %v902
        %911 = vst [vmem:[#allocation2 + $0x1a0] sm:$0xff] %v903
        %912 = vst [vmem:[#allocation2 + $0x1b0] sm:$0xff] %v904
        %913 = vrot.lane.b32.xlu0 %v461, 112
        %v914 = vpop.permute.xlu0 %913
        %915 = vrot.lane.b32.xlu0 %v463, 112
        %v916 = vpop.permute.xlu0 %915
        %917 = vrot.lane.b32.xlu0 %v465, 112
        %v918 = vpop.permute.xlu0 %917
        %919 = vrot.lane.b32.xlu0 %v467, 112
        %v920 = vpop.permute.xlu0 %919
        %921 = vrot.lane.b32.xlu0 %v462, 112
        %v922 = vpop.permute.xlu0 %921
        %923 = vrot.lane.b32.xlu0 %v464, 112
        %v924 = vpop.permute.xlu0 %923
        %925 = vrot.lane.b32.xlu0 %v466, 112
        %v926 = vpop.permute.xlu0 %925
        %927 = vrot.lane.b32.xlu0 %v468, 112
        %v928 = vpop.permute.xlu0 %927
        %vm929 = vcmp.lt.s32.totalorder %v486, 112
        %v930 = vsel %vm929, %v914, %v922
        %v931 = vsel %vm929, %v916, %v924
        %v932 = vsel %vm929, %v918, %v926
        %v933 = vsel %vm929, %v920, %v928
        %v934 = vsel %vm929, %v922, %v914
        %v935 = vsel %vm929, %v924, %v916
        %v936 = vsel %vm929, %v926, %v918
        %v937 = vsel %vm929, %v928, %v920
        %v938 = vlaneseq
        %v939 = vshrl.u32 %v938, 7
        %v940 = vsub.s32 7, %v939
        %v941 = vrot.slane %v276, %v940
        %v942 = vlaneseq
        %v943 = vshrl.u32 %v942, 7
        %v944 = vsub.s32 7, %v943
        %v945 = vrot.slane %v277, %v944
        %v946 = vmul.f32 %v930, %v941
        %v947 = vmul.f32 %v934, %v945
        %v948 = vmul.f32 %v931, %v941
        %v949 = vmul.f32 %v935, %v945
        %v950 = vmul.f32 %v932, %v941
        %v951 = vmul.f32 %v936, %v945
        %v952 = vmul.f32 %v933, %v941
        %v953 = vmul.f32 %v937, %v945
        %v954 = vpack.c.bf16 %v948, %v946
        %v955 = vpack.c.bf16 %v949, %v947
        %v956 = vpack.c.bf16 %v952, %v950
        %v957 = vpack.c.bf16 %v953, %v951
        %v962 = vunpack.c.l.b16 %v954
        %v963 = vunpack.c.l.b16 %v955
        %v964 = vunpack.c.h.b16 %v954
        %v965 = vunpack.c.h.b16 %v955
        %v966 = vunpack.c.l.b16 %v956
        %v967 = vunpack.c.l.b16 %v957
        %v968 = vunpack.c.h.b16 %v956
        %v969 = vunpack.c.h.b16 %v957
        %v970 = vpack.c.b16 %v963, %v962
        %v971 = vpack.c.b16 %v965, %v964
        %v972 = vpack.c.b16 %v967, %v966
        %v973 = vpack.c.b16 %v969, %v968
        %978 = vst [vmem:[#allocation2 + $0x1c0] sm:$0xff] %v970
        %979 = vst [vmem:[#allocation2 + $0x1d0] sm:$0xff] %v971
        %980 = vst [vmem:[#allocation2 + $0x1e0] sm:$0xff] %v972
        %981 = vst [vmem:[#allocation2 + $0x1f0] sm:$0xff] %v973
        %982 = vrot.lane.b32.xlu0 %v461, 111
        %v983 = vpop.permute.xlu0 %982
        %984 = vrot.lane.b32.xlu0 %v463, 111
        %v985 = vpop.permute.xlu0 %984
        %986 = vrot.lane.b32.xlu0 %v465, 111
        %v987 = vpop.permute.xlu0 %986
        %988 = vrot.lane.b32.xlu0 %v467, 111
        %v989 = vpop.permute.xlu0 %988
        %990 = vrot.lane.b32.xlu0 %v462, 111
        %v991 = vpop.permute.xlu0 %990
        %992 = vrot.lane.b32.xlu0 %v464, 111
        %v993 = vpop.permute.xlu0 %992
        %994 = vrot.lane.b32.xlu0 %v466, 111
        %v995 = vpop.permute.xlu0 %994
        %996 = vrot.lane.b32.xlu0 %v468, 111
        %v997 = vpop.permute.xlu0 %996
        %vm998 = vcmp.lt.s32.totalorder %v486, 111
        %v999 = vsel %vm998, %v983, %v991
        %v1000 = vsel %vm998, %v985, %v993
        %v1001 = vsel %vm998, %v987, %v995
        %v1002 = vsel %vm998, %v989, %v997
        %v1003 = vsel %vm998, %v991, %v983
        %v1004 = vsel %vm998, %v993, %v985
        %v1005 = vsel %vm998, %v995, %v987
        %v1006 = vsel %vm998, %v997, %v989
        %v1007 = vlaneseq
        %v1008 = vshrl.u32 %v1007, 7
        %v1009 = vsub.s32 0, %v1008
        %v1010 = vrot.slane %v278, %v1009
        %v1011 = vlaneseq
        %v1012 = vshrl.u32 %v1011, 7
        %v1013 = vsub.s32 0, %v1012
        %v1014 = vrot.slane %v279, %v1013
        %v1015 = vmul.f32 %v999, %v1010
        %v1016 = vmul.f32 %v1003, %v1014
        %v1017 = vmul.f32 %v1000, %v1010
        %v1018 = vmul.f32 %v1004, %v1014
        %v1019 = vmul.f32 %v1001, %v1010
        %v1020 = vmul.f32 %v1005, %v1014
        %v1021 = vmul.f32 %v1002, %v1010
        %v1022 = vmul.f32 %v1006, %v1014
        %v1023 = vpack.c.bf16 %v1017, %v1015
        %v1024 = vpack.c.bf16 %v1018, %v1016
        %v1025 = vpack.c.bf16 %v1021, %v1019
        %v1026 = vpack.c.bf16 %v1022, %v1020
        %v1031 = vunpack.c.l.b16 %v1023
        %v1032 = vunpack.c.l.b16 %v1024
        %v1033 = vunpack.c.h.b16 %v1023
        %v1034 = vunpack.c.h.b16 %v1024
        %v1035 = vunpack.c.l.b16 %v1025
        %v1036 = vunpack.c.l.b16 %v1026
        %v1037 = vunpack.c.h.b16 %v1025
        %v1038 = vunpack.c.h.b16 %v1026
        %v1039 = vpack.c.b16 %v1032, %v1031
        %v1040 = vpack.c.b16 %v1034, %v1033
        %v1041 = vpack.c.b16 %v1036, %v1035
        %v1042 = vpack.c.b16 %v1038, %v1037
        %1047 = vst [vmem:[#allocation2 + $0x200] sm:$0xff] %v1039
        %1048 = vst [vmem:[#allocation2 + $0x210] sm:$0xff] %v1040
        %1049 = vst [vmem:[#allocation2 + $0x220] sm:$0xff] %v1041
        %1050 = vst [vmem:[#allocation2 + $0x230] sm:$0xff] %v1042
        %s1051 = scalar_lea.vmem %s229, 64 [#allocation3]
        %v1052 = vld [vmem:[%s1051] sm:$0xff]
        %v1053 = vld [vmem:[%s1051 + $0x8] sm:$0xff]
        %v1054 = vld [vmem:[%s1051 + $0x10] sm:$0xff]
        %v1055 = vld [vmem:[%s1051 + $0x18] sm:$0xff]
        %v1056 = vld [vmem:[%s1051 + $0x20] sm:$0xff]
        %v1057 = vld [vmem:[%s1051 + $0x28] sm:$0xff]
        %v1058 = vld [vmem:[%s1051 + $0x30] sm:$0xff]
        %v1059 = vld [vmem:[%s1051 + $0x38] sm:$0xff]
        %v1060 = vadd.f32 %v1052, %v1053
        %1061 = vadd.xlane.f32.xlu0 %v1060
        %v1062 = vpop.xlane.xlu0 %1061
        %v1063 = vadd.f32 %v1054, %v1055
        %1064 = vadd.xlane.f32.xlu0 %v1063
        %v1065 = vpop.xlane.xlu0 %1064
        %v1066 = vadd.f32 %v1056, %v1057
        %1067 = vadd.xlane.f32.xlu0 %v1066
        %v1068 = vpop.xlane.xlu0 %1067
        %v1069 = vadd.f32 %v1058, %v1059
        %1070 = vadd.xlane.f32.xlu0 %v1069
        %v1071 = vpop.xlane.xlu0 %1070
        %v1072 = vmul.f32 %v1062, %v300
        %v1073 = vmul.f32 %v1065, %v300
        %v1074 = vmul.f32 %v1068, %v300
        %v1075 = vmul.f32 %v1071, %v300
        %v1076 = vmul.f32 %v1052, %v1052
        %v1077 = vmul.f32 %v1053, %v1053
        %v1078 = vmul.f32 %v1054, %v1054
        %v1079 = vmul.f32 %v1055, %v1055
        %v1080 = vmul.f32 %v1056, %v1056
        %v1081 = vmul.f32 %v1057, %v1057
        %v1082 = vmul.f32 %v1058, %v1058
        %v1083 = vmul.f32 %v1059, %v1059
        %v1084 = vadd.f32 %v1076, %v1077
        %1085 = vadd.xlane.f32.xlu0 %v1084
        %v1086 = vpop.xlane.xlu0 %1085
        %v1087 = vadd.f32 %v1078, %v1079
        %1088 = vadd.xlane.f32.xlu0 %v1087
        %v1089 = vpop.xlane.xlu0 %1088
        %v1090 = vadd.f32 %v1080, %v1081
        %1091 = vadd.xlane.f32.xlu0 %v1090
        %v1092 = vpop.xlane.xlu0 %1091
        %v1093 = vadd.f32 %v1082, %v1083
        %1094 = vadd.xlane.f32.xlu0 %v1093
        %v1095 = vpop.xlane.xlu0 %1094
        %v1096 = vmul.f32 %v1086, %v300
        %v1097 = vmul.f32 %v1089, %v300
        %v1098 = vmul.f32 %v1092, %v300
        %v1099 = vmul.f32 %v1095, %v300
        %v1100 = vmul.f32 %v1072, %v1072
        %v1101 = vmul.f32 %v1073, %v1073
        %v1102 = vmul.f32 %v1074, %v1074
        %v1103 = vmul.f32 %v1075, %v1075
        %v1104 = vsub.f32 %v1096, %v1100
        %v1105 = vsub.f32 %v1097, %v1101
        %v1106 = vsub.f32 %v1098, %v1102
        %v1107 = vsub.f32 %v1099, %v1103
        %v1108 = vsub.f32 %v1052, %v1072
        %v1109 = vsub.f32 %v1053, %v1072
        %v1110 = vsub.f32 %v1054, %v1073
        %v1111 = vsub.f32 %v1055, %v1073
        %v1112 = vsub.f32 %v1056, %v1074
        %v1113 = vsub.f32 %v1057, %v1074
        %v1114 = vsub.f32 %v1058, %v1075
        %v1115 = vsub.f32 %v1059, %v1075
        %v1116 = vadd.f32 %v1104, 1e-05
        %v1117 = vadd.f32 %v1105, 1e-05
        %v1118 = vadd.f32 %v1106, 1e-05
        %v1119 = vadd.f32 %v1107, 1e-05
        %v1120 = vrsqrt.pop %v1116
        %v1121 = vrsqrt.pop %v1117
        %v1122 = vrsqrt.pop %v1118
        %v1123 = vrsqrt.pop %v1119
        %v1124 = vmul.f32 %v1108, %v1120
        %v1125 = vmul.f32 %v1109, %v1120
        %v1126 = vmul.f32 %v1110, %v1121
        %v1127 = vmul.f32 %v1111, %v1121
        %v1128 = vmul.f32 %v1112, %v1122
        %v1129 = vmul.f32 %v1113, %v1122
        %v1130 = vmul.f32 %v1114, %v1123
        %v1131 = vmul.f32 %v1115, %v1123
        %v1132 = vmul.f32 %v1124, %v364
        %v1133 = vmul.f32 %v1125, %v364
        %v1134 = vmul.f32 %v1126, %v369
        %v1135 = vmul.f32 %v1127, %v369
        %v1136 = vmul.f32 %v1128, %v374
        %v1137 = vmul.f32 %v1129, %v374
        %v1138 = vmul.f32 %v1130, %v379
        %v1139 = vmul.f32 %v1131, %v379
        %v1140 = vadd.f32 %v1132, %v391
        %v1141 = vadd.f32 %v1133, %v391
        %v1142 = vadd.f32 %v1134, %v395
        %v1143 = vadd.f32 %v1135, %v395
        %v1144 = vadd.f32 %v1136, %v399
        %v1145 = vadd.f32 %v1137, %v399
        %v1146 = vadd.f32 %v1138, %v403
        %v1147 = vadd.f32 %v1139, %v403
        %v1148 = vxor.u32 %v1140, 2147483648
        %v1149 = vxor.u32 %v1141, 2147483648
        %v1150 = vxor.u32 %v1142, 2147483648
        %v1151 = vxor.u32 %v1143, 2147483648
        %v1152 = vxor.u32 %v1144, 2147483648
        %v1153 = vxor.u32 %v1145, 2147483648
        %v1154 = vxor.u32 %v1146, 2147483648
        %v1155 = vxor.u32 %v1147, 2147483648
        %v1156 = vmul.f32 %v1148, 1.442695
        %v1157 = vpow.pop %v1156
        %v1158 = vmul.f32 %v1149, 1.442695
        %v1159 = vpow.pop %v1158
        %v1160 = vmul.f32 %v1150, 1.442695
        %v1161 = vpow.pop %v1160
        %v1162 = vmul.f32 %v1151, 1.442695
        %v1163 = vpow.pop %v1162
        %v1164 = vmul.f32 %v1152, 1.442695
        %v1165 = vpow.pop %v1164
        %v1166 = vmul.f32 %v1153, 1.442695
        %v1167 = vpow.pop %v1166
        %v1168 = vmul.f32 %v1154, 1.442695
        %v1169 = vpow.pop %v1168
        %v1170 = vmul.f32 %v1155, 1.442695
        %v1171 = vpow.pop %v1170
        %v1172 = vadd.f32 %v1157, 1.0
        %v1173 = vadd.f32 %v1159, 1.0
        %v1174 = vadd.f32 %v1161, 1.0
        %v1175 = vadd.f32 %v1163, 1.0
        %v1176 = vadd.f32 %v1165, 1.0
        %v1177 = vadd.f32 %v1167, 1.0
        %v1178 = vadd.f32 %v1169, 1.0
        %v1179 = vadd.f32 %v1171, 1.0
        %v1180 = vrcp.pop %v1172
        %v1181 = vmul.f32 1.0, %v1180
        %v1182 = vrcp.pop %v1173
        %v1183 = vmul.f32 1.0, %v1182
        %v1184 = vrcp.pop %v1174
        %v1185 = vmul.f32 1.0, %v1184
        %v1186 = vrcp.pop %v1175
        %v1187 = vmul.f32 1.0, %v1186
        %v1188 = vrcp.pop %v1176
        %v1189 = vmul.f32 1.0, %v1188
        %v1190 = vrcp.pop %v1177
        %v1191 = vmul.f32 1.0, %v1190
        %v1192 = vrcp.pop %v1178
        %v1193 = vmul.f32 1.0, %v1192
        %v1194 = vrcp.pop %v1179
        %v1195 = vmul.f32 1.0, %v1194
        %v1196 = vmul.f32 %v1140, %v1181
        %v1197 = vmul.f32 %v1141, %v1183
        %v1198 = vmul.f32 %v1142, %v1185
        %v1199 = vmul.f32 %v1143, %v1187
        %v1200 = vmul.f32 %v1144, %v1189
        %v1201 = vmul.f32 %v1145, %v1191
        %v1202 = vmul.f32 %v1146, %v1193
        %v1203 = vmul.f32 %v1147, %v1195
        %1204 = vrot.lane.b32.xlu0 %v1196, 17
        %v1205 = vpop.permute.xlu0 %1204
        %1206 = vrot.lane.b32.xlu0 %v1198, 17
        %v1207 = vpop.permute.xlu0 %1206
        %1208 = vrot.lane.b32.xlu0 %v1200, 17
        %v1209 = vpop.permute.xlu0 %1208
        %1210 = vrot.lane.b32.xlu0 %v1202, 17
        %v1211 = vpop.permute.xlu0 %1210
        %1212 = vrot.lane.b32.xlu0 %v1197, 17
        %v1213 = vpop.permute.xlu0 %1212
        %1214 = vrot.lane.b32.xlu0 %v1199, 17
        %v1215 = vpop.permute.xlu0 %1214
        %1216 = vrot.lane.b32.xlu0 %v1201, 17
        %v1217 = vpop.permute.xlu0 %1216
        %1218 = vrot.lane.b32.xlu0 %v1203, 17
        %v1219 = vpop.permute.xlu0 %1218
        %v1220 = vsel %vm487, %v1205, %v1213
        %v1221 = vsel %vm487, %v1207, %v1215
        %v1222 = vsel %vm487, %v1209, %v1217
        %v1223 = vsel %vm487, %v1211, %v1219
        %v1224 = vsel %vm487, %v1213, %v1205
        %v1225 = vsel %vm487, %v1215, %v1207
        %v1226 = vsel %vm487, %v1217, %v1209
        %v1227 = vsel %vm487, %v1219, %v1211
        %v1228 = vmul.f32 %v1224, %v499
        %v1229 = vmul.f32 %v1220, %v503
        %v1230 = vmul.f32 %v1225, %v499
        %v1231 = vmul.f32 %v1221, %v503
        %v1232 = vmul.f32 %v1226, %v499
        %v1233 = vmul.f32 %v1222, %v503
        %v1234 = vmul.f32 %v1227, %v499
        %v1235 = vmul.f32 %v1223, %v503
        %v1236 = vpack.c.bf16 %v1230, %v1228
        %v1237 = vpack.c.bf16 %v1231, %v1229
        %v1238 = vpack.c.bf16 %v1234, %v1232
        %v1239 = vpack.c.bf16 %v1235, %v1233
        %v1244 = vunpack.c.l.b16 %v1236
        %v1245 = vunpack.c.l.b16 %v1237
        %v1246 = vunpack.c.h.b16 %v1236
        %v1247 = vunpack.c.h.b16 %v1237
        %v1248 = vunpack.c.l.b16 %v1238
        %v1249 = vunpack.c.l.b16 %v1239
        %v1250 = vunpack.c.h.b16 %v1238
        %v1251 = vunpack.c.h.b16 %v1239
        %v1252 = vpack.c.b16 %v1245, %v1244
        %v1253 = vpack.c.b16 %v1247, %v1246
        %v1254 = vpack.c.b16 %v1249, %v1248
        %v1255 = vpack.c.b16 %v1251, %v1250
        %1260 = vst [vmem:[#allocation2 + $0x8] sm:$0xff] %v1252
        %1261 = vst [vmem:[#allocation2 + $0x18] sm:$0xff] %v1253
        %1262 = vst [vmem:[#allocation2 + $0x28] sm:$0xff] %v1254
        %1263 = vst [vmem:[#allocation2 + $0x38] sm:$0xff] %v1255
        %1264 = vrot.lane.b32.xlu0 %v1196, 16
        %v1265 = vpop.permute.xlu0 %1264
        %1266 = vrot.lane.b32.xlu0 %v1198, 16
        %v1267 = vpop.permute.xlu0 %1266
        %1268 = vrot.lane.b32.xlu0 %v1200, 16
        %v1269 = vpop.permute.xlu0 %1268
        %1270 = vrot.lane.b32.xlu0 %v1202, 16
        %v1271 = vpop.permute.xlu0 %1270
        %1272 = vrot.lane.b32.xlu0 %v1197, 16
        %v1273 = vpop.permute.xlu0 %1272
        %1274 = vrot.lane.b32.xlu0 %v1199, 16
        %v1275 = vpop.permute.xlu0 %1274
        %1276 = vrot.lane.b32.xlu0 %v1201, 16
        %v1277 = vpop.permute.xlu0 %1276
        %1278 = vrot.lane.b32.xlu0 %v1203, 16
        %v1279 = vpop.permute.xlu0 %1278
        %v1280 = vsel %vm556, %v1265, %v1273
        %v1281 = vsel %vm556, %v1267, %v1275
        %v1282 = vsel %vm556, %v1269, %v1277
        %v1283 = vsel %vm556, %v1271, %v1279
        %v1284 = vsel %vm556, %v1273, %v1265
        %v1285 = vsel %vm556, %v1275, %v1267
        %v1286 = vsel %vm556, %v1277, %v1269
        %v1287 = vsel %vm556, %v1279, %v1271
        %v1288 = vmul.f32 %v1284, %v568
        %v1289 = vmul.f32 %v1280, %v572
        %v1290 = vmul.f32 %v1285, %v568
        %v1291 = vmul.f32 %v1281, %v572
        %v1292 = vmul.f32 %v1286, %v568
        %v1293 = vmul.f32 %v1282, %v572
        %v1294 = vmul.f32 %v1287, %v568
        %v1295 = vmul.f32 %v1283, %v572
        %v1296 = vpack.c.bf16 %v1290, %v1288
        %v1297 = vpack.c.bf16 %v1291, %v1289
        %v1298 = vpack.c.bf16 %v1294, %v1292
        %v1299 = vpack.c.bf16 %v1295, %v1293
        %v1304 = vunpack.c.l.b16 %v1296
        %v1305 = vunpack.c.l.b16 %v1297
        %v1306 = vunpack.c.h.b16 %v1296
        %v1307 = vunpack.c.h.b16 %v1297
        %v1308 = vunpack.c.l.b16 %v1298
        %v1309 = vunpack.c.l.b16 %v1299
        %v1310 = vunpack.c.h.b16 %v1298
        %v1311 = vunpack.c.h.b16 %v1299
        %v1312 = vpack.c.b16 %v1305, %v1304
        %v1313 = vpack.c.b16 %v1307, %v1306
        %v1314 = vpack.c.b16 %v1309, %v1308
        %v1315 = vpack.c.b16 %v1311, %v1310
        %1320 = vst [vmem:[#allocation2 + $0x48] sm:$0xff] %v1312
        %1321 = vst [vmem:[#allocation2 + $0x58] sm:$0xff] %v1313
        %1322 = vst [vmem:[#allocation2 + $0x68] sm:$0xff] %v1314
        %1323 = vst [vmem:[#allocation2 + $0x78] sm:$0xff] %v1315
        %1324 = vrot.lane.b32.xlu0 %v1196, 15
        %v1325 = vpop.permute.xlu0 %1324
        %1326 = vrot.lane.b32.xlu0 %v1198, 15
        %v1327 = vpop.permute.xlu0 %1326
        %1328 = vrot.lane.b32.xlu0 %v1200, 15
        %v1329 = vpop.permute.xlu0 %1328
        %1330 = vrot.lane.b32.xlu0 %v1202, 15
        %v1331 = vpop.permute.xlu0 %1330
        %1332 = vrot.lane.b32.xlu0 %v1197, 15
        %v1333 = vpop.permute.xlu0 %1332
        %1334 = vrot.lane.b32.xlu0 %v1199, 15
        %v1335 = vpop.permute.xlu0 %1334
        %1336 = vrot.lane.b32.xlu0 %v1201, 15
        %v1337 = vpop.permute.xlu0 %1336
        %1338 = vrot.lane.b32.xlu0 %v1203, 15
        %v1339 = vpop.permute.xlu0 %1338
        %v1340 = vsel %vm625, %v1325, %v1333
        %v1341 = vsel %vm625, %v1327, %v1335
        %v1342 = vsel %vm625, %v1329, %v1337
        %v1343 = vsel %vm625, %v1331, %v1339
        %v1344 = vsel %vm625, %v1333, %v1325
        %v1345 = vsel %vm625, %v1335, %v1327
        %v1346 = vsel %vm625, %v1337, %v1329
        %v1347 = vsel %vm625, %v1339, %v1331
        %v1348 = vmul.f32 %v1344, %v637
        %v1349 = vmul.f32 %v1340, %v641
        %v1350 = vmul.f32 %v1345, %v637
        %v1351 = vmul.f32 %v1341, %v641
        %v1352 = vmul.f32 %v1346, %v637
        %v1353 = vmul.f32 %v1342, %v641
        %v1354 = vmul.f32 %v1347, %v637
        %v1355 = vmul.f32 %v1343, %v641
        %v1356 = vpack.c.bf16 %v1350, %v1348
        %v1357 = vpack.c.bf16 %v1351, %v1349
        %v1358 = vpack.c.bf16 %v1354, %v1352
        %v1359 = vpack.c.bf16 %v1355, %v1353
        %v1364 = vunpack.c.l.b16 %v1356
        %v1365 = vunpack.c.l.b16 %v1357
        %v1366 = vunpack.c.h.b16 %v1356
        %v1367 = vunpack.c.h.b16 %v1357
        %v1368 = vunpack.c.l.b16 %v1358
        %v1369 = vunpack.c.l.b16 %v1359
        %v1370 = vunpack.c.h.b16 %v1358
        %v1371 = vunpack.c.h.b16 %v1359
        %v1372 = vpack.c.b16 %v1365, %v1364
        %v1373 = vpack.c.b16 %v1367, %v1366
        %v1374 = vpack.c.b16 %v1369, %v1368
        %v1375 = vpack.c.b16 %v1371, %v1370
        %1380 = vst [vmem:[#allocation2 + $0x88] sm:$0xff] %v1372
        %1381 = vst [vmem:[#allocation2 + $0x98] sm:$0xff] %v1373
        %1382 = vst [vmem:[#allocation2 + $0xa8] sm:$0xff] %v1374
        %1383 = vst [vmem:[#allocation2 + $0xb8] sm:$0xff] %v1375
        %1384 = vrot.lane.b32.xlu0 %v1196, 1
        %v1385 = vpop.permute.xlu0 %1384
        %1386 = vrot.lane.b32.xlu0 %v1198, 1
        %v1387 = vpop.permute.xlu0 %1386
        %1388 = vrot.lane.b32.xlu0 %v1200, 1
        %v1389 = vpop.permute.xlu0 %1388
        %1390 = vrot.lane.b32.xlu0 %v1202, 1
        %v1391 = vpop.permute.xlu0 %1390
        %1392 = vrot.lane.b32.xlu0 %v1197, 1
        %v1393 = vpop.permute.xlu0 %1392
        %1394 = vrot.lane.b32.xlu0 %v1199, 1
        %v1395 = vpop.permute.xlu0 %1394
        %1396 = vrot.lane.b32.xlu0 %v1201, 1
        %v1397 = vpop.permute.xlu0 %1396
        %1398 = vrot.lane.b32.xlu0 %v1203, 1
        %v1399 = vpop.permute.xlu0 %1398
        %v1400 = vsel %vm694, %v1385, %v1393
        %v1401 = vsel %vm694, %v1387, %v1395
        %v1402 = vsel %vm694, %v1389, %v1397
        %v1403 = vsel %vm694, %v1391, %v1399
        %v1404 = vsel %vm694, %v1393, %v1385
        %v1405 = vsel %vm694, %v1395, %v1387
        %v1406 = vsel %vm694, %v1397, %v1389
        %v1407 = vsel %vm694, %v1399, %v1391
        %v1408 = vmul.f32 %v1404, %v706
        %v1409 = vmul.f32 %v1400, %v710
        %v1410 = vmul.f32 %v1405, %v706
        %v1411 = vmul.f32 %v1401, %v710
        %v1412 = vmul.f32 %v1406, %v706
        %v1413 = vmul.f32 %v1402, %v710
        %v1414 = vmul.f32 %v1407, %v706
        %v1415 = vmul.f32 %v1403, %v710
        %v1416 = vpack.c.bf16 %v1410, %v1408
        %v1417 = vpack.c.bf16 %v1411, %v1409
        %v1418 = vpack.c.bf16 %v1414, %v1412
        %v1419 = vpack.c.bf16 %v1415, %v1413
        %v1424 = vunpack.c.l.b16 %v1416
        %v1425 = vunpack.c.l.b16 %v1417
        %v1426 = vunpack.c.h.b16 %v1416
        %v1427 = vunpack.c.h.b16 %v1417
        %v1428 = vunpack.c.l.b16 %v1418
        %v1429 = vunpack.c.l.b16 %v1419
        %v1430 = vunpack.c.h.b16 %v1418
        %v1431 = vunpack.c.h.b16 %v1419
        %v1432 = vpack.c.b16 %v1425, %v1424
        %v1433 = vpack.c.b16 %v1427, %v1426
        %v1434 = vpack.c.b16 %v1429, %v1428
        %v1435 = vpack.c.b16 %v1431, %v1430
        %1440 = vst [vmem:[#allocation2 + $0xc8] sm:$0xff] %v1432
        %1441 = vst [vmem:[#allocation2 + $0xd8] sm:$0xff] %v1433
        %1442 = vst [vmem:[#allocation2 + $0xe8] sm:$0xff] %v1434
        %1443 = vst [vmem:[#allocation2 + $0xf8] sm:$0xff] %v1435
        %v1444 = vpack.c.bf16 %v1198, %v1196
        %v1445 = vpack.c.bf16 %v1199, %v1197
        %v1446 = vpack.c.bf16 %v1202, %v1200
        %v1447 = vpack.c.bf16 %v1203, %v1201
        %v1452 = vunpack.c.l.b16 %v1444
        %v1453 = vunpack.c.l.b16 %v1445
        %v1454 = vunpack.c.h.b16 %v1444
        %v1455 = vunpack.c.h.b16 %v1445
        %v1456 = vunpack.c.l.b16 %v1446
        %v1457 = vunpack.c.l.b16 %v1447
        %v1458 = vunpack.c.h.b16 %v1446
        %v1459 = vunpack.c.h.b16 %v1447
        %v1460 = vpack.c.b16 %v1453, %v1452
        %v1461 = vpack.c.b16 %v1455, %v1454
        %v1462 = vpack.c.b16 %v1457, %v1456
        %v1463 = vpack.c.b16 %v1459, %v1458
        %1468 = vst [vmem:[#allocation2 + $0x108] sm:$0xff] %v1460
        %1469 = vst [vmem:[#allocation2 + $0x118] sm:$0xff] %v1461
        %1470 = vst [vmem:[#allocation2 + $0x128] sm:$0xff] %v1462
        %1471 = vst [vmem:[#allocation2 + $0x138] sm:$0xff] %v1463
        %1472 = vrot.lane.b32.xlu0 %v1196, 127
        %v1473 = vpop.permute.xlu0 %1472
        %1474 = vrot.lane.b32.xlu0 %v1198, 127
        %v1475 = vpop.permute.xlu0 %1474
        %1476 = vrot.lane.b32.xlu0 %v1200, 127
        %v1477 = vpop.permute.xlu0 %1476
        %1478 = vrot.lane.b32.xlu0 %v1202, 127
        %v1479 = vpop.permute.xlu0 %1478
        %1480 = vrot.lane.b32.xlu0 %v1197, 127
        %v1481 = vpop.permute.xlu0 %1480
        %1482 = vrot.lane.b32.xlu0 %v1199, 127
        %v1483 = vpop.permute.xlu0 %1482
        %1484 = vrot.lane.b32.xlu0 %v1201, 127
        %v1485 = vpop.permute.xlu0 %1484
        %1486 = vrot.lane.b32.xlu0 %v1203, 127
        %v1487 = vpop.permute.xlu0 %1486
        %v1488 = vsel %vm791, %v1473, %v1481
        %v1489 = vsel %vm791, %v1475, %v1483
        %v1490 = vsel %vm791, %v1477, %v1485
        %v1491 = vsel %vm791, %v1479, %v1487
        %v1492 = vsel %vm791, %v1481, %v1473
        %v1493 = vsel %vm791, %v1483, %v1475
        %v1494 = vsel %vm791, %v1485, %v1477
        %v1495 = vsel %vm791, %v1487, %v1479
        %v1496 = vmul.f32 %v1488, %v803
        %v1497 = vmul.f32 %v1492, %v807
        %v1498 = vmul.f32 %v1489, %v803
        %v1499 = vmul.f32 %v1493, %v807
        %v1500 = vmul.f32 %v1490, %v803
        %v1501 = vmul.f32 %v1494, %v807
        %v1502 = vmul.f32 %v1491, %v803
        %v1503 = vmul.f32 %v1495, %v807
        %v1504 = vpack.c.bf16 %v1498, %v1496
        %v1505 = vpack.c.bf16 %v1499, %v1497
        %v1506 = vpack.c.bf16 %v1502, %v1500
        %v1507 = vpack.c.bf16 %v1503, %v1501
        %v1512 = vunpack.c.l.b16 %v1504
        %v1513 = vunpack.c.l.b16 %v1505
        %v1514 = vunpack.c.h.b16 %v1504
        %v1515 = vunpack.c.h.b16 %v1505
        %v1516 = vunpack.c.l.b16 %v1506
        %v1517 = vunpack.c.l.b16 %v1507
        %v1518 = vunpack.c.h.b16 %v1506
        %v1519 = vunpack.c.h.b16 %v1507
        %v1520 = vpack.c.b16 %v1513, %v1512
        %v1521 = vpack.c.b16 %v1515, %v1514
        %v1522 = vpack.c.b16 %v1517, %v1516
        %v1523 = vpack.c.b16 %v1519, %v1518
        %1528 = vst [vmem:[#allocation2 + $0x148] sm:$0xff] %v1520
        %1529 = vst [vmem:[#allocation2 + $0x158] sm:$0xff] %v1521
        %1530 = vst [vmem:[#allocation2 + $0x168] sm:$0xff] %v1522
        %1531 = vst [vmem:[#allocation2 + $0x178] sm:$0xff] %v1523
        %1532 = vrot.lane.b32.xlu0 %v1196, 113
        %v1533 = vpop.permute.xlu0 %1532
        %1534 = vrot.lane.b32.xlu0 %v1198, 113
        %v1535 = vpop.permute.xlu0 %1534
        %1536 = vrot.lane.b32.xlu0 %v1200, 113
        %v1537 = vpop.permute.xlu0 %1536
        %1538 = vrot.lane.b32.xlu0 %v1202, 113
        %v1539 = vpop.permute.xlu0 %1538
        %1540 = vrot.lane.b32.xlu0 %v1197, 113
        %v1541 = vpop.permute.xlu0 %1540
        %1542 = vrot.lane.b32.xlu0 %v1199, 113
        %v1543 = vpop.permute.xlu0 %1542
        %1544 = vrot.lane.b32.xlu0 %v1201, 113
        %v1545 = vpop.permute.xlu0 %1544
        %1546 = vrot.lane.b32.xlu0 %v1203, 113
        %v1547 = vpop.permute.xlu0 %1546
        %v1548 = vsel %vm860, %v1533, %v1541
        %v1549 = vsel %vm860, %v1535, %v1543
        %v1550 = vsel %vm860, %v1537, %v1545
        %v1551 = vsel %vm860, %v1539, %v1547
        %v1552 = vsel %vm860, %v1541, %v1533
        %v1553 = vsel %vm860, %v1543, %v1535
        %v1554 = vsel %vm860, %v1545, %v1537
        %v1555 = vsel %vm860, %v1547, %v1539
        %v1556 = vmul.f32 %v1548, %v872
        %v1557 = vmul.f32 %v1552, %v876
        %v1558 = vmul.f32 %v1549, %v872
        %v1559 = vmul.f32 %v1553, %v876
        %v1560 = vmul.f32 %v1550, %v872
        %v1561 = vmul.f32 %v1554, %v876
        %v1562 = vmul.f32 %v1551, %v872
        %v1563 = vmul.f32 %v1555, %v876
        %v1564 = vpack.c.bf16 %v1558, %v1556
        %v1565 = vpack.c.bf16 %v1559, %v1557
        %v1566 = vpack.c.bf16 %v1562, %v1560
        %v1567 = vpack.c.bf16 %v1563, %v1561
        %v1572 = vunpack.c.l.b16 %v1564
        %v1573 = vunpack.c.l.b16 %v1565
        %v1574 = vunpack.c.h.b16 %v1564
        %v1575 = vunpack.c.h.b16 %v1565
        %v1576 = vunpack.c.l.b16 %v1566
        %v1577 = vunpack.c.l.b16 %v1567
        %v1578 = vunpack.c.h.b16 %v1566
        %v1579 = vunpack.c.h.b16 %v1567
        %v1580 = vpack.c.b16 %v1573, %v1572
        %v1581 = vpack.c.b16 %v1575, %v1574
        %v1582 = vpack.c.b16 %v1577, %v1576
        %v1583 = vpack.c.b16 %v1579, %v1578
        %1588 = vst [vmem:[#allocation2 + $0x188] sm:$0xff] %v1580
        %1589 = vst [vmem:[#allocation2 + $0x198] sm:$0xff] %v1581
        %1590 = vst [vmem:[#allocation2 + $0x1a8] sm:$0xff] %v1582
        %1591 = vst [vmem:[#allocation2 + $0x1b8] sm:$0xff] %v1583
        %1592 = vrot.lane.b32.xlu0 %v1196, 112
        %v1593 = vpop.permute.xlu0 %1592
        %1594 = vrot.lane.b32.xlu0 %v1198, 112
        %v1595 = vpop.permute.xlu0 %1594
        %1596 = vrot.lane.b32.xlu0 %v1200, 112
        %v1597 = vpop.permute.xlu0 %1596
        %1598 = vrot.lane.b32.xlu0 %v1202, 112
        %v1599 = vpop.permute.xlu0 %1598
        %1600 = vrot.lane.b32.xlu0 %v1197, 112
        %v1601 = vpop.permute.xlu0 %1600
        %1602 = vrot.lane.b32.xlu0 %v1199, 112
        %v1603 = vpop.permute.xlu0 %1602
        %1604 = vrot.lane.b32.xlu0 %v1201, 112
        %v1605 = vpop.permute.xlu0 %1604
        %1606 = vrot.lane.b32.xlu0 %v1203, 112
        %v1607 = vpop.permute.xlu0 %1606
        %v1608 = vsel %vm929, %v1593, %v1601
        %v1609 = vsel %vm929, %v1595, %v1603
        %v1610 = vsel %vm929, %v1597, %v1605
        %v1611 = vsel %vm929, %v1599, %v1607
        %v1612 = vsel %vm929, %v1601, %v1593
        %v1613 = vsel %vm929, %v1603, %v1595
        %v1614 = vsel %vm929, %v1605, %v1597
        %v1615 = vsel %vm929, %v1607, %v1599
        %v1616 = vmul.f32 %v1608, %v941
        %v1617 = vmul.f32 %v1612, %v945
        %v1618 = vmul.f32 %v1609, %v941
        %v1619 = vmul.f32 %v1613, %v945
        %v1620 = vmul.f32 %v1610, %v941
        %v1621 = vmul.f32 %v1614, %v945
        %v1622 = vmul.f32 %v1611, %v941
        %v1623 = vmul.f32 %v1615, %v945
        %v1624 = vpack.c.bf16 %v1618, %v1616
        %v1625 = vpack.c.bf16 %v1619, %v1617
        %v1626 = vpack.c.bf16 %v1622, %v1620
        %v1627 = vpack.c.bf16 %v1623, %v1621
        %v1632 = vunpack.c.l.b16 %v1624
        %v1633 = vunpack.c.l.b16 %v1625
        %v1634 = vunpack.c.h.b16 %v1624
        %v1635 = vunpack.c.h.b16 %v1625
        %v1636 = vunpack.c.l.b16 %v1626
        %v1637 = vunpack.c.l.b16 %v1627
        %v1638 = vunpack.c.h.b16 %v1626
        %v1639 = vunpack.c.h.b16 %v1627
        %v1640 = vpack.c.b16 %v1633, %v1632
        %v1641 = vpack.c.b16 %v1635, %v1634
        %v1642 = vpack.c.b16 %v1637, %v1636
        %v1643 = vpack.c.b16 %v1639, %v1638
        %1648 = vst [vmem:[#allocation2 + $0x1c8] sm:$0xff] %v1640
        %1649 = vst [vmem:[#allocation2 + $0x1d8] sm:$0xff] %v1641
        %1650 = vst [vmem:[#allocation2 + $0x1e8] sm:$0xff] %v1642
        %1651 = vst [vmem:[#allocation2 + $0x1f8] sm:$0xff] %v1643
        %1652 = vrot.lane.b32.xlu0 %v1196, 111
        %v1653 = vpop.permute.xlu0 %1652
        %1654 = vrot.lane.b32.xlu0 %v1198, 111
        %v1655 = vpop.permute.xlu0 %1654
        %1656 = vrot.lane.b32.xlu0 %v1200, 111
        %v1657 = vpop.permute.xlu0 %1656
        %1658 = vrot.lane.b32.xlu0 %v1202, 111
        %v1659 = vpop.permute.xlu0 %1658
        %1660 = vrot.lane.b32.xlu0 %v1197, 111
        %v1661 = vpop.permute.xlu0 %1660
        %1662 = vrot.lane.b32.xlu0 %v1199, 111
        %v1663 = vpop.permute.xlu0 %1662
        %1664 = vrot.lane.b32.xlu0 %v1201, 111
        %v1665 = vpop.permute.xlu0 %1664
        %1666 = vrot.lane.b32.xlu0 %v1203, 111
        %v1667 = vpop.permute.xlu0 %1666
        %v1668 = vsel %vm998, %v1653, %v1661
        %v1669 = vsel %vm998, %v1655, %v1663
        %v1670 = vsel %vm998, %v1657, %v1665
        %v1671 = vsel %vm998, %v1659, %v1667
        %v1672 = vsel %vm998, %v1661, %v1653
        %v1673 = vsel %vm998, %v1663, %v1655
        %v1674 = vsel %vm998, %v1665, %v1657
        %v1675 = vsel %vm998, %v1667, %v1659
        %v1676 = vmul.f32 %v1668, %v1010
        %v1677 = vmul.f32 %v1672, %v1014
        %v1678 = vmul.f32 %v1669, %v1010
        %v1679 = vmul.f32 %v1673, %v1014
        %v1680 = vmul.f32 %v1670, %v1010
        %v1681 = vmul.f32 %v1674, %v1014
        %v1682 = vmul.f32 %v1671, %v1010
        %v1683 = vmul.f32 %v1675, %v1014
        %v1684 = vpack.c.bf16 %v1678, %v1676
        %v1685 = vpack.c.bf16 %v1679, %v1677
        %v1686 = vpack.c.bf16 %v1682, %v1680
        %v1687 = vpack.c.bf16 %v1683, %v1681
        %v1692 = vunpack.c.l.b16 %v1684
        %v1693 = vunpack.c.l.b16 %v1685
        %v1694 = vunpack.c.h.b16 %v1684
        %v1695 = vunpack.c.h.b16 %v1685
        %v1696 = vunpack.c.l.b16 %v1686
        %v1697 = vunpack.c.l.b16 %v1687
        %v1698 = vunpack.c.h.b16 %v1686
        %v1699 = vunpack.c.h.b16 %v1687
        %v1700 = vpack.c.b16 %v1693, %v1692
        %v1701 = vpack.c.b16 %v1695, %v1694
        %v1702 = vpack.c.b16 %v1697, %v1696
        %v1703 = vpack.c.b16 %v1699, %v1698
        %1708 = vst [vmem:[#allocation2 + $0x208] sm:$0xff] %v1700
        %1709 = vst [vmem:[#allocation2 + $0x218] sm:$0xff] %v1701
        %1710 = vst [vmem:[#allocation2 + $0x228] sm:$0xff] %v1702
        %1711 = vst [vmem:[#allocation2 + $0x238] sm:$0xff] %v1703
        %v1712 = vld [vmem:[%s4] sm:$0xff]
        %v1713 = vld [vmem:[%s4 + $0x8] sm:$0xf]
        %v1714 = vld [vmem:[%s4 + $0xc] sm:$0xff]
        %v1715 = vld [vmem:[%s4 + $0x14] sm:$0xf]
        %v1716 = vld [vmem:[%s4 + $0x18] sm:$0xff]
        %v1717 = vld [vmem:[%s4 + $0x20] sm:$0xf]
        %v1718 = vld [vmem:[%s4 + $0x24] sm:$0xff]
        %v1719 = vld [vmem:[%s4 + $0x2c] sm:$0xf]
        %v1720 = vld [vmem:[#allocation2] sm:$0xff]
        %v1721 = vld [vmem:[#allocation2 + $0x8] sm:$0xff]
        %v1722 = vld [vmem:[#allocation2 + $0x10] sm:$0xff]
        %v1723 = vld [vmem:[#allocation2 + $0x18] sm:$0xff]
        %v1724 = vld [vmem:[#allocation2 + $0x20] sm:$0xff]
        %v1725 = vld [vmem:[#allocation2 + $0x28] sm:$0xff]
        %v1726 = vld [vmem:[#allocation2 + $0x30] sm:$0xff]
        %v1727 = vld [vmem:[#allocation2 + $0x38] sm:$0xff]
        %v1728 = vld [vmem:[#allocation2 + $0x40] sm:$0xff]
        %v1729 = vld [vmem:[#allocation2 + $0x48] sm:$0xff]
        %v1730 = vld [vmem:[#allocation2 + $0x50] sm:$0xff]
        %v1731 = vld [vmem:[#allocation2 + $0x58] sm:$0xff]
        %v1732 = vld [vmem:[#allocation2 + $0x60] sm:$0xff]
        %v1733 = vld [vmem:[#allocation2 + $0x68] sm:$0xff]
        %v1734 = vld [vmem:[#allocation2 + $0x70] sm:$0xff]
        %v1735 = vld [vmem:[#allocation2 + $0x78] sm:$0xff]
        %v1736 = vld [vmem:[#allocation2 + $0x80] sm:$0xff]
        %v1737 = vld [vmem:[#allocation2 + $0x88] sm:$0xff]
        %v1738 = vld [vmem:[#allocation2 + $0x90] sm:$0xff]
        %v1739 = vld [vmem:[#allocation2 + $0x98] sm:$0xff]
        %v1740 = vld [vmem:[#allocation2 + $0xa0] sm:$0xff]
        %v1741 = vld [vmem:[#allocation2 + $0xa8] sm:$0xff]
        %v1742 = vld [vmem:[#allocation2 + $0xb0] sm:$0xff]
        %v1743 = vld [vmem:[#allocation2 + $0xb8] sm:$0xff]
        %v1744 = vld [vmem:[#allocation2 + $0xc0] sm:$0xff]
        %v1745 = vld [vmem:[#allocation2 + $0xc8] sm:$0xff]
        %v1746 = vld [vmem:[#allocation2 + $0xd0] sm:$0xff]
        %v1747 = vld [vmem:[#allocation2 + $0xd8] sm:$0xff]
        %v1748 = vld [vmem:[#allocation2 + $0xe0] sm:$0xff]
        %v1749 = vld [vmem:[#allocation2 + $0xe8] sm:$0xff]
        %v1750 = vld [vmem:[#allocation2 + $0xf0] sm:$0xff]
        %v1751 = vld [vmem:[#allocation2 + $0xf8] sm:$0xff]
        %v1752 = vld [vmem:[#allocation2 + $0x100] sm:$0xff]
        %v1753 = vld [vmem:[#allocation2 + $0x108] sm:$0xff]
        %v1754 = vld [vmem:[#allocation2 + $0x110] sm:$0xff]
        %v1755 = vld [vmem:[#allocation2 + $0x118] sm:$0xff]
        %v1756 = vld [vmem:[#allocation2 + $0x120] sm:$0xff]
        %v1757 = vld [vmem:[#allocation2 + $0x128] sm:$0xff]
        %v1758 = vld [vmem:[#allocation2 + $0x130] sm:$0xff]
        %v1759 = vld [vmem:[#allocation2 + $0x138] sm:$0xff]
        %v1760 = vld [vmem:[#allocation2 + $0x140] sm:$0xff]
        %v1761 = vld [vmem:[#allocation2 + $0x148] sm:$0xff]
        %v1762 = vld [vmem:[#allocation2 + $0x150] sm:$0xff]
        %v1763 = vld [vmem:[#allocation2 + $0x158] sm:$0xff]
        %v1764 = vld [vmem:[#allocation2 + $0x160] sm:$0xff]
        %v1765 = vld [vmem:[#allocation2 + $0x168] sm:$0xff]
        %v1766 = vld [vmem:[#allocation2 + $0x170] sm:$0xff]
        %v1767 = vld [vmem:[#allocation2 + $0x178] sm:$0xff]
        %v1768 = vld [vmem:[#allocation2 + $0x180] sm:$0xff]
        %v1769 = vld [vmem:[#allocation2 + $0x188] sm:$0xff]
        %v1770 = vld [vmem:[#allocation2 + $0x190] sm:$0xff]
        %v1771 = vld [vmem:[#allocation2 + $0x198] sm:$0xff]
        %v1772 = vld [vmem:[#allocation2 + $0x1a0] sm:$0xff]
        %v1773 = vld [vmem:[#allocation2 + $0x1a8] sm:$0xff]
        %v1774 = vld [vmem:[#allocation2 + $0x1b0] sm:$0xff]
        %v1775 = vld [vmem:[#allocation2 + $0x1b8] sm:$0xff]
        %v1776 = vld [vmem:[#allocation2 + $0x1c0] sm:$0xff]
        %v1777 = vld [vmem:[#allocation2 + $0x1c8] sm:$0xff]
        %v1778 = vld [vmem:[#allocation2 + $0x1d0] sm:$0xff]
        %v1779 = vld [vmem:[#allocation2 + $0x1d8] sm:$0xff]
        %v1780 = vld [vmem:[#allocation2 + $0x1e0] sm:$0xff]
        %v1781 = vld [vmem:[#allocation2 + $0x1e8] sm:$0xff]
        %v1782 = vld [vmem:[#allocation2 + $0x1f0] sm:$0xff]
        %v1783 = vld [vmem:[#allocation2 + $0x1f8] sm:$0xff]
        %v1784 = vld [vmem:[#allocation2 + $0x200] sm:$0xff]
        %v1785 = vld [vmem:[#allocation2 + $0x208] sm:$0xff]
        %v1786 = vld [vmem:[#allocation2 + $0x210] sm:$0xff]
        %v1787 = vld [vmem:[#allocation2 + $0x218] sm:$0xff]
        %v1788 = vld [vmem:[#allocation2 + $0x220] sm:$0xff]
        %v1789 = vld [vmem:[#allocation2 + $0x228] sm:$0xff]
        %v1790 = vld [vmem:[#allocation2 + $0x230] sm:$0xff]
        %v1791 = vld [vmem:[#allocation2 + $0x238] sm:$0xff]
        %1792 = vset.pattern.permute.xlu0 2
        %1793 = vperm.xlu0 %1792, %v272
        %v1794 = vpop.permute.xlu0 %1793
        %1796 = vset.pattern.permute.xlu0 2
        %1797 = vperm.xlu0 %1796, %v273
        %v1798 = vpop.permute.xlu0 %1797
        %1800 = vset.pattern.permute.xlu0 2
        %1801 = vperm.xlu0 %1800, %v274
        %v1802 = vpop.permute.xlu0 %1801
        %1804 = vset.pattern.permute.xlu0 2
        %1805 = vperm.xlu0 %1804, %v275
        %v1806 = vpop.permute.xlu0 %1805
        %v1816 = vunpack.c.l.b16 %v1712
        %v1817 = vunpack.c.h.b16 %v1712
        %v1818 = vunpack.c.l.b16 %v1713
        %v1819 = vunpack.c.l.b16 %v1714
        %v1820 = vunpack.c.h.b16 %v1714
        %v1821 = vunpack.c.l.b16 %v1715
        %v1822 = vunpack.c.l.b16 %v1716
        %v1823 = vunpack.c.h.b16 %v1716
        %v1824 = vunpack.c.l.b16 %v1717
        %v1825 = vunpack.c.l.b16 %v1718
        %v1826 = vunpack.c.h.b16 %v1718
        %v1827 = vunpack.c.l.b16 %v1719
        %v1828 = vpack.c.b16 %v1819, %v1816
        %v1829 = vpack.c.b16 %v1820, %v1817
        %v1830 = vpack.c.b16 %v1821, %v1818
        %v1831 = vpack.c.b16 %v1825, %v1822
        %v1832 = vpack.c.b16 %v1826, %v1823
        %v1833 = vpack.c.b16 %v1827, %v1824
        %v1910 = vunpack.c.l.b16 %v1720
        %v1911 = vunpack.c.h.b16 %v1720
        %v1912 = vunpack.c.l.b16 %v1721
        %v1913 = vunpack.c.h.b16 %v1721
        %v1914 = vunpack.c.l.b16 %v1722
        %v1915 = vunpack.c.h.b16 %v1722
        %v1916 = vunpack.c.l.b16 %v1723
        %v1917 = vunpack.c.h.b16 %v1723
        %v1918 = vunpack.c.l.b16 %v1724
        %v1919 = vunpack.c.h.b16 %v1724
        %v1920 = vunpack.c.l.b16 %v1725
        %v1921 = vunpack.c.h.b16 %v1725
        %v1922 = vunpack.c.l.b16 %v1726
        %v1923 = vunpack.c.h.b16 %v1726
        %v1924 = vunpack.c.l.b16 %v1727
        %v1925 = vunpack.c.h.b16 %v1727
        %v1926 = vunpack.c.l.b16 %v1728
        %v1927 = vunpack.c.h.b16 %v1728
        %v1928 = vunpack.c.l.b16 %v1729
        %v1929 = vunpack.c.h.b16 %v1729
        %v1930 = vunpack.c.l.b16 %v1730
        %v1931 = vunpack.c.h.b16 %v1730
        %v1932 = vunpack.c.l.b16 %v1731
        %v1933 = vunpack.c.h.b16 %v1731
        %v1934 = vunpack.c.l.b16 %v1732
        %v1935 = vunpack.c.h.b16 %v1732
        %v1936 = vunpack.c.l.b16 %v1733
        %v1937 = vunpack.c.h.b16 %v1733
        %v1938 = vunpack.c.l.b16 %v1734
        %v1939 = vunpack.c.h.b16 %v1734
        %v1940 = vunpack.c.l.b16 %v1735
        %v1941 = vunpack.c.h.b16 %v1735
        %v1942 = vunpack.c.l.b16 %v1736
        %v1943 = vunpack.c.h.b16 %v1736
        %v1944 = vunpack.c.l.b16 %v1737
        %v1945 = vunpack.c.h.b16 %v1737
        %v1946 = vunpack.c.l.b16 %v1738
        %v1947 = vunpack.c.h.b16 %v1738
        %v1948 = vunpack.c.l.b16 %v1739
        %v1949 = vunpack.c.h.b16 %v1739
        %v1950 = vunpack.c.l.b16 %v1740
        %v1951 = vunpack.c.h.b16 %v1740
        %v1952 = vunpack.c.l.b16 %v1741
        %v1953 = vunpack.c.h.b16 %v1741
        %v1954 = vunpack.c.l.b16 %v1742
        %v1955 = vunpack.c.h.b16 %v1742
        %v1956 = vunpack.c.l.b16 %v1743
        %v1957 = vunpack.c.h.b16 %v1743
        %v1958 = vunpack.c.l.b16 %v1744
        %v1959 = vunpack.c.h.b16 %v1744
        %v1960 = vunpack.c.l.b16 %v1745
        %v1961 = vunpack.c.h.b16 %v1745
        %v1962 = vunpack.c.l.b16 %v1746
        %v1963 = vunpack.c.h.b16 %v1746
        %v1964 = vunpack.c.l.b16 %v1747
        %v1965 = vunpack.c.h.b16 %v1747
        %v1966 = vunpack.c.l.b16 %v1748
        %v1967 = vunpack.c.h.b16 %v1748
        %v1968 = vunpack.c.l.b16 %v1749
        %v1969 = vunpack.c.h.b16 %v1749
        %v1970 = vunpack.c.l.b16 %v1750
        %v1971 = vunpack.c.h.b16 %v1750
        %v1972 = vunpack.c.l.b16 %v1751
        %v1973 = vunpack.c.h.b16 %v1751
        %v1974 = vunpack.c.l.b16 %v1752
        %v1975 = vunpack.c.h.b16 %v1752
        %v1976 = vunpack.c.l.b16 %v1753
        %v1977 = vunpack.c.h.b16 %v1753
        %v1978 = vunpack.c.l.b16 %v1754
        %v1979 = vunpack.c.h.b16 %v1754
        %v1980 = vunpack.c.l.b16 %v1755
        %v1981 = vunpack.c.h.b16 %v1755
        %v1982 = vunpack.c.l.b16 %v1756
        %v1983 = vunpack.c.h.b16 %v1756
        %v1984 = vunpack.c.l.b16 %v1757
        %v1985 = vunpack.c.h.b16 %v1757
        %v1986 = vunpack.c.l.b16 %v1758
        %v1987 = vunpack.c.h.b16 %v1758
        %v1988 = vunpack.c.l.b16 %v1759
        %v1989 = vunpack.c.h.b16 %v1759
        %v1990 = vunpack.c.l.b16 %v1760
        %v1991 = vunpack.c.h.b16 %v1760
        %v1992 = vunpack.c.l.b16 %v1761
        %v1993 = vunpack.c.h.b16 %v1761
        %v1994 = vunpack.c.l.b16 %v1762
        %v1995 = vunpack.c.h.b16 %v1762
        %v1996 = vunpack.c.l.b16 %v1763
        %v1997 = vunpack.c.h.b16 %v1763
        %v1998 = vunpack.c.l.b16 %v1764
        %v1999 = vunpack.c.h.b16 %v1764
        %v2000 = vunpack.c.l.b16 %v1765
        %v2001 = vunpack.c.h.b16 %v1765
        %v2002 = vunpack.c.l.b16 %v1766
        %v2003 = vunpack.c.h.b16 %v1766
        %v2004 = vunpack.c.l.b16 %v1767
        %v2005 = vunpack.c.h.b16 %v1767
        %v2006 = vunpack.c.l.b16 %v1768
        %v2007 = vunpack.c.h.b16 %v1768
        %v2008 = vunpack.c.l.b16 %v1769
        %v2009 = vunpack.c.h.b16 %v1769
        %v2010 = vunpack.c.l.b16 %v1770
        %v2011 = vunpack.c.h.b16 %v1770
        %v2012 = vunpack.c.l.b16 %v1771
        %v2013 = vunpack.c.h.b16 %v1771
        %v2014 = vunpack.c.l.b16 %v1772
        %v2015 = vunpack.c.h.b16 %v1772
        %v2016 = vunpack.c.l.b16 %v1773
        %v2017 = vunpack.c.h.b16 %v1773
        %v2018 = vunpack.c.l.b16 %v1774
        %v2019 = vunpack.c.h.b16 %v1774
        %v2020 = vunpack.c.l.b16 %v1775
        %v2021 = vunpack.c.h.b16 %v1775
        %v2022 = vunpack.c.l.b16 %v1776
        %v2023 = vunpack.c.h.b16 %v1776
        %v2024 = vunpack.c.l.b16 %v1777
        %v2025 = vunpack.c.h.b16 %v1777
        %v2026 = vunpack.c.l.b16 %v1778
        %v2027 = vunpack.c.h.b16 %v1778
        %v2028 = vunpack.c.l.b16 %v1779
        %v2029 = vunpack.c.h.b16 %v1779
        %v2030 = vunpack.c.l.b16 %v1780
        %v2031 = vunpack.c.h.b16 %v1780
        %v2032 = vunpack.c.l.b16 %v1781
        %v2033 = vunpack.c.h.b16 %v1781
        %v2034 = vunpack.c.l.b16 %v1782
        %v2035 = vunpack.c.h.b16 %v1782
        %v2036 = vunpack.c.l.b16 %v1783
        %v2037 = vunpack.c.h.b16 %v1783
        %v2038 = vunpack.c.l.b16 %v1784
        %v2039 = vunpack.c.h.b16 %v1784
        %v2040 = vunpack.c.l.b16 %v1785
        %v2041 = vunpack.c.h.b16 %v1785
        %v2042 = vunpack.c.l.b16 %v1786
        %v2043 = vunpack.c.h.b16 %v1786
        %v2044 = vunpack.c.l.b16 %v1787
        %v2045 = vunpack.c.h.b16 %v1787
        %v2046 = vunpack.c.l.b16 %v1788
        %v2047 = vunpack.c.h.b16 %v1788
        %v2048 = vunpack.c.l.b16 %v1789
        %v2049 = vunpack.c.h.b16 %v1789
        %v2050 = vunpack.c.l.b16 %v1790
        %v2051 = vunpack.c.h.b16 %v1790
        %v2052 = vunpack.c.l.b16 %v1791
        %v2053 = vunpack.c.h.b16 %v1791
        %v2054 = vpack.c.b16 %v1914, %v1910
        %v2055 = vpack.c.b16 %v1915, %v1911
        %v2056 = vpack.c.b16 %v1916, %v1912
        %v2057 = vpack.c.b16 %v1917, %v1913
        %v2058 = vpack.c.b16 %v1922, %v1918
        %v2059 = vpack.c.b16 %v1923, %v1919
        %v2060 = vpack.c.b16 %v1924, %v1920
        %v2061 = vpack.c.b16 %v1925, %v1921
        %v2062 = vpack.c.b16 %v1930, %v1926
        %v2063 = vpack.c.b16 %v1931, %v1927
        %v2064 = vpack.c.b16 %v1932, %v1928
        %v2065 = vpack.c.b16 %v1933, %v1929
        %v2066 = vpack.c.b16 %v1938, %v1934
        %v2067 = vpack.c.b16 %v1939, %v1935
        %v2068 = vpack.c.b16 %v1940, %v1936
        %v2069 = vpack.c.b16 %v1941, %v1937
        %v2070 = vpack.c.b16 %v1946, %v1942
        %v2071 = vpack.c.b16 %v1947, %v1943
        %v2072 = vpack.c.b16 %v1948, %v1944
        %v2073 = vpack.c.b16 %v1949, %v1945
        %v2074 = vpack.c.b16 %v1954, %v1950
        %v2075 = vpack.c.b16 %v1955, %v1951
        %v2076 = vpack.c.b16 %v1956, %v1952
        %v2077 = vpack.c.b16 %v1957, %v1953
        %v2078 = vpack.c.b16 %v1962, %v1958
        %v2079 = vpack.c.b16 %v1963, %v1959
        %v2080 = vpack.c.b16 %v1964, %v1960
        %v2081 = vpack.c.b16 %v1965, %v1961
        %v2082 = vpack.c.b16 %v1970, %v1966
        %v2083 = vpack.c.b16 %v1971, %v1967
        %v2084 = vpack.c.b16 %v1972, %v1968
        %v2085 = vpack.c.b16 %v1973, %v1969
        %v2086 = vpack.c.b16 %v1978, %v1974
        %v2087 = vpack.c.b16 %v1979, %v1975
        %v2088 = vpack.c.b16 %v1980, %v1976
        %v2089 = vpack.c.b16 %v1981, %v1977
        %v2090 = vpack.c.b16 %v1986, %v1982
        %v2091 = vpack.c.b16 %v1987, %v1983
        %v2092 = vpack.c.b16 %v1988, %v1984
        %v2093 = vpack.c.b16 %v1989, %v1985
        %v2094 = vpack.c.b16 %v1994, %v1990
        %v2095 = vpack.c.b16 %v1995, %v1991
        %v2096 = vpack.c.b16 %v1996, %v1992
        %v2097 = vpack.c.b16 %v1997, %v1993
        %v2098 = vpack.c.b16 %v2002, %v1998
        %v2099 = vpack.c.b16 %v2003, %v1999
        %v2100 = vpack.c.b16 %v2004, %v2000
        %v2101 = vpack.c.b16 %v2005, %v2001
        %v2102 = vpack.c.b16 %v2010, %v2006
        %v2103 = vpack.c.b16 %v2011, %v2007
        %v2104 = vpack.c.b16 %v2012, %v2008
        %v2105 = vpack.c.b16 %v2013, %v2009
        %v2106 = vpack.c.b16 %v2018, %v2014
        %v2107 = vpack.c.b16 %v2019, %v2015
        %v2108 = vpack.c.b16 %v2020, %v2016
        %v2109 = vpack.c.b16 %v2021, %v2017
        %v2110 = vpack.c.b16 %v2026, %v2022
        %v2111 = vpack.c.b16 %v2027, %v2023
        %v2112 = vpack.c.b16 %v2028, %v2024
        %v2113 = vpack.c.b16 %v2029, %v2025
        %v2114 = vpack.c.b16 %v2034, %v2030
        %v2115 = vpack.c.b16 %v2035, %v2031
        %v2116 = vpack.c.b16 %v2036, %v2032
        %v2117 = vpack.c.b16 %v2037, %v2033
        %v2118 = vpack.c.b16 %v2042, %v2038
        %v2119 = vpack.c.b16 %v2043, %v2039
        %v2120 = vpack.c.b16 %v2044, %v2040
        %v2121 = vpack.c.b16 %v2045, %v2041
        %v2122 = vpack.c.b16 %v2050, %v2046
        %v2123 = vpack.c.b16 %v2051, %v2047
        %v2124 = vpack.c.b16 %v2052, %v2048
        %v2125 = vpack.c.b16 %v2053, %v2049
        %vm2198 = vcmask 261120
        %v2200 = vsel %vm2198, %v1830, 0
        %v2203 = vsel %vm2198, %v1833, 0
        %2205 = vmatprep.subr.bf16.mxu0 %v2083
        %2206 = vmatpush1.bf16.msra.mxu0 %v2082
        %2207 = vmatprep.subr.bf16.mxu0 %v2079
        %2208 = vmatpush1.bf16.msra.mxu0 %v2078
        %2209 = vmatprep.subr.bf16.mxu0 %v2075
        %2210 = vmatpush1.bf16.msra.mxu0 %v2074
        %2211 = vmatprep.subr.bf16.mxu0 %v2071
        %2212 = vmatpush1.bf16.msra.mxu0 %v2070
        %2213 = vmatprep.subr.bf16.mxu0 %v2067
        %2214 = vmatpush1.bf16.msra.mxu0 %v2066
        %2215 = vmatprep.subr.bf16.mxu0 %v2063
        %2216 = vmatpush1.bf16.msra.mxu0 %v2062
        %2217 = vmatprep.subr.bf16.mxu0 %v2059
        %2218 = vmatpush1.bf16.msra.mxu0 %v2058
        %2219 = vmatprep.subr.bf16.mxu0 %v2055
        %2220 = vmatpush1.bf16.msra.mxu0 %v2054
        %2221 = vmatprep.subr.bf16.mxu0 %v2115
        %2222 = vmatpush2.bf16.msra.mxu0 %v2114
        %2223 = vmatprep.subr.bf16.mxu0 %v2111
        %2224 = vmatpush2.bf16.msra.mxu0 %v2110
        %2225 = vmatprep.subr.bf16.mxu0 %v2107
        %2226 = vmatpush2.bf16.msra.mxu0 %v2106
        %2227 = vmatprep.subr.bf16.mxu0 %v2103
        %2228 = vmatpush2.bf16.msra.mxu0 %v2102
        %2229 = vmatprep.subr.bf16.mxu0 %v2099
        %2230 = vmatpush2.bf16.msra.mxu0 %v2098
        %2231 = vmatprep.subr.bf16.mxu0 %v2095
        %2232 = vmatpush2.bf16.msra.mxu0 %v2094
        %2233 = vmatprep.subr.bf16.mxu0 %v2091
        %2234 = vmatpush2.bf16.msra.mxu0 %v2090
        %2235 = vmatprep.subr.bf16.mxu0 %v2087
        %2236 = vmatpush2.bf16.msra.mxu0 %v2086
        %2237 = vmatprep.mubr.bf16.mxu0 %v1829
        %2238 = vmatmul.mubr.bf16.gmra.mxu0 %v1828
        %v2239 = vpop.f32.mrf.mxu0
        %v2240 = vadd.f32 %v1794, %v2239
        %v2241 = vpop.f32.mrf.mxu0
        %v2242 = vadd.f32 %v1794, %v2241
        %v2243 = vpop.f32.mrf.mxu0
        %v2244 = vadd.f32 %v1798, %v2243
        %v2245 = vpop.f32.mrf.mxu0
        %v2246 = vadd.f32 %v1798, %v2245
        %2247 = vmatprep.mubr.bf16.mxu0 %v1832
        %2248 = vmatmul.mubr.bf16.gmra.mxu0 %v1831
        %v2249 = vpop.f32.mrf.mxu0
        %v2250 = vadd.f32 %v1802, %v2249
        %v2251 = vpop.f32.mrf.mxu0
        %v2252 = vadd.f32 %v1802, %v2251
        %v2253 = vpop.f32.mrf.mxu0
        %v2254 = vadd.f32 %v1806, %v2253
        %v2255 = vpop.f32.mrf.mxu0
        %v2256 = vadd.f32 %v1806, %v2255
        %2257 = vdwg.mxu0
        %2258 = vmatprep.subr.bf16.mxu0 0
        %2259 = vmatpush1.bf16.msra.mxu0 0
        %2260 = vmatprep.subr.bf16.mxu0 0
        %2261 = vmatpush1.bf16.msra.mxu0 0
        %2262 = vmatprep.subr.bf16.mxu0 0
        %2263 = vmatpush1.bf16.msra.mxu0 0
        %2264 = vmatprep.subr.bf16.mxu0 0
        %2265 = vmatpush1.bf16.msra.mxu0 0
        %2266 = vmatprep.subr.bf16.mxu0 0
        %2267 = vmatpush1.bf16.msra.mxu0 0
        %2268 = vmatprep.subr.bf16.mxu0 0
        %2269 = vmatpush1.bf16.msra.mxu0 0
        %2270 = vmatprep.subr.bf16.mxu0 %v2123
        %2271 = vmatpush1.bf16.msra.mxu0 %v2122
        %2272 = vmatprep.subr.bf16.mxu0 %v2119
        %2273 = vmatpush1.bf16.msra.mxu0 %v2118
        %2274 = vmatprep.subr.bf16.mxu0 0
        %2275 = vmatpush2.bf16.msra.mxu0 0
        %2276 = vmatprep.subr.bf16.mxu0 0
        %2277 = vmatpush2.bf16.msra.mxu0 0
        %2278 = vmatprep.subr.bf16.mxu0 0
        %2279 = vmatpush2.bf16.msra.mxu0 0
        %2280 = vmatprep.subr.bf16.mxu0 0
        %2281 = vmatpush2.bf16.msra.mxu0 0
        %2282 = vmatprep.subr.bf16.mxu0 0
        %2283 = vmatpush2.bf16.msra.mxu0 0
        %2284 = vmatprep.subr.bf16.mxu0 0
        %2285 = vmatpush2.bf16.msra.mxu0 0
        %2286 = vmatprep.subr.bf16.mxu0 0
        %2287 = vmatpush2.bf16.msra.mxu0 0
        %2288 = vmatprep.subr.bf16.mxu0 0
        %2289 = vmatpush2.bf16.msra.mxu0 0
        %2290 = vmatprep.mubr.bf16.mxu0 0
        %2291 = vmatmul.mubr.bf16.gmra.mxu0 %v2200
        %v2292 = vpop.f32.mrf.mxu0
        %v2293 = vadd.f32 %v2240, %v2292
        %v2294 = vpop.f32.mrf.mxu0
        %v2295 = vadd.f32 %v2242, %v2294
        %v2296 = vpop.f32.mrf.mxu0
        %v2297 = vadd.f32 %v2244, %v2296
        %v2298 = vpop.f32.mrf.mxu0
        %v2299 = vadd.f32 %v2246, %v2298
        %2300 = vmatprep.mubr.bf16.mxu0 0
        %2301 = vmatmul.mubr.bf16.gmra.mxu0 %v2203
        %v2302 = vpop.f32.mrf.mxu0
        %v2303 = vadd.f32 %v2250, %v2302
        %v2304 = vpop.f32.mrf.mxu0
        %v2305 = vadd.f32 %v2252, %v2304
        %v2306 = vpop.f32.mrf.mxu0
        %v2307 = vadd.f32 %v2254, %v2306
        %v2308 = vpop.f32.mrf.mxu0
        %v2309 = vadd.f32 %v2256, %v2308
        %2310 = vdwg.mxu0
        %2311 = vmatprep.subr.bf16.mxu0 %v2085
        %2312 = vmatpush1.bf16.msra.mxu0 %v2084
        %2313 = vmatprep.subr.bf16.mxu0 %v2081
        %2314 = vmatpush1.bf16.msra.mxu0 %v2080
        %2315 = vmatprep.subr.bf16.mxu0 %v2077
        %2316 = vmatpush1.bf16.msra.mxu0 %v2076
        %2317 = vmatprep.subr.bf16.mxu0 %v2073
        %2318 = vmatpush1.bf16.msra.mxu0 %v2072
        %2319 = vmatprep.subr.bf16.mxu0 %v2069
        %2320 = vmatpush1.bf16.msra.mxu0 %v2068
        %2321 = vmatprep.subr.bf16.mxu0 %v2065
        %2322 = vmatpush1.bf16.msra.mxu0 %v2064
        %2323 = vmatprep.subr.bf16.mxu0 %v2061
        %2324 = vmatpush1.bf16.msra.mxu0 %v2060
        %2325 = vmatprep.subr.bf16.mxu0 %v2057
        %2326 = vmatpush1.bf16.msra.mxu0 %v2056
        %2327 = vmatprep.subr.bf16.mxu0 %v2117
        %2328 = vmatpush2.bf16.msra.mxu0 %v2116
        %2329 = vmatprep.subr.bf16.mxu0 %v2113
        %2330 = vmatpush2.bf16.msra.mxu0 %v2112
        %2331 = vmatprep.subr.bf16.mxu0 %v2109
        %2332 = vmatpush2.bf16.msra.mxu0 %v2108
        %2333 = vmatprep.subr.bf16.mxu0 %v2105
        %2334 = vmatpush2.bf16.msra.mxu0 %v2104
        %2335 = vmatprep.subr.bf16.mxu0 %v2101
        %2336 = vmatpush2.bf16.msra.mxu0 %v2100
        %2337 = vmatprep.subr.bf16.mxu0 %v2097
        %2338 = vmatpush2.bf16.msra.mxu0 %v2096
        %2339 = vmatprep.subr.bf16.mxu0 %v2093
        %2340 = vmatpush2.bf16.msra.mxu0 %v2092
        %2341 = vmatprep.subr.bf16.mxu0 %v2089
        %2342 = vmatpush2.bf16.msra.mxu0 %v2088
        %2343 = vmatprep.mubr.bf16.mxu0 %v1829
        %2344 = vmatmul.mubr.bf16.gmra.mxu0 %v1828
        %v2345 = vpop.f32.mrf.mxu0
        %v2346 = vadd.f32 %v1794, %v2345
        %v2347 = vpop.f32.mrf.mxu0
        %v2348 = vadd.f32 %v1794, %v2347
        %v2349 = vpop.f32.mrf.mxu0
        %v2350 = vadd.f32 %v1798, %v2349
        %v2351 = vpop.f32.mrf.mxu0
        %v2352 = vadd.f32 %v1798, %v2351
        %2353 = vmatprep.mubr.bf16.mxu0 %v1832
        %2354 = vmatmul.mubr.bf16.gmra.mxu0 %v1831
        %v2355 = vpop.f32.mrf.mxu0
        %v2356 = vadd.f32 %v1802, %v2355
        %v2357 = vpop.f32.mrf.mxu0
        %v2358 = vadd.f32 %v1802, %v2357
        %v2359 = vpop.f32.mrf.mxu0
        %v2360 = vadd.f32 %v1806, %v2359
        %v2361 = vpop.f32.mrf.mxu0
        %v2362 = vadd.f32 %v1806, %v2361
        %2363 = vdwg.mxu0
        %2364 = vmatprep.subr.bf16.mxu0 0
        %2365 = vmatpush1.bf16.msra.mxu0 0
        %2366 = vmatprep.subr.bf16.mxu0 0
        %2367 = vmatpush1.bf16.msra.mxu0 0
        %2368 = vmatprep.subr.bf16.mxu0 0
        %2369 = vmatpush1.bf16.msra.mxu0 0
        %2370 = vmatprep.subr.bf16.mxu0 0
        %2371 = vmatpush1.bf16.msra.mxu0 0
        %2372 = vmatprep.subr.bf16.mxu0 0
        %2373 = vmatpush1.bf16.msra.mxu0 0
        %2374 = vmatprep.subr.bf16.mxu0 0
        %2375 = vmatpush1.bf16.msra.mxu0 0
        %2376 = vmatprep.subr.bf16.mxu0 %v2125
        %2377 = vmatpush1.bf16.msra.mxu0 %v2124
        %2378 = vmatprep.subr.bf16.mxu0 %v2121
        %2379 = vmatpush1.bf16.msra.mxu0 %v2120
        %2380 = vmatprep.subr.bf16.mxu0 0
        %2381 = vmatpush2.bf16.msra.mxu0 0
        %2382 = vmatprep.subr.bf16.mxu0 0
        %2383 = vmatpush2.bf16.msra.mxu0 0
        %2384 = vmatprep.subr.bf16.mxu0 0
        %2385 = vmatpush2.bf16.msra.mxu0 0
        %2386 = vmatprep.subr.bf16.mxu0 0
        %2387 = vmatpush2.bf16.msra.mxu0 0
        %2388 = vmatprep.subr.bf16.mxu0 0
        %2389 = vmatpush2.bf16.msra.mxu0 0
        %2390 = vmatprep.subr.bf16.mxu0 0
        %2391 = vmatpush2.bf16.msra.mxu0 0
        %2392 = vmatprep.subr.bf16.mxu0 0
        %2393 = vmatpush2.bf16.msra.mxu0 0
        %2394 = vmatprep.subr.bf16.mxu0 0
        %2395 = vmatpush2.bf16.msra.mxu0 0
        %2396 = vmatprep.mubr.bf16.mxu0 0
        %2397 = vmatmul.mubr.bf16.gmra.mxu0 %v2200
        %v2398 = vpop.f32.mrf.mxu0
        %v2399 = vadd.f32 %v2346, %v2398
        %v2400 = vpop.f32.mrf.mxu0
        %v2401 = vadd.f32 %v2348, %v2400
        %v2402 = vpop.f32.mrf.mxu0
        %v2403 = vadd.f32 %v2350, %v2402
        %v2404 = vpop.f32.mrf.mxu0
        %v2405 = vadd.f32 %v2352, %v2404
        %2406 = vmatprep.mubr.bf16.mxu0 0
        %2407 = vmatmul.mubr.bf16.gmra.mxu0 %v2203
        %v2408 = vpop.f32.mrf.mxu0
        %v2409 = vadd.f32 %v2356, %v2408
        %v2410 = vpop.f32.mrf.mxu0
        %v2411 = vadd.f32 %v2358, %v2410
        %v2412 = vpop.f32.mrf.mxu0
        %v2413 = vadd.f32 %v2360, %v2412
        %v2414 = vpop.f32.mrf.mxu0
        %v2415 = vadd.f32 %v2362, %v2414
        %2416 = vdwg.mxu0
        %v2417 = vld [vmem:[%s268] sm:$0xff]
        %v2418 = vld [vmem:[%s268 + $0x8] sm:$0xff]
        %v2419 = vld [vmem:[%s268 + $0x10] sm:$0xff]
        %v2420 = vld [vmem:[%s268 + $0x18] sm:$0xff]
        %2422 = vset.pattern.permute.xlu0 0
        %2423 = vperm.xlu0 %2422, %v2417
        %v2424 = vpop.permute.xlu0 %2423
        %2427 = vset.pattern.permute.xlu0 0
        %2428 = vperm.xlu0 %2427, %v2418
        %v2429 = vpop.permute.xlu0 %2428
        %2432 = vset.pattern.permute.xlu0 0
        %2433 = vperm.xlu0 %2432, %v2419
        %v2434 = vpop.permute.xlu0 %2433
        %2437 = vset.pattern.permute.xlu0 0
        %2438 = vperm.xlu0 %2437, %v2420
        %v2439 = vpop.permute.xlu0 %2438
        %v2441 = vadd.f32 %v2293, %v2424
        %v2442 = vadd.f32 %v2295, %v2424
        %v2443 = vadd.f32 %v2297, %v2429
        %v2444 = vadd.f32 %v2299, %v2429
        %v2445 = vadd.f32 %v2303, %v2434
        %v2446 = vadd.f32 %v2305, %v2434
        %v2447 = vadd.f32 %v2307, %v2439
        %v2448 = vadd.f32 %v2309, %v2439
        %v2449 = vadd.f32 %v2441, %v2442
        %2450 = vadd.xlane.f32.xlu0 %v2449
        %v2451 = vpop.xlane.xlu0 %2450
        %v2452 = vadd.f32 %v2443, %v2444
        %2453 = vadd.xlane.f32.xlu0 %v2452
        %v2454 = vpop.xlane.xlu0 %2453
        %v2455 = vadd.f32 %v2445, %v2446
        %2456 = vadd.xlane.f32.xlu0 %v2455
        %v2457 = vpop.xlane.xlu0 %2456
        %v2458 = vadd.f32 %v2447, %v2448
        %2459 = vadd.xlane.f32.xlu0 %v2458
        %v2460 = vpop.xlane.xlu0 %2459
        %v2461 = vmul.f32 %v2451, %v300
        %v2462 = vmul.f32 %v2454, %v300
        %v2463 = vmul.f32 %v2457, %v300
        %v2464 = vmul.f32 %v2460, %v300
        %v2465 = vmul.f32 %v2441, %v2441
        %v2466 = vmul.f32 %v2442, %v2442
        %v2467 = vmul.f32 %v2443, %v2443
        %v2468 = vmul.f32 %v2444, %v2444
        %v2469 = vmul.f32 %v2445, %v2445
        %v2470 = vmul.f32 %v2446, %v2446
        %v2471 = vmul.f32 %v2447, %v2447
        %v2472 = vmul.f32 %v2448, %v2448
        %v2473 = vadd.f32 %v2465, %v2466
        %2474 = vadd.xlane.f32.xlu0 %v2473
        %v2475 = vpop.xlane.xlu0 %2474
        %v2476 = vadd.f32 %v2467, %v2468
        %2477 = vadd.xlane.f32.xlu0 %v2476
        %v2478 = vpop.xlane.xlu0 %2477
        %v2479 = vadd.f32 %v2469, %v2470
        %2480 = vadd.xlane.f32.xlu0 %v2479
        %v2481 = vpop.xlane.xlu0 %2480
        %v2482 = vadd.f32 %v2471, %v2472
        %2483 = vadd.xlane.f32.xlu0 %v2482
        %v2484 = vpop.xlane.xlu0 %2483
        %v2485 = vmul.f32 %v2475, %v300
        %v2486 = vmul.f32 %v2478, %v300
        %v2487 = vmul.f32 %v2481, %v300
        %v2488 = vmul.f32 %v2484, %v300
        %v2489 = vmul.f32 %v2461, %v2461
        %v2490 = vmul.f32 %v2462, %v2462
        %v2491 = vmul.f32 %v2463, %v2463
        %v2492 = vmul.f32 %v2464, %v2464
        %v2493 = vsub.f32 %v2485, %v2489
        %v2494 = vsub.f32 %v2486, %v2490
        %v2495 = vsub.f32 %v2487, %v2491
        %v2496 = vsub.f32 %v2488, %v2492
        %v2497 = vsub.f32 %v2441, %v2461
        %v2498 = vsub.f32 %v2442, %v2461
        %v2499 = vsub.f32 %v2443, %v2462
        %v2500 = vsub.f32 %v2444, %v2462
        %v2501 = vsub.f32 %v2445, %v2463
        %v2502 = vsub.f32 %v2446, %v2463
        %v2503 = vsub.f32 %v2447, %v2464
        %v2504 = vsub.f32 %v2448, %v2464
        %v2505 = vadd.f32 %v2493, 1e-05
        %v2506 = vadd.f32 %v2494, 1e-05
        %v2507 = vadd.f32 %v2495, 1e-05
        %v2508 = vadd.f32 %v2496, 1e-05
        %v2509 = vrsqrt.pop %v2505
        %v2510 = vrsqrt.pop %v2506
        %v2511 = vrsqrt.pop %v2507
        %v2512 = vrsqrt.pop %v2508
        %v2513 = vmul.f32 %v2497, %v2509
        %v2514 = vmul.f32 %v2498, %v2509
        %v2515 = vmul.f32 %v2499, %v2510
        %v2516 = vmul.f32 %v2500, %v2510
        %v2517 = vmul.f32 %v2501, %v2511
        %v2518 = vmul.f32 %v2502, %v2511
        %v2519 = vmul.f32 %v2503, %v2512
        %v2520 = vmul.f32 %v2504, %v2512
        %2521 = vset.pattern.permute.xlu0 3
        %2522 = vperm.xlu0 %2521, %v272
        %v2523 = vpop.permute.xlu0 %2522
        %2525 = vset.pattern.permute.xlu0 3
        %2526 = vperm.xlu0 %2525, %v273
        %v2527 = vpop.permute.xlu0 %2526
        %2529 = vset.pattern.permute.xlu0 3
        %2530 = vperm.xlu0 %2529, %v274
        %v2531 = vpop.permute.xlu0 %2530
        %2533 = vset.pattern.permute.xlu0 3
        %2534 = vperm.xlu0 %2533, %v275
        %v2535 = vpop.permute.xlu0 %2534
        %v2537 = vmul.f32 %v2513, %v2523
        %v2538 = vmul.f32 %v2514, %v2523
        %v2539 = vmul.f32 %v2515, %v2527
        %v2540 = vmul.f32 %v2516, %v2527
        %v2541 = vmul.f32 %v2517, %v2531
        %v2542 = vmul.f32 %v2518, %v2531
        %v2543 = vmul.f32 %v2519, %v2535
        %v2544 = vmul.f32 %v2520, %v2535
        %2545 = vset.pattern.permute.xlu0 4
        %2546 = vperm.xlu0 %2545, %v272
        %v2547 = vpop.permute.xlu0 %2546
        %2549 = vset.pattern.permute.xlu0 4
        %2550 = vperm.xlu0 %2549, %v273
        %v2551 = vpop.permute.xlu0 %2550
        %2553 = vset.pattern.permute.xlu0 4
        %2554 = vperm.xlu0 %2553, %v274
        %v2555 = vpop.permute.xlu0 %2554
        %2557 = vset.pattern.permute.xlu0 4
        %2558 = vperm.xlu0 %2557, %v275
        %v2559 = vpop.permute.xlu0 %2558
        %v2561 = vadd.f32 %v2537, %v2547
        %v2562 = vadd.f32 %v2538, %v2547
        %v2563 = vadd.f32 %v2539, %v2551
        %v2564 = vadd.f32 %v2540, %v2551
        %v2565 = vadd.f32 %v2541, %v2555
        %v2566 = vadd.f32 %v2542, %v2555
        %v2567 = vadd.f32 %v2543, %v2559
        %v2568 = vadd.f32 %v2544, %v2559
        %v2569 = vxor.u32 %v2561, 2147483648
        %v2570 = vxor.u32 %v2562, 2147483648
        %v2571 = vxor.u32 %v2563, 2147483648
        %v2572 = vxor.u32 %v2564, 2147483648
        %v2573 = vxor.u32 %v2565, 2147483648
        %v2574 = vxor.u32 %v2566, 2147483648
        %v2575 = vxor.u32 %v2567, 2147483648
        %v2576 = vxor.u32 %v2568, 2147483648
        %v2577 = vmul.f32 %v2569, 1.442695
        %v2578 = vpow.pop %v2577
        %v2579 = vmul.f32 %v2570, 1.442695
        %v2580 = vpow.pop %v2579
        %v2581 = vmul.f32 %v2571, 1.442695
        %v2582 = vpow.pop %v2581
        %v2583 = vmul.f32 %v2572, 1.442695
        %v2584 = vpow.pop %v2583
        %v2585 = vmul.f32 %v2573, 1.442695
        %v2586 = vpow.pop %v2585
        %v2587 = vmul.f32 %v2574, 1.442695
        %v2588 = vpow.pop %v2587
        %v2589 = vmul.f32 %v2575, 1.442695
        %v2590 = vpow.pop %v2589
        %v2591 = vmul.f32 %v2576, 1.442695
        %v2592 = vpow.pop %v2591
        %v2593 = vadd.f32 %v2578, 1.0
        %v2594 = vadd.f32 %v2580, 1.0
        %v2595 = vadd.f32 %v2582, 1.0
        %v2596 = vadd.f32 %v2584, 1.0
        %v2597 = vadd.f32 %v2586, 1.0
        %v2598 = vadd.f32 %v2588, 1.0
        %v2599 = vadd.f32 %v2590, 1.0
        %v2600 = vadd.f32 %v2592, 1.0
        %v2601 = vrcp.pop %v2593
        %v2602 = vmul.f32 1.0, %v2601
        %v2603 = vrcp.pop %v2594
        %v2604 = vmul.f32 1.0, %v2603
        %v2605 = vrcp.pop %v2595
        %v2606 = vmul.f32 1.0, %v2605
        %v2607 = vrcp.pop %v2596
        %v2608 = vmul.f32 1.0, %v2607
        %v2609 = vrcp.pop %v2597
        %v2610 = vmul.f32 1.0, %v2609
        %v2611 = vrcp.pop %v2598
        %v2612 = vmul.f32 1.0, %v2611
        %v2613 = vrcp.pop %v2599
        %v2614 = vmul.f32 1.0, %v2613
        %v2615 = vrcp.pop %v2600
        %v2616 = vmul.f32 1.0, %v2615
        %v2617 = vmul.f32 %v2561, %v2602
        %v2618 = vmul.f32 %v2562, %v2604
        %v2619 = vmul.f32 %v2563, %v2606
        %v2620 = vmul.f32 %v2564, %v2608
        %v2621 = vmul.f32 %v2565, %v2610
        %v2622 = vmul.f32 %v2566, %v2612
        %v2623 = vmul.f32 %v2567, %v2614
        %v2624 = vmul.f32 %v2568, %v2616
        %2625 = vrot.lane.b32.xlu0 %v2617, 17
        %v2626 = vpop.permute.xlu0 %2625
        %2627 = vrot.lane.b32.xlu0 %v2619, 17
        %v2628 = vpop.permute.xlu0 %2627
        %2629 = vrot.lane.b32.xlu0 %v2621, 17
        %v2630 = vpop.permute.xlu0 %2629
        %2631 = vrot.lane.b32.xlu0 %v2623, 17
        %v2632 = vpop.permute.xlu0 %2631
        %2633 = vrot.lane.b32.xlu0 %v2618, 17
        %v2634 = vpop.permute.xlu0 %2633
        %2635 = vrot.lane.b32.xlu0 %v2620, 17
        %v2636 = vpop.permute.xlu0 %2635
        %2637 = vrot.lane.b32.xlu0 %v2622, 17
        %v2638 = vpop.permute.xlu0 %2637
        %2639 = vrot.lane.b32.xlu0 %v2624, 17
        %v2640 = vpop.permute.xlu0 %2639
        %v2641 = vsel %vm487, %v2626, %v2634
        %v2642 = vsel %vm487, %v2628, %v2636
        %v2643 = vsel %vm487, %v2630, %v2638
        %v2644 = vsel %vm487, %v2632, %v2640
        %v2645 = vsel %vm487, %v2634, %v2626
        %v2646 = vsel %vm487, %v2636, %v2628
        %v2647 = vsel %vm487, %v2638, %v2630
        %v2648 = vsel %vm487, %v2640, %v2632
        %v2649 = vmul.f32 %v2645, %v499
        %v2650 = vmul.f32 %v2641, %v503
        %v2651 = vmul.f32 %v2646, %v499
        %v2652 = vmul.f32 %v2642, %v503
        %v2653 = vmul.f32 %v2647, %v499
        %v2654 = vmul.f32 %v2643, %v503
        %v2655 = vmul.f32 %v2648, %v499
        %v2656 = vmul.f32 %v2644, %v503
        %v2657 = vpack.c.bf16 %v2651, %v2649
        %v2658 = vpack.c.bf16 %v2652, %v2650
        %v2659 = vpack.c.bf16 %v2655, %v2653
        %v2660 = vpack.c.bf16 %v2656, %v2654
        %v2665 = vunpack.c.l.b16 %v2657
        %v2666 = vunpack.c.l.b16 %v2658
        %v2667 = vunpack.c.h.b16 %v2657
        %v2668 = vunpack.c.h.b16 %v2658
        %v2669 = vunpack.c.l.b16 %v2659
        %v2670 = vunpack.c.l.b16 %v2660
        %v2671 = vunpack.c.h.b16 %v2659
        %v2672 = vunpack.c.h.b16 %v2660
        %v2673 = vpack.c.b16 %v2666, %v2665
        %v2674 = vpack.c.b16 %v2668, %v2667
        %v2675 = vpack.c.b16 %v2670, %v2669
        %v2676 = vpack.c.b16 %v2672, %v2671
        %2681 = vst [vmem:[#allocation2] sm:$0xff] %v2673
        %2682 = vst [vmem:[#allocation2 + $0x10] sm:$0xff] %v2674
        %2683 = vst [vmem:[#allocation2 + $0x20] sm:$0xff] %v2675
        %2684 = vst [vmem:[#allocation2 + $0x30] sm:$0xff] %v2676
        %2685 = vrot.lane.b32.xlu0 %v2617, 16
        %v2686 = vpop.permute.xlu0 %2685
        %2687 = vrot.lane.b32.xlu0 %v2619, 16
        %v2688 = vpop.permute.xlu0 %2687
        %2689 = vrot.lane.b32.xlu0 %v2621, 16
        %v2690 = vpop.permute.xlu0 %2689
        %2691 = vrot.lane.b32.xlu0 %v2623, 16
        %v2692 = vpop.permute.xlu0 %2691
        %2693 = vrot.lane.b32.xlu0 %v2618, 16
        %v2694 = vpop.permute.xlu0 %2693
        %2695 = vrot.lane.b32.xlu0 %v2620, 16
        %v2696 = vpop.permute.xlu0 %2695
        %2697 = vrot.lane.b32.xlu0 %v2622, 16
        %v2698 = vpop.permute.xlu0 %2697
        %2699 = vrot.lane.b32.xlu0 %v2624, 16
        %v2700 = vpop.permute.xlu0 %2699
        %v2701 = vsel %vm556, %v2686, %v2694
        %v2702 = vsel %vm556, %v2688, %v2696
        %v2703 = vsel %vm556, %v2690, %v2698
        %v2704 = vsel %vm556, %v2692, %v2700
        %v2705 = vsel %vm556, %v2694, %v2686
        %v2706 = vsel %vm556, %v2696, %v2688
        %v2707 = vsel %vm556, %v2698, %v2690
        %v2708 = vsel %vm556, %v2700, %v2692
        %v2709 = vmul.f32 %v2705, %v568
        %v2710 = vmul.f32 %v2701, %v572
        %v2711 = vmul.f32 %v2706, %v568
        %v2712 = vmul.f32 %v2702, %v572
        %v2713 = vmul.f32 %v2707, %v568
        %v2714 = vmul.f32 %v2703, %v572
        %v2715 = vmul.f32 %v2708, %v568
        %v2716 = vmul.f32 %v2704, %v572
        %v2717 = vpack.c.bf16 %v2711, %v2709
        %v2718 = vpack.c.bf16 %v2712, %v2710
        %v2719 = vpack.c.bf16 %v2715, %v2713
        %v2720 = vpack.c.bf16 %v2716, %v2714
        %v2725 = vunpack.c.l.b16 %v2717
        %v2726 = vunpack.c.l.b16 %v2718
        %v2727 = vunpack.c.h.b16 %v2717
        %v2728 = vunpack.c.h.b16 %v2718
        %v2729 = vunpack.c.l.b16 %v2719
        %v2730 = vunpack.c.l.b16 %v2720
        %v2731 = vunpack.c.h.b16 %v2719
        %v2732 = vunpack.c.h.b16 %v2720
        %v2733 = vpack.c.b16 %v2726, %v2725
        %v2734 = vpack.c.b16 %v2728, %v2727
        %v2735 = vpack.c.b16 %v2730, %v2729
        %v2736 = vpack.c.b16 %v2732, %v2731
        %2741 = vst [vmem:[#allocation2 + $0x40] sm:$0xff] %v2733
        %2742 = vst [vmem:[#allocation2 + $0x50] sm:$0xff] %v2734
        %2743 = vst [vmem:[#allocation2 + $0x60] sm:$0xff] %v2735
        %2744 = vst [vmem:[#allocation2 + $0x70] sm:$0xff] %v2736
        %2745 = vrot.lane.b32.xlu0 %v2617, 15
        %v2746 = vpop.permute.xlu0 %2745
        %2747 = vrot.lane.b32.xlu0 %v2619, 15
        %v2748 = vpop.permute.xlu0 %2747
        %2749 = vrot.lane.b32.xlu0 %v2621, 15
        %v2750 = vpop.permute.xlu0 %2749
        %2751 = vrot.lane.b32.xlu0 %v2623, 15
        %v2752 = vpop.permute.xlu0 %2751
        %2753 = vrot.lane.b32.xlu0 %v2618, 15
        %v2754 = vpop.permute.xlu0 %2753
        %2755 = vrot.lane.b32.xlu0 %v2620, 15
        %v2756 = vpop.permute.xlu0 %2755
        %2757 = vrot.lane.b32.xlu0 %v2622, 15
        %v2758 = vpop.permute.xlu0 %2757
        %2759 = vrot.lane.b32.xlu0 %v2624, 15
        %v2760 = vpop.permute.xlu0 %2759
        %v2761 = vsel %vm625, %v2746, %v2754
        %v2762 = vsel %vm625, %v2748, %v2756
        %v2763 = vsel %vm625, %v2750, %v2758
        %v2764 = vsel %vm625, %v2752, %v2760
        %v2765 = vsel %vm625, %v2754, %v2746
        %v2766 = vsel %vm625, %v2756, %v2748
        %v2767 = vsel %vm625, %v2758, %v2750
        %v2768 = vsel %vm625, %v2760, %v2752
        %v2769 = vmul.f32 %v2765, %v637
        %v2770 = vmul.f32 %v2761, %v641
        %v2771 = vmul.f32 %v2766, %v637
        %v2772 = vmul.f32 %v2762, %v641
        %v2773 = vmul.f32 %v2767, %v637
        %v2774 = vmul.f32 %v2763, %v641
        %v2775 = vmul.f32 %v2768, %v637
        %v2776 = vmul.f32 %v2764, %v641
        %v2777 = vpack.c.bf16 %v2771, %v2769
        %v2778 = vpack.c.bf16 %v2772, %v2770
        %v2779 = vpack.c.bf16 %v2775, %v2773
        %v2780 = vpack.c.bf16 %v2776, %v2774
        %v2785 = vunpack.c.l.b16 %v2777
        %v2786 = vunpack.c.l.b16 %v2778
        %v2787 = vunpack.c.h.b16 %v2777
        %v2788 = vunpack.c.h.b16 %v2778
        %v2789 = vunpack.c.l.b16 %v2779
        %v2790 = vunpack.c.l.b16 %v2780
        %v2791 = vunpack.c.h.b16 %v2779
        %v2792 = vunpack.c.h.b16 %v2780
        %v2793 = vpack.c.b16 %v2786, %v2785
        %v2794 = vpack.c.b16 %v2788, %v2787
        %v2795 = vpack.c.b16 %v2790, %v2789
        %v2796 = vpack.c.b16 %v2792, %v2791
        %2801 = vst [vmem:[#allocation2 + $0x80] sm:$0xff] %v2793
        %2802 = vst [vmem:[#allocation2 + $0x90] sm:$0xff] %v2794
        %2803 = vst [vmem:[#allocation2 + $0xa0] sm:$0xff] %v2795
        %2804 = vst [vmem:[#allocation2 + $0xb0] sm:$0xff] %v2796
        %2805 = vrot.lane.b32.xlu0 %v2617, 1
        %v2806 = vpop.permute.xlu0 %2805
        %2807 = vrot.lane.b32.xlu0 %v2619, 1
        %v2808 = vpop.permute.xlu0 %2807
        %2809 = vrot.lane.b32.xlu0 %v2621, 1
        %v2810 = vpop.permute.xlu0 %2809
        %2811 = vrot.lane.b32.xlu0 %v2623, 1
        %v2812 = vpop.permute.xlu0 %2811
        %2813 = vrot.lane.b32.xlu0 %v2618, 1
        %v2814 = vpop.permute.xlu0 %2813
        %2815 = vrot.lane.b32.xlu0 %v2620, 1
        %v2816 = vpop.permute.xlu0 %2815
        %2817 = vrot.lane.b32.xlu0 %v2622, 1
        %v2818 = vpop.permute.xlu0 %2817
        %2819 = vrot.lane.b32.xlu0 %v2624, 1
        %v2820 = vpop.permute.xlu0 %2819
        %v2821 = vsel %vm694, %v2806, %v2814
        %v2822 = vsel %vm694, %v2808, %v2816
        %v2823 = vsel %vm694, %v2810, %v2818
        %v2824 = vsel %vm694, %v2812, %v2820
        %v2825 = vsel %vm694, %v2814, %v2806
        %v2826 = vsel %vm694, %v2816, %v2808
        %v2827 = vsel %vm694, %v2818, %v2810
        %v2828 = vsel %vm694, %v2820, %v2812
        %v2829 = vmul.f32 %v2825, %v706
        %v2830 = vmul.f32 %v2821, %v710
        %v2831 = vmul.f32 %v2826, %v706
        %v2832 = vmul.f32 %v2822, %v710
        %v2833 = vmul.f32 %v2827, %v706
        %v2834 = vmul.f32 %v2823, %v710
        %v2835 = vmul.f32 %v2828, %v706
        %v2836 = vmul.f32 %v2824, %v710
        %v2837 = vpack.c.bf16 %v2831, %v2829
        %v2838 = vpack.c.bf16 %v2832, %v2830
        %v2839 = vpack.c.bf16 %v2835, %v2833
        %v2840 = vpack.c.bf16 %v2836, %v2834
        %v2845 = vunpack.c.l.b16 %v2837
        %v2846 = vunpack.c.l.b16 %v2838
        %v2847 = vunpack.c.h.b16 %v2837
        %v2848 = vunpack.c.h.b16 %v2838
        %v2849 = vunpack.c.l.b16 %v2839
        %v2850 = vunpack.c.l.b16 %v2840
        %v2851 = vunpack.c.h.b16 %v2839
        %v2852 = vunpack.c.h.b16 %v2840
        %v2853 = vpack.c.b16 %v2846, %v2845
        %v2854 = vpack.c.b16 %v2848, %v2847
        %v2855 = vpack.c.b16 %v2850, %v2849
        %v2856 = vpack.c.b16 %v2852, %v2851
        %2861 = vst [vmem:[#allocation2 + $0xc0] sm:$0xff] %v2853
        %2862 = vst [vmem:[#allocation2 + $0xd0] sm:$0xff] %v2854
        %2863 = vst [vmem:[#allocation2 + $0xe0] sm:$0xff] %v2855
        %2864 = vst [vmem:[#allocation2 + $0xf0] sm:$0xff] %v2856
        %v2865 = vpack.c.bf16 %v2619, %v2617
        %v2866 = vpack.c.bf16 %v2620, %v2618
        %v2867 = vpack.c.bf16 %v2623, %v2621
        %v2868 = vpack.c.bf16 %v2624, %v2622
        %v2873 = vunpack.c.l.b16 %v2865
        %v2874 = vunpack.c.l.b16 %v2866
        %v2875 = vunpack.c.h.b16 %v2865
        %v2876 = vunpack.c.h.b16 %v2866
        %v2877 = vunpack.c.l.b16 %v2867
        %v2878 = vunpack.c.l.b16 %v2868
        %v2879 = vunpack.c.h.b16 %v2867
        %v2880 = vunpack.c.h.b16 %v2868
        %v2881 = vpack.c.b16 %v2874, %v2873
        %v2882 = vpack.c.b16 %v2876, %v2875
        %v2883 = vpack.c.b16 %v2878, %v2877
        %v2884 = vpack.c.b16 %v2880, %v2879
        %2889 = vst [vmem:[#allocation2 + $0x100] sm:$0xff] %v2881
        %2890 = vst [vmem:[#allocation2 + $0x110] sm:$0xff] %v2882
        %2891 = vst [vmem:[#allocation2 + $0x120] sm:$0xff] %v2883
        %2892 = vst [vmem:[#allocation2 + $0x130] sm:$0xff] %v2884
        %2893 = vrot.lane.b32.xlu0 %v2617, 127
        %v2894 = vpop.permute.xlu0 %2893
        %2895 = vrot.lane.b32.xlu0 %v2619, 127
        %v2896 = vpop.permute.xlu0 %2895
        %2897 = vrot.lane.b32.xlu0 %v2621, 127
        %v2898 = vpop.permute.xlu0 %2897
        %2899 = vrot.lane.b32.xlu0 %v2623, 127
        %v2900 = vpop.permute.xlu0 %2899
        %2901 = vrot.lane.b32.xlu0 %v2618, 127
        %v2902 = vpop.permute.xlu0 %2901
        %2903 = vrot.lane.b32.xlu0 %v2620, 127
        %v2904 = vpop.permute.xlu0 %2903
        %2905 = vrot.lane.b32.xlu0 %v2622, 127
        %v2906 = vpop.permute.xlu0 %2905
        %2907 = vrot.lane.b32.xlu0 %v2624, 127
        %v2908 = vpop.permute.xlu0 %2907
        %v2909 = vsel %vm791, %v2894, %v2902
        %v2910 = vsel %vm791, %v2896, %v2904
        %v2911 = vsel %vm791, %v2898, %v2906
        %v2912 = vsel %vm791, %v2900, %v2908
        %v2913 = vsel %vm791, %v2902, %v2894
        %v2914 = vsel %vm791, %v2904, %v2896
        %v2915 = vsel %vm791, %v2906, %v2898
        %v2916 = vsel %vm791, %v2908, %v2900
        %v2917 = vmul.f32 %v2909, %v803
        %v2918 = vmul.f32 %v2913, %v807
        %v2919 = vmul.f32 %v2910, %v803
        %v2920 = vmul.f32 %v2914, %v807
        %v2921 = vmul.f32 %v2911, %v803
        %v2922 = vmul.f32 %v2915, %v807
        %v2923 = vmul.f32 %v2912, %v803
        %v2924 = vmul.f32 %v2916, %v807
        %v2925 = vpack.c.bf16 %v2919, %v2917
        %v2926 = vpack.c.bf16 %v2920, %v2918
        %v2927 = vpack.c.bf16 %v2923, %v2921
        %v2928 = vpack.c.bf16 %v2924, %v2922
        %v2933 = vunpack.c.l.b16 %v2925
        %v2934 = vunpack.c.l.b16 %v2926
        %v2935 = vunpack.c.h.b16 %v2925
        %v2936 = vunpack.c.h.b16 %v2926
        %v2937 = vunpack.c.l.b16 %v2927
        %v2938 = vunpack.c.l.b16 %v2928
        %v2939 = vunpack.c.h.b16 %v2927
        %v2940 = vunpack.c.h.b16 %v2928
        %v2941 = vpack.c.b16 %v2934, %v2933
        %v2942 = vpack.c.b16 %v2936, %v2935
        %v2943 = vpack.c.b16 %v2938, %v2937
        %v2944 = vpack.c.b16 %v2940, %v2939
        %2949 = vst [vmem:[#allocation2 + $0x140] sm:$0xff] %v2941
        %2950 = vst [vmem:[#allocation2 + $0x150] sm:$0xff] %v2942
        %2951 = vst [vmem:[#allocation2 + $0x160] sm:$0xff] %v2943
        %2952 = vst [vmem:[#allocation2 + $0x170] sm:$0xff] %v2944
        %2953 = vrot.lane.b32.xlu0 %v2617, 113
        %v2954 = vpop.permute.xlu0 %2953
        %2955 = vrot.lane.b32.xlu0 %v2619, 113
        %v2956 = vpop.permute.xlu0 %2955
        %2957 = vrot.lane.b32.xlu0 %v2621, 113
        %v2958 = vpop.permute.xlu0 %2957
        %2959 = vrot.lane.b32.xlu0 %v2623, 113
        %v2960 = vpop.permute.xlu0 %2959
        %2961 = vrot.lane.b32.xlu0 %v2618, 113
        %v2962 = vpop.permute.xlu0 %2961
        %2963 = vrot.lane.b32.xlu0 %v2620, 113
        %v2964 = vpop.permute.xlu0 %2963
        %2965 = vrot.lane.b32.xlu0 %v2622, 113
        %v2966 = vpop.permute.xlu0 %2965
        %2967 = vrot.lane.b32.xlu0 %v2624, 113
        %v2968 = vpop.permute.xlu0 %2967
        %v2969 = vsel %vm860, %v2954, %v2962
        %v2970 = vsel %vm860, %v2956, %v2964
        %v2971 = vsel %vm860, %v2958, %v2966
        %v2972 = vsel %vm860, %v2960, %v2968
        %v2973 = vsel %vm860, %v2962, %v2954
        %v2974 = vsel %vm860, %v2964, %v2956
        %v2975 = vsel %vm860, %v2966, %v2958
        %v2976 = vsel %vm860, %v2968, %v2960
        %v2977 = vmul.f32 %v2969, %v872
        %v2978 = vmul.f32 %v2973, %v876
        %v2979 = vmul.f32 %v2970, %v872
        %v2980 = vmul.f32 %v2974, %v876
        %v2981 = vmul.f32 %v2971, %v872
        %v2982 = vmul.f32 %v2975, %v876
        %v2983 = vmul.f32 %v2972, %v872
        %v2984 = vmul.f32 %v2976, %v876
        %v2985 = vpack.c.bf16 %v2979, %v2977
        %v2986 = vpack.c.bf16 %v2980, %v2978
        %v2987 = vpack.c.bf16 %v2983, %v2981
        %v2988 = vpack.c.bf16 %v2984, %v2982
        %v2993 = vunpack.c.l.b16 %v2985
        %v2994 = vunpack.c.l.b16 %v2986
        %v2995 = vunpack.c.h.b16 %v2985
        %v2996 = vunpack.c.h.b16 %v2986
        %v2997 = vunpack.c.l.b16 %v2987
        %v2998 = vunpack.c.l.b16 %v2988
        %v2999 = vunpack.c.h.b16 %v2987
        %v3000 = vunpack.c.h.b16 %v2988
        %v3001 = vpack.c.b16 %v2994, %v2993
        %v3002 = vpack.c.b16 %v2996, %v2995
        %v3003 = vpack.c.b16 %v2998, %v2997
        %v3004 = vpack.c.b16 %v3000, %v2999
        %3009 = vst [vmem:[#allocation2 + $0x180] sm:$0xff] %v3001
        %3010 = vst [vmem:[#allocation2 + $0x190] sm:$0xff] %v3002
        %3011 = vst [vmem:[#allocation2 + $0x1a0] sm:$0xff] %v3003
        %3012 = vst [vmem:[#allocation2 + $0x1b0] sm:$0xff] %v3004
        %3013 = vrot.lane.b32.xlu0 %v2617, 112
        %v3014 = vpop.permute.xlu0 %3013
        %3015 = vrot.lane.b32.xlu0 %v2619, 112
        %v3016 = vpop.permute.xlu0 %3015
        %3017 = vrot.lane.b32.xlu0 %v2621, 112
        %v3018 = vpop.permute.xlu0 %3017
        %3019 = vrot.lane.b32.xlu0 %v2623, 112
        %v3020 = vpop.permute.xlu0 %3019
        %3021 = vrot.lane.b32.xlu0 %v2618, 112
        %v3022 = vpop.permute.xlu0 %3021
        %3023 = vrot.lane.b32.xlu0 %v2620, 112
        %v3024 = vpop.permute.xlu0 %3023
        %3025 = vrot.lane.b32.xlu0 %v2622, 112
        %v3026 = vpop.permute.xlu0 %3025
        %3027 = vrot.lane.b32.xlu0 %v2624, 112
        %v3028 = vpop.permute.xlu0 %3027
        %v3029 = vsel %vm929, %v3014, %v3022
        %v3030 = vsel %vm929, %v3016, %v3024
        %v3031 = vsel %vm929, %v3018, %v3026
        %v3032 = vsel %vm929, %v3020, %v3028
        %v3033 = vsel %vm929, %v3022, %v3014
        %v3034 = vsel %vm929, %v3024, %v3016
        %v3035 = vsel %vm929, %v3026, %v3018
        %v3036 = vsel %vm929, %v3028, %v3020
        %v3037 = vmul.f32 %v3029, %v941
        %v3038 = vmul.f32 %v3033, %v945
        %v3039 = vmul.f32 %v3030, %v941
        %v3040 = vmul.f32 %v3034, %v945
        %v3041 = vmul.f32 %v3031, %v941
        %v3042 = vmul.f32 %v3035, %v945
        %v3043 = vmul.f32 %v3032, %v941
        %v3044 = vmul.f32 %v3036, %v945
        %v3045 = vpack.c.bf16 %v3039, %v3037
        %v3046 = vpack.c.bf16 %v3040, %v3038
        %v3047 = vpack.c.bf16 %v3043, %v3041
        %v3048 = vpack.c.bf16 %v3044, %v3042
        %v3053 = vunpack.c.l.b16 %v3045
        %v3054 = vunpack.c.l.b16 %v3046
        %v3055 = vunpack.c.h.b16 %v3045
        %v3056 = vunpack.c.h.b16 %v3046
        %v3057 = vunpack.c.l.b16 %v3047
        %v3058 = vunpack.c.l.b16 %v3048
        %v3059 = vunpack.c.h.b16 %v3047
        %v3060 = vunpack.c.h.b16 %v3048
        %v3061 = vpack.c.b16 %v3054, %v3053
        %v3062 = vpack.c.b16 %v3056, %v3055
        %v3063 = vpack.c.b16 %v3058, %v3057
        %v3064 = vpack.c.b16 %v3060, %v3059
        %3069 = vst [vmem:[#allocation2 + $0x1c0] sm:$0xff] %v3061
        %3070 = vst [vmem:[#allocation2 + $0x1d0] sm:$0xff] %v3062
        %3071 = vst [vmem:[#allocation2 + $0x1e0] sm:$0xff] %v3063
        %3072 = vst [vmem:[#allocation2 + $0x1f0] sm:$0xff] %v3064
        %3073 = vrot.lane.b32.xlu0 %v2617, 111
        %v3074 = vpop.permute.xlu0 %3073
        %3075 = vrot.lane.b32.xlu0 %v2619, 111
        %v3076 = vpop.permute.xlu0 %3075
        %3077 = vrot.lane.b32.xlu0 %v2621, 111
        %v3078 = vpop.permute.xlu0 %3077
        %3079 = vrot.lane.b32.xlu0 %v2623, 111
        %v3080 = vpop.permute.xlu0 %3079
        %3081 = vrot.lane.b32.xlu0 %v2618, 111
        %v3082 = vpop.permute.xlu0 %3081
        %3083 = vrot.lane.b32.xlu0 %v2620, 111
        %v3084 = vpop.permute.xlu0 %3083
        %3085 = vrot.lane.b32.xlu0 %v2622, 111
        %v3086 = vpop.permute.xlu0 %3085
        %3087 = vrot.lane.b32.xlu0 %v2624, 111
        %v3088 = vpop.permute.xlu0 %3087
        %v3089 = vsel %vm998, %v3074, %v3082
        %v3090 = vsel %vm998, %v3076, %v3084
        %v3091 = vsel %vm998, %v3078, %v3086
        %v3092 = vsel %vm998, %v3080, %v3088
        %v3093 = vsel %vm998, %v3082, %v3074
        %v3094 = vsel %vm998, %v3084, %v3076
        %v3095 = vsel %vm998, %v3086, %v3078
        %v3096 = vsel %vm998, %v3088, %v3080
        %v3097 = vmul.f32 %v3089, %v1010
        %v3098 = vmul.f32 %v3093, %v1014
        %v3099 = vmul.f32 %v3090, %v1010
        %v3100 = vmul.f32 %v3094, %v1014
        %v3101 = vmul.f32 %v3091, %v1010
        %v3102 = vmul.f32 %v3095, %v1014
        %v3103 = vmul.f32 %v3092, %v1010
        %v3104 = vmul.f32 %v3096, %v1014
        %v3105 = vpack.c.bf16 %v3099, %v3097
        %v3106 = vpack.c.bf16 %v3100, %v3098
        %v3107 = vpack.c.bf16 %v3103, %v3101
        %v3108 = vpack.c.bf16 %v3104, %v3102
        %v3113 = vunpack.c.l.b16 %v3105
        %v3114 = vunpack.c.l.b16 %v3106
        %v3115 = vunpack.c.h.b16 %v3105
        %v3116 = vunpack.c.h.b16 %v3106
        %v3117 = vunpack.c.l.b16 %v3107
        %v3118 = vunpack.c.l.b16 %v3108
        %v3119 = vunpack.c.h.b16 %v3107
        %v3120 = vunpack.c.h.b16 %v3108
        %v3121 = vpack.c.b16 %v3114, %v3113
        %v3122 = vpack.c.b16 %v3116, %v3115
        %v3123 = vpack.c.b16 %v3118, %v3117
        %v3124 = vpack.c.b16 %v3120, %v3119
        %3129 = vst [vmem:[#allocation2 + $0x200] sm:$0xff] %v3121
        %3130 = vst [vmem:[#allocation2 + $0x210] sm:$0xff] %v3122
        %3131 = vst [vmem:[#allocation2 + $0x220] sm:$0xff] %v3123
        %3132 = vst [vmem:[#allocation2 + $0x230] sm:$0xff] %v3124
        %s3133 = scalar_lea.vmem %s268, 32
        %v3134 = vld [vmem:[%s3133] sm:$0xff]
        %v3135 = vld [vmem:[%s3133 + $0x8] sm:$0xff]
        %v3136 = vld [vmem:[%s3133 + $0x10] sm:$0xff]
        %v3137 = vld [vmem:[%s3133 + $0x18] sm:$0xff]
        %3139 = vset.pattern.permute.xlu0 0
        %3140 = vperm.xlu0 %3139, %v3134
        %v3141 = vpop.permute.xlu0 %3140
        %3144 = vset.pattern.permute.xlu0 0
        %3145 = vperm.xlu0 %3144, %v3135
        %v3146 = vpop.permute.xlu0 %3145
        %3149 = vset.pattern.permute.xlu0 0
        %3150 = vperm.xlu0 %3149, %v3136
        %v3151 = vpop.permute.xlu0 %3150
        %3154 = vset.pattern.permute.xlu0 0
        %3155 = vperm.xlu0 %3154, %v3137
        %v3156 = vpop.permute.xlu0 %3155
        %v3158 = vadd.f32 %v2399, %v3141
        %v3159 = vadd.f32 %v2401, %v3141
        %v3160 = vadd.f32 %v2403, %v3146
        %v3161 = vadd.f32 %v2405, %v3146
        %v3162 = vadd.f32 %v2409, %v3151
        %v3163 = vadd.f32 %v2411, %v3151
        %v3164 = vadd.f32 %v2413, %v3156
        %v3165 = vadd.f32 %v2415, %v3156
        %v3166 = vadd.f32 %v3158, %v3159
        %3167 = vadd.xlane.f32.xlu0 %v3166
        %v3168 = vpop.xlane.xlu0 %3167
        %v3169 = vadd.f32 %v3160, %v3161
        %3170 = vadd.xlane.f32.xlu0 %v3169
        %v3171 = vpop.xlane.xlu0 %3170
        %v3172 = vadd.f32 %v3162, %v3163
        %3173 = vadd.xlane.f32.xlu0 %v3172
        %v3174 = vpop.xlane.xlu0 %3173
        %v3175 = vadd.f32 %v3164, %v3165
        %3176 = vadd.xlane.f32.xlu0 %v3175
        %v3177 = vpop.xlane.xlu0 %3176
        %v3178 = vmul.f32 %v3168, %v300
        %v3179 = vmul.f32 %v3171, %v300
        %v3180 = vmul.f32 %v3174, %v300
        %v3181 = vmul.f32 %v3177, %v300
        %v3182 = vmul.f32 %v3158, %v3158
        %v3183 = vmul.f32 %v3159, %v3159
        %v3184 = vmul.f32 %v3160, %v3160
        %v3185 = vmul.f32 %v3161, %v3161
        %v3186 = vmul.f32 %v3162, %v3162
        %v3187 = vmul.f32 %v3163, %v3163
        %v3188 = vmul.f32 %v3164, %v3164
        %v3189 = vmul.f32 %v3165, %v3165
        %v3190 = vadd.f32 %v3182, %v3183
        %3191 = vadd.xlane.f32.xlu0 %v3190
        %v3192 = vpop.xlane.xlu0 %3191
        %v3193 = vadd.f32 %v3184, %v3185
        %3194 = vadd.xlane.f32.xlu0 %v3193
        %v3195 = vpop.xlane.xlu0 %3194
        %v3196 = vadd.f32 %v3186, %v3187
        %3197 = vadd.xlane.f32.xlu0 %v3196
        %v3198 = vpop.xlane.xlu0 %3197
        %v3199 = vadd.f32 %v3188, %v3189
        %3200 = vadd.xlane.f32.xlu0 %v3199
        %v3201 = vpop.xlane.xlu0 %3200
        %v3202 = vmul.f32 %v3192, %v300
        %v3203 = vmul.f32 %v3195, %v300
        %v3204 = vmul.f32 %v3198, %v300
        %v3205 = vmul.f32 %v3201, %v300
        %v3206 = vmul.f32 %v3178, %v3178
        %v3207 = vmul.f32 %v3179, %v3179
        %v3208 = vmul.f32 %v3180, %v3180
        %v3209 = vmul.f32 %v3181, %v3181
        %v3210 = vsub.f32 %v3202, %v3206
        %v3211 = vsub.f32 %v3203, %v3207
        %v3212 = vsub.f32 %v3204, %v3208
        %v3213 = vsub.f32 %v3205, %v3209
        %v3214 = vsub.f32 %v3158, %v3178
        %v3215 = vsub.f32 %v3159, %v3178
        %v3216 = vsub.f32 %v3160, %v3179
        %v3217 = vsub.f32 %v3161, %v3179
        %v3218 = vsub.f32 %v3162, %v3180
        %v3219 = vsub.f32 %v3163, %v3180
        %v3220 = vsub.f32 %v3164, %v3181
        %v3221 = vsub.f32 %v3165, %v3181
        %v3222 = vadd.f32 %v3210, 1e-05
        %v3223 = vadd.f32 %v3211, 1e-05
        %v3224 = vadd.f32 %v3212, 1e-05
        %v3225 = vadd.f32 %v3213, 1e-05
        %v3226 = vrsqrt.pop %v3222
        %v3227 = vrsqrt.pop %v3223
        %v3228 = vrsqrt.pop %v3224
        %v3229 = vrsqrt.pop %v3225
        %v3230 = vmul.f32 %v3214, %v3226
        %v3231 = vmul.f32 %v3215, %v3226
        %v3232 = vmul.f32 %v3216, %v3227
        %v3233 = vmul.f32 %v3217, %v3227
        %v3234 = vmul.f32 %v3218, %v3228
        %v3235 = vmul.f32 %v3219, %v3228
        %v3236 = vmul.f32 %v3220, %v3229
        %v3237 = vmul.f32 %v3221, %v3229
        %v3238 = vmul.f32 %v3230, %v2523
        %v3239 = vmul.f32 %v3231, %v2523
        %v3240 = vmul.f32 %v3232, %v2527
        %v3241 = vmul.f32 %v3233, %v2527
        %v3242 = vmul.f32 %v3234, %v2531
        %v3243 = vmul.f32 %v3235, %v2531
        %v3244 = vmul.f32 %v3236, %v2535
        %v3245 = vmul.f32 %v3237, %v2535
        %v3246 = vadd.f32 %v3238, %v2547
        %v3247 = vadd.f32 %v3239, %v2547
        %v3248 = vadd.f32 %v3240, %v2551
        %v3249 = vadd.f32 %v3241, %v2551
        %v3250 = vadd.f32 %v3242, %v2555
        %v3251 = vadd.f32 %v3243, %v2555
        %v3252 = vadd.f32 %v3244, %v2559
        %v3253 = vadd.f32 %v3245, %v2559
        %v3254 = vxor.u32 %v3246, 2147483648
        %v3255 = vxor.u32 %v3247, 2147483648
        %v3256 = vxor.u32 %v3248, 2147483648
        %v3257 = vxor.u32 %v3249, 2147483648
        %v3258 = vxor.u32 %v3250, 2147483648
        %v3259 = vxor.u32 %v3251, 2147483648
        %v3260 = vxor.u32 %v3252, 2147483648
        %v3261 = vxor.u32 %v3253, 2147483648
        %v3262 = vmul.f32 %v3254, 1.442695
        %v3263 = vpow.pop %v3262
        %v3264 = vmul.f32 %v3255, 1.442695
        %v3265 = vpow.pop %v3264
        %v3266 = vmul.f32 %v3256, 1.442695
        %v3267 = vpow.pop %v3266
        %v3268 = vmul.f32 %v3257, 1.442695
        %v3269 = vpow.pop %v3268
        %v3270 = vmul.f32 %v3258, 1.442695
        %v3271 = vpow.pop %v3270
        %v3272 = vmul.f32 %v3259, 1.442695
        %v3273 = vpow.pop %v3272
        %v3274 = vmul.f32 %v3260, 1.442695
        %v3275 = vpow.pop %v3274
        %v3276 = vmul.f32 %v3261, 1.442695
        %v3277 = vpow.pop %v3276
        %v3278 = vadd.f32 %v3263, 1.0
        %v3279 = vadd.f32 %v3265, 1.0
        %v3280 = vadd.f32 %v3267, 1.0
        %v3281 = vadd.f32 %v3269, 1.0
        %v3282 = vadd.f32 %v3271, 1.0
        %v3283 = vadd.f32 %v3273, 1.0
        %v3284 = vadd.f32 %v3275, 1.0
        %v3285 = vadd.f32 %v3277, 1.0
        %v3286 = vrcp.pop %v3278
        %v3287 = vmul.f32 1.0, %v3286
        %v3288 = vrcp.pop %v3279
        %v3289 = vmul.f32 1.0, %v3288
        %v3290 = vrcp.pop %v3280
        %v3291 = vmul.f32 1.0, %v3290
        %v3292 = vrcp.pop %v3281
        %v3293 = vmul.f32 1.0, %v3292
        %v3294 = vrcp.pop %v3282
        %v3295 = vmul.f32 1.0, %v3294
        %v3296 = vrcp.pop %v3283
        %v3297 = vmul.f32 1.0, %v3296
        %v3298 = vrcp.pop %v3284
        %v3299 = vmul.f32 1.0, %v3298
        %v3300 = vrcp.pop %v3285
        %v3301 = vmul.f32 1.0, %v3300
        %v3302 = vmul.f32 %v3246, %v3287
        %v3303 = vmul.f32 %v3247, %v3289
        %v3304 = vmul.f32 %v3248, %v3291
        %v3305 = vmul.f32 %v3249, %v3293
        %v3306 = vmul.f32 %v3250, %v3295
        %v3307 = vmul.f32 %v3251, %v3297
        %v3308 = vmul.f32 %v3252, %v3299
        %v3309 = vmul.f32 %v3253, %v3301
        %3310 = vrot.lane.b32.xlu0 %v3302, 17
        %v3311 = vpop.permute.xlu0 %3310
        %3312 = vrot.lane.b32.xlu0 %v3304, 17
        %v3313 = vpop.permute.xlu0 %3312
        %3314 = vrot.lane.b32.xlu0 %v3306, 17
        %v3315 = vpop.permute.xlu0 %3314
        %3316 = vrot.lane.b32.xlu0 %v3308, 17
        %v3317 = vpop.permute.xlu0 %3316
        %3318 = vrot.lane.b32.xlu0 %v3303, 17
        %v3319 = vpop.permute.xlu0 %3318
        %3320 = vrot.lane.b32.xlu0 %v3305, 17
        %v3321 = vpop.permute.xlu0 %3320
        %3322 = vrot.lane.b32.xlu0 %v3307, 17
        %v3323 = vpop.permute.xlu0 %3322
        %3324 = vrot.lane.b32.xlu0 %v3309, 17
        %v3325 = vpop.permute.xlu0 %3324
        %v3326 = vsel %vm487, %v3311, %v3319
        %v3327 = vsel %vm487, %v3313, %v3321
        %v3328 = vsel %vm487, %v3315, %v3323
        %v3329 = vsel %vm487, %v3317, %v3325
        %v3330 = vsel %vm487, %v3319, %v3311
        %v3331 = vsel %vm487, %v3321, %v3313
        %v3332 = vsel %vm487, %v3323, %v3315
        %v3333 = vsel %vm487, %v3325, %v3317
        %v3334 = vmul.f32 %v3330, %v499
        %v3335 = vmul.f32 %v3326, %v503
        %v3336 = vmul.f32 %v3331, %v499
        %v3337 = vmul.f32 %v3327, %v503
        %v3338 = vmul.f32 %v3332, %v499
        %v3339 = vmul.f32 %v3328, %v503
        %v3340 = vmul.f32 %v3333, %v499
        %v3341 = vmul.f32 %v3329, %v503
        %v3342 = vpack.c.bf16 %v3336, %v3334
        %v3343 = vpack.c.bf16 %v3337, %v3335
        %v3344 = vpack.c.bf16 %v3340, %v3338
        %v3345 = vpack.c.bf16 %v3341, %v3339
        %v3350 = vunpack.c.l.b16 %v3342
        %v3351 = vunpack.c.l.b16 %v3343
        %v3352 = vunpack.c.h.b16 %v3342
        %v3353 = vunpack.c.h.b16 %v3343
        %v3354 = vunpack.c.l.b16 %v3344
        %v3355 = vunpack.c.l.b16 %v3345
        %v3356 = vunpack.c.h.b16 %v3344
        %v3357 = vunpack.c.h.b16 %v3345
        %v3358 = vpack.c.b16 %v3351, %v3350
        %v3359 = vpack.c.b16 %v3353, %v3352
        %v3360 = vpack.c.b16 %v3355, %v3354
        %v3361 = vpack.c.b16 %v3357, %v3356
        %3366 = vst [vmem:[#allocation2 + $0x8] sm:$0xff] %v3358
        %3367 = vst [vmem:[#allocation2 + $0x18] sm:$0xff] %v3359
        %3368 = vst [vmem:[#allocation2 + $0x28] sm:$0xff] %v3360
        %3369 = vst [vmem:[#allocation2 + $0x38] sm:$0xff] %v3361
        %3370 = vrot.lane.b32.xlu0 %v3302, 16
        %v3371 = vpop.permute.xlu0 %3370
        %3372 = vrot.lane.b32.xlu0 %v3304, 16
        %v3373 = vpop.permute.xlu0 %3372
        %3374 = vrot.lane.b32.xlu0 %v3306, 16
        %v3375 = vpop.permute.xlu0 %3374
        %3376 = vrot.lane.b32.xlu0 %v3308, 16
        %v3377 = vpop.permute.xlu0 %3376
        %3378 = vrot.lane.b32.xlu0 %v3303, 16
        %v3379 = vpop.permute.xlu0 %3378
        %3380 = vrot.lane.b32.xlu0 %v3305, 16
        %v3381 = vpop.permute.xlu0 %3380
        %3382 = vrot.lane.b32.xlu0 %v3307, 16
        %v3383 = vpop.permute.xlu0 %3382
        %3384 = vrot.lane.b32.xlu0 %v3309, 16
        %v3385 = vpop.permute.xlu0 %3384
        %v3386 = vsel %vm556, %v3371, %v3379
        %v3387 = vsel %vm556, %v3373, %v3381
        %v3388 = vsel %vm556, %v3375, %v3383
        %v3389 = vsel %vm556, %v3377, %v3385
        %v3390 = vsel %vm556, %v3379, %v3371
        %v3391 = vsel %vm556, %v3381, %v3373
        %v3392 = vsel %vm556, %v3383, %v3375
        %v3393 = vsel %vm556, %v3385, %v3377
        %v3394 = vmul.f32 %v3390, %v568
        %v3395 = vmul.f32 %v3386, %v572
        %v3396 = vmul.f32 %v3391, %v568
        %v3397 = vmul.f32 %v3387, %v572
        %v3398 = vmul.f32 %v3392, %v568
        %v3399 = vmul.f32 %v3388, %v572
        %v3400 = vmul.f32 %v3393, %v568
        %v3401 = vmul.f32 %v3389, %v572
        %v3402 = vpack.c.bf16 %v3396, %v3394
        %v3403 = vpack.c.bf16 %v3397, %v3395
        %v3404 = vpack.c.bf16 %v3400, %v3398
        %v3405 = vpack.c.bf16 %v3401, %v3399
        %v3410 = vunpack.c.l.b16 %v3402
        %v3411 = vunpack.c.l.b16 %v3403
        %v3412 = vunpack.c.h.b16 %v3402
        %v3413 = vunpack.c.h.b16 %v3403
        %v3414 = vunpack.c.l.b16 %v3404
        %v3415 = vunpack.c.l.b16 %v3405
        %v3416 = vunpack.c.h.b16 %v3404
        %v3417 = vunpack.c.h.b16 %v3405
        %v3418 = vpack.c.b16 %v3411, %v3410
        %v3419 = vpack.c.b16 %v3413, %v3412
        %v3420 = vpack.c.b16 %v3415, %v3414
        %v3421 = vpack.c.b16 %v3417, %v3416
        %3426 = vst [vmem:[#allocation2 + $0x48] sm:$0xff] %v3418
        %3427 = vst [vmem:[#allocation2 + $0x58] sm:$0xff] %v3419
        %3428 = vst [vmem:[#allocation2 + $0x68] sm:$0xff] %v3420
        %3429 = vst [vmem:[#allocation2 + $0x78] sm:$0xff] %v3421
        %3430 = vrot.lane.b32.xlu0 %v3302, 15
        %v3431 = vpop.permute.xlu0 %3430
        %3432 = vrot.lane.b32.xlu0 %v3304, 15
        %v3433 = vpop.permute.xlu0 %3432
        %3434 = vrot.lane.b32.xlu0 %v3306, 15
        %v3435 = vpop.permute.xlu0 %3434
        %3436 = vrot.lane.b32.xlu0 %v3308, 15
        %v3437 = vpop.permute.xlu0 %3436
        %3438 = vrot.lane.b32.xlu0 %v3303, 15
        %v3439 = vpop.permute.xlu0 %3438
        %3440 = vrot.lane.b32.xlu0 %v3305, 15
        %v3441 = vpop.permute.xlu0 %3440
        %3442 = vrot.lane.b32.xlu0 %v3307, 15
        %v3443 = vpop.permute.xlu0 %3442
        %3444 = vrot.lane.b32.xlu0 %v3309, 15
        %v3445 = vpop.permute.xlu0 %3444
        %v3446 = vsel %vm625, %v3431, %v3439
        %v3447 = vsel %vm625, %v3433, %v3441
        %v3448 = vsel %vm625, %v3435, %v3443
        %v3449 = vsel %vm625, %v3437, %v3445
        %v3450 = vsel %vm625, %v3439, %v3431
        %v3451 = vsel %vm625, %v3441, %v3433
        %v3452 = vsel %vm625, %v3443, %v3435
        %v3453 = vsel %vm625, %v3445, %v3437
        %v3454 = vmul.f32 %v3450, %v637
        %v3455 = vmul.f32 %v3446, %v641
        %v3456 = vmul.f32 %v3451, %v637
        %v3457 = vmul.f32 %v3447, %v641
        %v3458 = vmul.f32 %v3452, %v637
        %v3459 = vmul.f32 %v3448, %v641
        %v3460 = vmul.f32 %v3453, %v637
        %v3461 = vmul.f32 %v3449, %v641
        %v3462 = vpack.c.bf16 %v3456, %v3454
        %v3463 = vpack.c.bf16 %v3457, %v3455
        %v3464 = vpack.c.bf16 %v3460, %v3458
        %v3465 = vpack.c.bf16 %v3461, %v3459
        %v3470 = vunpack.c.l.b16 %v3462
        %v3471 = vunpack.c.l.b16 %v3463
        %v3472 = vunpack.c.h.b16 %v3462
        %v3473 = vunpack.c.h.b16 %v3463
        %v3474 = vunpack.c.l.b16 %v3464
        %v3475 = vunpack.c.l.b16 %v3465
        %v3476 = vunpack.c.h.b16 %v3464
        %v3477 = vunpack.c.h.b16 %v3465
        %v3478 = vpack.c.b16 %v3471, %v3470
        %v3479 = vpack.c.b16 %v3473, %v3472
        %v3480 = vpack.c.b16 %v3475, %v3474
        %v3481 = vpack.c.b16 %v3477, %v3476
        %3486 = vst [vmem:[#allocation2 + $0x88] sm:$0xff] %v3478
        %3487 = vst [vmem:[#allocation2 + $0x98] sm:$0xff] %v3479
        %3488 = vst [vmem:[#allocation2 + $0xa8] sm:$0xff] %v3480
        %3489 = vst [vmem:[#allocation2 + $0xb8] sm:$0xff] %v3481
        %3490 = vrot.lane.b32.xlu0 %v3302, 1
        %v3491 = vpop.permute.xlu0 %3490
        %3492 = vrot.lane.b32.xlu0 %v3304, 1
        %v3493 = vpop.permute.xlu0 %3492
        %3494 = vrot.lane.b32.xlu0 %v3306, 1
        %v3495 = vpop.permute.xlu0 %3494
        %3496 = vrot.lane.b32.xlu0 %v3308, 1
        %v3497 = vpop.permute.xlu0 %3496
        %3498 = vrot.lane.b32.xlu0 %v3303, 1
        %v3499 = vpop.permute.xlu0 %3498
        %3500 = vrot.lane.b32.xlu0 %v3305, 1
        %v3501 = vpop.permute.xlu0 %3500
        %3502 = vrot.lane.b32.xlu0 %v3307, 1
        %v3503 = vpop.permute.xlu0 %3502
        %3504 = vrot.lane.b32.xlu0 %v3309, 1
        %v3505 = vpop.permute.xlu0 %3504
        %v3506 = vsel %vm694, %v3491, %v3499
        %v3507 = vsel %vm694, %v3493, %v3501
        %v3508 = vsel %vm694, %v3495, %v3503
        %v3509 = vsel %vm694, %v3497, %v3505
        %v3510 = vsel %vm694, %v3499, %v3491
        %v3511 = vsel %vm694, %v3501, %v3493
        %v3512 = vsel %vm694, %v3503, %v3495
        %v3513 = vsel %vm694, %v3505, %v3497
        %v3514 = vmul.f32 %v3510, %v706
        %v3515 = vmul.f32 %v3506, %v710
        %v3516 = vmul.f32 %v3511, %v706
        %v3517 = vmul.f32 %v3507, %v710
        %v3518 = vmul.f32 %v3512, %v706
        %v3519 = vmul.f32 %v3508, %v710
        %v3520 = vmul.f32 %v3513, %v706
        %v3521 = vmul.f32 %v3509, %v710
        %v3522 = vpack.c.bf16 %v3516, %v3514
        %v3523 = vpack.c.bf16 %v3517, %v3515
        %v3524 = vpack.c.bf16 %v3520, %v3518
        %v3525 = vpack.c.bf16 %v3521, %v3519
        %v3530 = vunpack.c.l.b16 %v3522
        %v3531 = vunpack.c.l.b16 %v3523
        %v3532 = vunpack.c.h.b16 %v3522
        %v3533 = vunpack.c.h.b16 %v3523
        %v3534 = vunpack.c.l.b16 %v3524
        %v3535 = vunpack.c.l.b16 %v3525
        %v3536 = vunpack.c.h.b16 %v3524
        %v3537 = vunpack.c.h.b16 %v3525
        %v3538 = vpack.c.b16 %v3531, %v3530
        %v3539 = vpack.c.b16 %v3533, %v3532
        %v3540 = vpack.c.b16 %v3535, %v3534
        %v3541 = vpack.c.b16 %v3537, %v3536
        %3546 = vst [vmem:[#allocation2 + $0xc8] sm:$0xff] %v3538
        %3547 = vst [vmem:[#allocation2 + $0xd8] sm:$0xff] %v3539
        %3548 = vst [vmem:[#allocation2 + $0xe8] sm:$0xff] %v3540
        %3549 = vst [vmem:[#allocation2 + $0xf8] sm:$0xff] %v3541
        %v3550 = vpack.c.bf16 %v3304, %v3302
        %v3551 = vpack.c.bf16 %v3305, %v3303
        %v3552 = vpack.c.bf16 %v3308, %v3306
        %v3553 = vpack.c.bf16 %v3309, %v3307
        %v3558 = vunpack.c.l.b16 %v3550
        %v3559 = vunpack.c.l.b16 %v3551
        %v3560 = vunpack.c.h.b16 %v3550
        %v3561 = vunpack.c.h.b16 %v3551
        %v3562 = vunpack.c.l.b16 %v3552
        %v3563 = vunpack.c.l.b16 %v3553
        %v3564 = vunpack.c.h.b16 %v3552
        %v3565 = vunpack.c.h.b16 %v3553
        %v3566 = vpack.c.b16 %v3559, %v3558
        %v3567 = vpack.c.b16 %v3561, %v3560
        %v3568 = vpack.c.b16 %v3563, %v3562
        %v3569 = vpack.c.b16 %v3565, %v3564
        %3574 = vst [vmem:[#allocation2 + $0x108] sm:$0xff] %v3566
        %3575 = vst [vmem:[#allocation2 + $0x118] sm:$0xff] %v3567
        %3576 = vst [vmem:[#allocation2 + $0x128] sm:$0xff] %v3568
        %3577 = vst [vmem:[#allocation2 + $0x138] sm:$0xff] %v3569
        %3578 = vrot.lane.b32.xlu0 %v3302, 127
        %v3579 = vpop.permute.xlu0 %3578
        %3580 = vrot.lane.b32.xlu0 %v3304, 127
        %v3581 = vpop.permute.xlu0 %3580
        %3582 = vrot.lane.b32.xlu0 %v3306, 127
        %v3583 = vpop.permute.xlu0 %3582
        %3584 = vrot.lane.b32.xlu0 %v3308, 127
        %v3585 = vpop.permute.xlu0 %3584
        %3586 = vrot.lane.b32.xlu0 %v3303, 127
        %v3587 = vpop.permute.xlu0 %3586
        %3588 = vrot.lane.b32.xlu0 %v3305, 127
        %v3589 = vpop.permute.xlu0 %3588
        %3590 = vrot.lane.b32.xlu0 %v3307, 127
        %v3591 = vpop.permute.xlu0 %3590
        %3592 = vrot.lane.b32.xlu0 %v3309, 127
        %v3593 = vpop.permute.xlu0 %3592
        %v3594 = vsel %vm791, %v3579, %v3587
        %v3595 = vsel %vm791, %v3581, %v3589
        %v3596 = vsel %vm791, %v3583, %v3591
        %v3597 = vsel %vm791, %v3585, %v3593
        %v3598 = vsel %vm791, %v3587, %v3579
        %v3599 = vsel %vm791, %v3589, %v3581
        %v3600 = vsel %vm791, %v3591, %v3583
        %v3601 = vsel %vm791, %v3593, %v3585
        %v3602 = vmul.f32 %v3594, %v803
        %v3603 = vmul.f32 %v3598, %v807
        %v3604 = vmul.f32 %v3595, %v803
        %v3605 = vmul.f32 %v3599, %v807
        %v3606 = vmul.f32 %v3596, %v803
        %v3607 = vmul.f32 %v3600, %v807
        %v3608 = vmul.f32 %v3597, %v803
        %v3609 = vmul.f32 %v3601, %v807
        %v3610 = vpack.c.bf16 %v3604, %v3602
        %v3611 = vpack.c.bf16 %v3605, %v3603
        %v3612 = vpack.c.bf16 %v3608, %v3606
        %v3613 = vpack.c.bf16 %v3609, %v3607
        %v3618 = vunpack.c.l.b16 %v3610
        %v3619 = vunpack.c.l.b16 %v3611
        %v3620 = vunpack.c.h.b16 %v3610
        %v3621 = vunpack.c.h.b16 %v3611
        %v3622 = vunpack.c.l.b16 %v3612
        %v3623 = vunpack.c.l.b16 %v3613
        %v3624 = vunpack.c.h.b16 %v3612
        %v3625 = vunpack.c.h.b16 %v3613
        %v3626 = vpack.c.b16 %v3619, %v3618
        %v3627 = vpack.c.b16 %v3621, %v3620
        %v3628 = vpack.c.b16 %v3623, %v3622
        %v3629 = vpack.c.b16 %v3625, %v3624
        %3634 = vst [vmem:[#allocation2 + $0x148] sm:$0xff] %v3626
        %3635 = vst [vmem:[#allocation2 + $0x158] sm:$0xff] %v3627
        %3636 = vst [vmem:[#allocation2 + $0x168] sm:$0xff] %v3628
        %3637 = vst [vmem:[#allocation2 + $0x178] sm:$0xff] %v3629
        %3638 = vrot.lane.b32.xlu0 %v3302, 113
        %v3639 = vpop.permute.xlu0 %3638
        %3640 = vrot.lane.b32.xlu0 %v3304, 113
        %v3641 = vpop.permute.xlu0 %3640
        %3642 = vrot.lane.b32.xlu0 %v3306, 113
        %v3643 = vpop.permute.xlu0 %3642
        %3644 = vrot.lane.b32.xlu0 %v3308, 113
        %v3645 = vpop.permute.xlu0 %3644
        %3646 = vrot.lane.b32.xlu0 %v3303, 113
        %v3647 = vpop.permute.xlu0 %3646
        %3648 = vrot.lane.b32.xlu0 %v3305, 113
        %v3649 = vpop.permute.xlu0 %3648
        %3650 = vrot.lane.b32.xlu0 %v3307, 113
        %v3651 = vpop.permute.xlu0 %3650
        %3652 = vrot.lane.b32.xlu0 %v3309, 113
        %v3653 = vpop.permute.xlu0 %3652
        %v3654 = vsel %vm860, %v3639, %v3647
        %v3655 = vsel %vm860, %v3641, %v3649
        %v3656 = vsel %vm860, %v3643, %v3651
        %v3657 = vsel %vm860, %v3645, %v3653
        %v3658 = vsel %vm860, %v3647, %v3639
        %v3659 = vsel %vm860, %v3649, %v3641
        %v3660 = vsel %vm860, %v3651, %v3643
        %v3661 = vsel %vm860, %v3653, %v3645
        %v3662 = vmul.f32 %v3654, %v872
        %v3663 = vmul.f32 %v3658, %v876
        %v3664 = vmul.f32 %v3655, %v872
        %v3665 = vmul.f32 %v3659, %v876
        %v3666 = vmul.f32 %v3656, %v872
        %v3667 = vmul.f32 %v3660, %v876
        %v3668 = vmul.f32 %v3657, %v872
        %v3669 = vmul.f32 %v3661, %v876
        %v3670 = vpack.c.bf16 %v3664, %v3662
        %v3671 = vpack.c.bf16 %v3665, %v3663
        %v3672 = vpack.c.bf16 %v3668, %v3666
        %v3673 = vpack.c.bf16 %v3669, %v3667
        %v3678 = vunpack.c.l.b16 %v3670
        %v3679 = vunpack.c.l.b16 %v3671
        %v3680 = vunpack.c.h.b16 %v3670
        %v3681 = vunpack.c.h.b16 %v3671
        %v3682 = vunpack.c.l.b16 %v3672
        %v3683 = vunpack.c.l.b16 %v3673
        %v3684 = vunpack.c.h.b16 %v3672
        %v3685 = vunpack.c.h.b16 %v3673
        %v3686 = vpack.c.b16 %v3679, %v3678
        %v3687 = vpack.c.b16 %v3681, %v3680
        %v3688 = vpack.c.b16 %v3683, %v3682
        %v3689 = vpack.c.b16 %v3685, %v3684
        %3694 = vst [vmem:[#allocation2 + $0x188] sm:$0xff] %v3686
        %3695 = vst [vmem:[#allocation2 + $0x198] sm:$0xff] %v3687
        %3696 = vst [vmem:[#allocation2 + $0x1a8] sm:$0xff] %v3688
        %3697 = vst [vmem:[#allocation2 + $0x1b8] sm:$0xff] %v3689
        %3698 = vrot.lane.b32.xlu0 %v3302, 112
        %v3699 = vpop.permute.xlu0 %3698
        %3700 = vrot.lane.b32.xlu0 %v3304, 112
        %v3701 = vpop.permute.xlu0 %3700
        %3702 = vrot.lane.b32.xlu0 %v3306, 112
        %v3703 = vpop.permute.xlu0 %3702
        %3704 = vrot.lane.b32.xlu0 %v3308, 112
        %v3705 = vpop.permute.xlu0 %3704
        %3706 = vrot.lane.b32.xlu0 %v3303, 112
        %v3707 = vpop.permute.xlu0 %3706
        %3708 = vrot.lane.b32.xlu0 %v3305, 112
        %v3709 = vpop.permute.xlu0 %3708
        %3710 = vrot.lane.b32.xlu0 %v3307, 112
        %v3711 = vpop.permute.xlu0 %3710
        %3712 = vrot.lane.b32.xlu0 %v3309, 112
        %v3713 = vpop.permute.xlu0 %3712
        %v3714 = vsel %vm929, %v3699, %v3707
        %v3715 = vsel %vm929, %v3701, %v3709
        %v3716 = vsel %vm929, %v3703, %v3711
        %v3717 = vsel %vm929, %v3705, %v3713
        %v3718 = vsel %vm929, %v3707, %v3699
        %v3719 = vsel %vm929, %v3709, %v3701
        %v3720 = vsel %vm929, %v3711, %v3703
        %v3721 = vsel %vm929, %v3713, %v3705
        %v3722 = vmul.f32 %v3714, %v941
        %v3723 = vmul.f32 %v3718, %v945
        %v3724 = vmul.f32 %v3715, %v941
        %v3725 = vmul.f32 %v3719, %v945
        %v3726 = vmul.f32 %v3716, %v941
        %v3727 = vmul.f32 %v3720, %v945
        %v3728 = vmul.f32 %v3717, %v941
        %v3729 = vmul.f32 %v3721, %v945
        %v3730 = vpack.c.bf16 %v3724, %v3722
        %v3731 = vpack.c.bf16 %v3725, %v3723
        %v3732 = vpack.c.bf16 %v3728, %v3726
        %v3733 = vpack.c.bf16 %v3729, %v3727
        %v3738 = vunpack.c.l.b16 %v3730
        %v3739 = vunpack.c.l.b16 %v3731
        %v3740 = vunpack.c.h.b16 %v3730
        %v3741 = vunpack.c.h.b16 %v3731
        %v3742 = vunpack.c.l.b16 %v3732
        %v3743 = vunpack.c.l.b16 %v3733
        %v3744 = vunpack.c.h.b16 %v3732
        %v3745 = vunpack.c.h.b16 %v3733
        %v3746 = vpack.c.b16 %v3739, %v3738
        %v3747 = vpack.c.b16 %v3741, %v3740
        %v3748 = vpack.c.b16 %v3743, %v3742
        %v3749 = vpack.c.b16 %v3745, %v3744
        %3754 = vst [vmem:[#allocation2 + $0x1c8] sm:$0xff] %v3746
        %3755 = vst [vmem:[#allocation2 + $0x1d8] sm:$0xff] %v3747
        %3756 = vst [vmem:[#allocation2 + $0x1e8] sm:$0xff] %v3748
        %3757 = vst [vmem:[#allocation2 + $0x1f8] sm:$0xff] %v3749
        %3758 = vrot.lane.b32.xlu0 %v3302, 111
        %v3759 = vpop.permute.xlu0 %3758
        %3760 = vrot.lane.b32.xlu0 %v3304, 111
        %v3761 = vpop.permute.xlu0 %3760
        %3762 = vrot.lane.b32.xlu0 %v3306, 111
        %v3763 = vpop.permute.xlu0 %3762
        %3764 = vrot.lane.b32.xlu0 %v3308, 111
        %v3765 = vpop.permute.xlu0 %3764
        %3766 = vrot.lane.b32.xlu0 %v3303, 111
        %v3767 = vpop.permute.xlu0 %3766
        %3768 = vrot.lane.b32.xlu0 %v3305, 111
        %v3769 = vpop.permute.xlu0 %3768
        %3770 = vrot.lane.b32.xlu0 %v3307, 111
        %v3771 = vpop.permute.xlu0 %3770
        %3772 = vrot.lane.b32.xlu0 %v3309, 111
        %v3773 = vpop.permute.xlu0 %3772
        %v3774 = vsel %vm998, %v3759, %v3767
        %v3775 = vsel %vm998, %v3761, %v3769
        %v3776 = vsel %vm998, %v3763, %v3771
        %v3777 = vsel %vm998, %v3765, %v3773
        %v3778 = vsel %vm998, %v3767, %v3759
        %v3779 = vsel %vm998, %v3769, %v3761
        %v3780 = vsel %vm998, %v3771, %v3763
        %v3781 = vsel %vm998, %v3773, %v3765
        %v3782 = vmul.f32 %v3774, %v1010
        %v3783 = vmul.f32 %v3778, %v1014
        %v3784 = vmul.f32 %v3775, %v1010
        %v3785 = vmul.f32 %v3779, %v1014
        %v3786 = vmul.f32 %v3776, %v1010
        %v3787 = vmul.f32 %v3780, %v1014
        %v3788 = vmul.f32 %v3777, %v1010
        %v3789 = vmul.f32 %v3781, %v1014
        %v3790 = vpack.c.bf16 %v3784, %v3782
        %v3791 = vpack.c.bf16 %v3785, %v3783
        %v3792 = vpack.c.bf16 %v3788, %v3786
        %v3793 = vpack.c.bf16 %v3789, %v3787
        %v3798 = vunpack.c.l.b16 %v3790
        %v3799 = vunpack.c.l.b16 %v3791
        %v3800 = vunpack.c.h.b16 %v3790
        %v3801 = vunpack.c.h.b16 %v3791
        %v3802 = vunpack.c.l.b16 %v3792
        %v3803 = vunpack.c.l.b16 %v3793
        %v3804 = vunpack.c.h.b16 %v3792
        %v3805 = vunpack.c.h.b16 %v3793
        %v3806 = vpack.c.b16 %v3799, %v3798
        %v3807 = vpack.c.b16 %v3801, %v3800
        %v3808 = vpack.c.b16 %v3803, %v3802
        %v3809 = vpack.c.b16 %v3805, %v3804
        %3814 = vst [vmem:[#allocation2 + $0x208] sm:$0xff] %v3806
        %3815 = vst [vmem:[#allocation2 + $0x218] sm:$0xff] %v3807
        %3816 = vst [vmem:[#allocation2 + $0x228] sm:$0xff] %v3808
        %3817 = vst [vmem:[#allocation2 + $0x238] sm:$0xff] %v3809
        %s3818 = scalar_lea.vmem %s4, 48
        %v3819 = vld [vmem:[%s3818] sm:$0xff]
        %v3820 = vld [vmem:[%s3818 + $0x8] sm:$0xf]
        %v3821 = vld [vmem:[%s3818 + $0xc] sm:$0xff]
        %v3822 = vld [vmem:[%s3818 + $0x14] sm:$0xf]
        %v3823 = vld [vmem:[%s3818 + $0x18] sm:$0xff]
        %v3824 = vld [vmem:[%s3818 + $0x20] sm:$0xf]
        %v3825 = vld [vmem:[%s3818 + $0x24] sm:$0xff]
        %v3826 = vld [vmem:[%s3818 + $0x2c] sm:$0xf]
        %v3827 = vld [vmem:[#allocation2] sm:$0xff]
        %v3828 = vld [vmem:[#allocation2 + $0x8] sm:$0xff]
        %v3829 = vld [vmem:[#allocation2 + $0x10] sm:$0xff]
        %v3830 = vld [vmem:[#allocation2 + $0x18] sm:$0xff]
        %v3831 = vld [vmem:[#allocation2 + $0x20] sm:$0xff]
        %v3832 = vld [vmem:[#allocation2 + $0x28] sm:$0xff]
        %v3833 = vld [vmem:[#allocation2 + $0x30] sm:$0xff]
        %v3834 = vld [vmem:[#allocation2 + $0x38] sm:$0xff]
        %v3835 = vld [vmem:[#allocation2 + $0x40] sm:$0xff]
        %v3836 = vld [vmem:[#allocation2 + $0x48] sm:$0xff]
        %v3837 = vld [vmem:[#allocation2 + $0x50] sm:$0xff]
        %v3838 = vld [vmem:[#allocation2 + $0x58] sm:$0xff]
        %v3839 = vld [vmem:[#allocation2 + $0x60] sm:$0xff]
        %v3840 = vld [vmem:[#allocation2 + $0x68] sm:$0xff]
        %v3841 = vld [vmem:[#allocation2 + $0x70] sm:$0xff]
        %v3842 = vld [vmem:[#allocation2 + $0x78] sm:$0xff]
        %v3843 = vld [vmem:[#allocation2 + $0x80] sm:$0xff]
        %v3844 = vld [vmem:[#allocation2 + $0x88] sm:$0xff]
        %v3845 = vld [vmem:[#allocation2 + $0x90] sm:$0xff]
        %v3846 = vld [vmem:[#allocation2 + $0x98] sm:$0xff]
        %v3847 = vld [vmem:[#allocation2 + $0xa0] sm:$0xff]
        %v3848 = vld [vmem:[#allocation2 + $0xa8] sm:$0xff]
        %v3849 = vld [vmem:[#allocation2 + $0xb0] sm:$0xff]
        %v3850 = vld [vmem:[#allocation2 + $0xb8] sm:$0xff]
        %v3851 = vld [vmem:[#allocation2 + $0xc0] sm:$0xff]
        %v3852 = vld [vmem:[#allocation2 + $0xc8] sm:$0xff]
        %v3853 = vld [vmem:[#allocation2 + $0xd0] sm:$0xff]
        %v3854 = vld [vmem:[#allocation2 + $0xd8] sm:$0xff]
        %v3855 = vld [vmem:[#allocation2 + $0xe0] sm:$0xff]
        %v3856 = vld [vmem:[#allocation2 + $0xe8] sm:$0xff]
        %v3857 = vld [vmem:[#allocation2 + $0xf0] sm:$0xff]
        %v3858 = vld [vmem:[#allocation2 + $0xf8] sm:$0xff]
        %v3859 = vld [vmem:[#allocation2 + $0x100] sm:$0xff]
        %v3860 = vld [vmem:[#allocation2 + $0x108] sm:$0xff]
        %v3861 = vld [vmem:[#allocation2 + $0x110] sm:$0xff]
        %v3862 = vld [vmem:[#allocation2 + $0x118] sm:$0xff]
        %v3863 = vld [vmem:[#allocation2 + $0x120] sm:$0xff]
        %v3864 = vld [vmem:[#allocation2 + $0x128] sm:$0xff]
        %v3865 = vld [vmem:[#allocation2 + $0x130] sm:$0xff]
        %v3866 = vld [vmem:[#allocation2 + $0x138] sm:$0xff]
        %v3867 = vld [vmem:[#allocation2 + $0x140] sm:$0xff]
        %v3868 = vld [vmem:[#allocation2 + $0x148] sm:$0xff]
        %v3869 = vld [vmem:[#allocation2 + $0x150] sm:$0xff]
        %v3870 = vld [vmem:[#allocation2 + $0x158] sm:$0xff]
        %v3871 = vld [vmem:[#allocation2 + $0x160] sm:$0xff]
        %v3872 = vld [vmem:[#allocation2 + $0x168] sm:$0xff]
        %v3873 = vld [vmem:[#allocation2 + $0x170] sm:$0xff]
        %v3874 = vld [vmem:[#allocation2 + $0x178] sm:$0xff]
        %v3875 = vld [vmem:[#allocation2 + $0x180] sm:$0xff]
        %v3876 = vld [vmem:[#allocation2 + $0x188] sm:$0xff]
        %v3877 = vld [vmem:[#allocation2 + $0x190] sm:$0xff]
        %v3878 = vld [vmem:[#allocation2 + $0x198] sm:$0xff]
        %v3879 = vld [vmem:[#allocation2 + $0x1a0] sm:$0xff]
        %v3880 = vld [vmem:[#allocation2 + $0x1a8] sm:$0xff]
        %v3881 = vld [vmem:[#allocation2 + $0x1b0] sm:$0xff]
        %v3882 = vld [vmem:[#allocation2 + $0x1b8] sm:$0xff]
        %v3883 = vld [vmem:[#allocation2 + $0x1c0] sm:$0xff]
        %v3884 = vld [vmem:[#allocation2 + $0x1c8] sm:$0xff]
        %v3885 = vld [vmem:[#allocation2 + $0x1d0] sm:$0xff]
        %v3886 = vld [vmem:[#allocation2 + $0x1d8] sm:$0xff]
        %v3887 = vld [vmem:[#allocation2 + $0x1e0] sm:$0xff]
        %v3888 = vld [vmem:[#allocation2 + $0x1e8] sm:$0xff]
        %v3889 = vld [vmem:[#allocation2 + $0x1f0] sm:$0xff]
        %v3890 = vld [vmem:[#allocation2 + $0x1f8] sm:$0xff]
        %v3891 = vld [vmem:[#allocation2 + $0x200] sm:$0xff]
        %v3892 = vld [vmem:[#allocation2 + $0x208] sm:$0xff]
        %v3893 = vld [vmem:[#allocation2 + $0x210] sm:$0xff]
        %v3894 = vld [vmem:[#allocation2 + $0x218] sm:$0xff]
        %v3895 = vld [vmem:[#allocation2 + $0x220] sm:$0xff]
        %v3896 = vld [vmem:[#allocation2 + $0x228] sm:$0xff]
        %v3897 = vld [vmem:[#allocation2 + $0x230] sm:$0xff]
        %v3898 = vld [vmem:[#allocation2 + $0x238] sm:$0xff]
        %3899 = vset.pattern.permute.xlu0 5
        %3900 = vperm.xlu0 %3899, %v272
        %v3901 = vpop.permute.xlu0 %3900
        %3903 = vset.pattern.permute.xlu0 5
        %3904 = vperm.xlu0 %3903, %v273
        %v3905 = vpop.permute.xlu0 %3904
        %3907 = vset.pattern.permute.xlu0 5
        %3908 = vperm.xlu0 %3907, %v274
        %v3909 = vpop.permute.xlu0 %3908
        %3911 = vset.pattern.permute.xlu0 5
        %3912 = vperm.xlu0 %3911, %v275
        %v3913 = vpop.permute.xlu0 %3912
        %v3923 = vunpack.c.l.b16 %v3819
        %v3924 = vunpack.c.h.b16 %v3819
        %v3925 = vunpack.c.l.b16 %v3820
        %v3926 = vunpack.c.l.b16 %v3821
        %v3927 = vunpack.c.h.b16 %v3821
        %v3928 = vunpack.c.l.b16 %v3822
        %v3929 = vunpack.c.l.b16 %v3823
        %v3930 = vunpack.c.h.b16 %v3823
        %v3931 = vunpack.c.l.b16 %v3824
        %v3932 = vunpack.c.l.b16 %v3825
        %v3933 = vunpack.c.h.b16 %v3825
        %v3934 = vunpack.c.l.b16 %v3826
        %v3935 = vpack.c.b16 %v3926, %v3923
        %v3936 = vpack.c.b16 %v3927, %v3924
        %v3937 = vpack.c.b16 %v3928, %v3925
        %v3938 = vpack.c.b16 %v3932, %v3929
        %v3939 = vpack.c.b16 %v3933, %v3930
        %v3940 = vpack.c.b16 %v3934, %v3931
        %v4017 = vunpack.c.l.b16 %v3827
        %v4018 = vunpack.c.h.b16 %v3827
        %v4019 = vunpack.c.l.b16 %v3828
        %v4020 = vunpack.c.h.b16 %v3828
        %v4021 = vunpack.c.l.b16 %v3829
        %v4022 = vunpack.c.h.b16 %v3829
        %v4023 = vunpack.c.l.b16 %v3830
        %v4024 = vunpack.c.h.b16 %v3830
        %v4025 = vunpack.c.l.b16 %v3831
        %v4026 = vunpack.c.h.b16 %v3831
        %v4027 = vunpack.c.l.b16 %v3832
        %v4028 = vunpack.c.h.b16 %v3832
        %v4029 = vunpack.c.l.b16 %v3833
        %v4030 = vunpack.c.h.b16 %v3833
        %v4031 = vunpack.c.l.b16 %v3834
        %v4032 = vunpack.c.h.b16 %v3834
        %v4033 = vunpack.c.l.b16 %v3835
        %v4034 = vunpack.c.h.b16 %v3835
        %v4035 = vunpack.c.l.b16 %v3836
        %v4036 = vunpack.c.h.b16 %v3836
        %v4037 = vunpack.c.l.b16 %v3837
        %v4038 = vunpack.c.h.b16 %v3837
        %v4039 = vunpack.c.l.b16 %v3838
        %v4040 = vunpack.c.h.b16 %v3838
        %v4041 = vunpack.c.l.b16 %v3839
        %v4042 = vunpack.c.h.b16 %v3839
        %v4043 = vunpack.c.l.b16 %v3840
        %v4044 = vunpack.c.h.b16 %v3840
        %v4045 = vunpack.c.l.b16 %v3841
        %v4046 = vunpack.c.h.b16 %v3841
        %v4047 = vunpack.c.l.b16 %v3842
        %v4048 = vunpack.c.h.b16 %v3842
        %v4049 = vunpack.c.l.b16 %v3843
        %v4050 = vunpack.c.h.b16 %v3843
        %v4051 = vunpack.c.l.b16 %v3844
        %v4052 = vunpack.c.h.b16 %v3844
        %v4053 = vunpack.c.l.b16 %v3845
        %v4054 = vunpack.c.h.b16 %v3845
        %v4055 = vunpack.c.l.b16 %v3846
        %v4056 = vunpack.c.h.b16 %v3846
        %v4057 = vunpack.c.l.b16 %v3847
        %v4058 = vunpack.c.h.b16 %v3847
        %v4059 = vunpack.c.l.b16 %v3848
        %v4060 = vunpack.c.h.b16 %v3848
        %v4061 = vunpack.c.l.b16 %v3849
        %v4062 = vunpack.c.h.b16 %v3849
        %v4063 = vunpack.c.l.b16 %v3850
        %v4064 = vunpack.c.h.b16 %v3850
        %v4065 = vunpack.c.l.b16 %v3851
        %v4066 = vunpack.c.h.b16 %v3851
        %v4067 = vunpack.c.l.b16 %v3852
        %v4068 = vunpack.c.h.b16 %v3852
        %v4069 = vunpack.c.l.b16 %v3853
        %v4070 = vunpack.c.h.b16 %v3853
        %v4071 = vunpack.c.l.b16 %v3854
        %v4072 = vunpack.c.h.b16 %v3854
        %v4073 = vunpack.c.l.b16 %v3855
        %v4074 = vunpack.c.h.b16 %v3855
        %v4075 = vunpack.c.l.b16 %v3856
        %v4076 = vunpack.c.h.b16 %v3856
        %v4077 = vunpack.c.l.b16 %v3857
        %v4078 = vunpack.c.h.b16 %v3857
        %v4079 = vunpack.c.l.b16 %v3858
        %v4080 = vunpack.c.h.b16 %v3858
        %v4081 = vunpack.c.l.b16 %v3859
        %v4082 = vunpack.c.h.b16 %v3859
        %v4083 = vunpack.c.l.b16 %v3860
        %v4084 = vunpack.c.h.b16 %v3860
        %v4085 = vunpack.c.l.b16 %v3861
        %v4086 = vunpack.c.h.b16 %v3861
        %v4087 = vunpack.c.l.b16 %v3862
        %v4088 = vunpack.c.h.b16 %v3862
        %v4089 = vunpack.c.l.b16 %v3863
        %v4090 = vunpack.c.h.b16 %v3863
        %v4091 = vunpack.c.l.b16 %v3864
        %v4092 = vunpack.c.h.b16 %v3864
        %v4093 = vunpack.c.l.b16 %v3865
        %v4094 = vunpack.c.h.b16 %v3865
        %v4095 = vunpack.c.l.b16 %v3866
        %v4096 = vunpack.c.h.b16 %v3866
        %v4097 = vunpack.c.l.b16 %v3867
        %v4098 = vunpack.c.h.b16 %v3867
        %v4099 = vunpack.c.l.b16 %v3868
        %v4100 = vunpack.c.h.b16 %v3868
        %v4101 = vunpack.c.l.b16 %v3869
        %v4102 = vunpack.c.h.b16 %v3869
        %v4103 = vunpack.c.l.b16 %v3870
        %v4104 = vunpack.c.h.b16 %v3870
        %v4105 = vunpack.c.l.b16 %v3871
        %v4106 = vunpack.c.h.b16 %v3871
        %v4107 = vunpack.c.l.b16 %v3872
        %v4108 = vunpack.c.h.b16 %v3872
        %v4109 = vunpack.c.l.b16 %v3873
        %v4110 = vunpack.c.h.b16 %v3873
        %v4111 = vunpack.c.l.b16 %v3874
        %v4112 = vunpack.c.h.b16 %v3874
        %v4113 = vunpack.c.l.b16 %v3875
        %v4114 = vunpack.c.h.b16 %v3875
        %v4115 = vunpack.c.l.b16 %v3876
        %v4116 = vunpack.c.h.b16 %v3876
        %v4117 = vunpack.c.l.b16 %v3877
        %v4118 = vunpack.c.h.b16 %v3877
        %v4119 = vunpack.c.l.b16 %v3878
        %v4120 = vunpack.c.h.b16 %v3878
        %v4121 = vunpack.c.l.b16 %v3879
        %v4122 = vunpack.c.h.b16 %v3879
        %v4123 = vunpack.c.l.b16 %v3880
        %v4124 = vunpack.c.h.b16 %v3880
        %v4125 = vunpack.c.l.b16 %v3881
        %v4126 = vunpack.c.h.b16 %v3881
        %v4127 = vunpack.c.l.b16 %v3882
        %v4128 = vunpack.c.h.b16 %v3882
        %v4129 = vunpack.c.l.b16 %v3883
        %v4130 = vunpack.c.h.b16 %v3883
        %v4131 = vunpack.c.l.b16 %v3884
        %v4132 = vunpack.c.h.b16 %v3884
        %v4133 = vunpack.c.l.b16 %v3885
        %v4134 = vunpack.c.h.b16 %v3885
        %v4135 = vunpack.c.l.b16 %v3886
        %v4136 = vunpack.c.h.b16 %v3886
        %v4137 = vunpack.c.l.b16 %v3887
        %v4138 = vunpack.c.h.b16 %v3887
        %v4139 = vunpack.c.l.b16 %v3888
        %v4140 = vunpack.c.h.b16 %v3888
        %v4141 = vunpack.c.l.b16 %v3889
        %v4142 = vunpack.c.h.b16 %v3889
        %v4143 = vunpack.c.l.b16 %v3890
        %v4144 = vunpack.c.h.b16 %v3890
        %v4145 = vunpack.c.l.b16 %v3891
        %v4146 = vunpack.c.h.b16 %v3891
        %v4147 = vunpack.c.l.b16 %v3892
        %v4148 = vunpack.c.h.b16 %v3892
        %v4149 = vunpack.c.l.b16 %v3893
        %v4150 = vunpack.c.h.b16 %v3893
        %v4151 = vunpack.c.l.b16 %v3894
        %v4152 = vunpack.c.h.b16 %v3894
        %v4153 = vunpack.c.l.b16 %v3895
        %v4154 = vunpack.c.h.b16 %v3895
        %v4155 = vunpack.c.l.b16 %v3896
        %v4156 = vunpack.c.h.b16 %v3896
        %v4157 = vunpack.c.l.b16 %v3897
        %v4158 = vunpack.c.h.b16 %v3897
        %v4159 = vunpack.c.l.b16 %v3898
        %v4160 = vunpack.c.h.b16 %v3898
        %v4161 = vpack.c.b16 %v4021, %v4017
        %v4162 = vpack.c.b16 %v4022, %v4018
        %v4163 = vpack.c.b16 %v4023, %v4019
        %v4164 = vpack.c.b16 %v4024, %v4020
        %v4165 = vpack.c.b16 %v4029, %v4025
        %v4166 = vpack.c.b16 %v4030, %v4026
        %v4167 = vpack.c.b16 %v4031, %v4027
        %v4168 = vpack.c.b16 %v4032, %v4028
        %v4169 = vpack.c.b16 %v4037, %v4033
        %v4170 = vpack.c.b16 %v4038, %v4034
        %v4171 = vpack.c.b16 %v4039, %v4035
        %v4172 = vpack.c.b16 %v4040, %v4036
        %v4173 = vpack.c.b16 %v4045, %v4041
        %v4174 = vpack.c.b16 %v4046, %v4042
        %v4175 = vpack.c.b16 %v4047, %v4043
        %v4176 = vpack.c.b16 %v4048, %v4044
        %v4177 = vpack.c.b16 %v4053, %v4049
        %v4178 = vpack.c.b16 %v4054, %v4050
        %v4179 = vpack.c.b16 %v4055, %v4051
        %v4180 = vpack.c.b16 %v4056, %v4052
        %v4181 = vpack.c.b16 %v4061, %v4057
        %v4182 = vpack.c.b16 %v4062, %v4058
        %v4183 = vpack.c.b16 %v4063, %v4059
        %v4184 = vpack.c.b16 %v4064, %v4060
        %v4185 = vpack.c.b16 %v4069, %v4065
        %v4186 = vpack.c.b16 %v4070, %v4066
        %v4187 = vpack.c.b16 %v4071, %v4067
        %v4188 = vpack.c.b16 %v4072, %v4068
        %v4189 = vpack.c.b16 %v4077, %v4073
        %v4190 = vpack.c.b16 %v4078, %v4074
        %v4191 = vpack.c.b16 %v4079, %v4075
        %v4192 = vpack.c.b16 %v4080, %v4076
        %v4193 = vpack.c.b16 %v4085, %v4081
        %v4194 = vpack.c.b16 %v4086, %v4082
        %v4195 = vpack.c.b16 %v4087, %v4083
        %v4196 = vpack.c.b16 %v4088, %v4084
        %v4197 = vpack.c.b16 %v4093, %v4089
        %v4198 = vpack.c.b16 %v4094, %v4090
        %v4199 = vpack.c.b16 %v4095, %v4091
        %v4200 = vpack.c.b16 %v4096, %v4092
        %v4201 = vpack.c.b16 %v4101, %v4097
        %v4202 = vpack.c.b16 %v4102, %v4098
        %v4203 = vpack.c.b16 %v4103, %v4099
        %v4204 = vpack.c.b16 %v4104, %v4100
        %v4205 = vpack.c.b16 %v4109, %v4105
        %v4206 = vpack.c.b16 %v4110, %v4106
        %v4207 = vpack.c.b16 %v4111, %v4107
        %v4208 = vpack.c.b16 %v4112, %v4108
        %v4209 = vpack.c.b16 %v4117, %v4113
        %v4210 = vpack.c.b16 %v4118, %v4114
        %v4211 = vpack.c.b16 %v4119, %v4115
        %v4212 = vpack.c.b16 %v4120, %v4116
        %v4213 = vpack.c.b16 %v4125, %v4121
        %v4214 = vpack.c.b16 %v4126, %v4122
        %v4215 = vpack.c.b16 %v4127, %v4123
        %v4216 = vpack.c.b16 %v4128, %v4124
        %v4217 = vpack.c.b16 %v4133, %v4129
        %v4218 = vpack.c.b16 %v4134, %v4130
        %v4219 = vpack.c.b16 %v4135, %v4131
        %v4220 = vpack.c.b16 %v4136, %v4132
        %v4221 = vpack.c.b16 %v4141, %v4137
        %v4222 = vpack.c.b16 %v4142, %v4138
        %v4223 = vpack.c.b16 %v4143, %v4139
        %v4224 = vpack.c.b16 %v4144, %v4140
        %v4225 = vpack.c.b16 %v4149, %v4145
        %v4226 = vpack.c.b16 %v4150, %v4146
        %v4227 = vpack.c.b16 %v4151, %v4147
        %v4228 = vpack.c.b16 %v4152, %v4148
        %v4229 = vpack.c.b16 %v4157, %v4153
        %v4230 = vpack.c.b16 %v4158, %v4154
        %v4231 = vpack.c.b16 %v4159, %v4155
        %v4232 = vpack.c.b16 %v4160, %v4156
        %v4306 = vsel %vm2198, %v3937, 0
        %v4309 = vsel %vm2198, %v3940, 0
        %4311 = vmatprep.subr.bf16.mxu0 %v4190
        %4312 = vmatpush1.bf16.msra.mxu0 %v4189
        %4313 = vmatprep.subr.bf16.mxu0 %v4186
        %4314 = vmatpush1.bf16.msra.mxu0 %v4185
        %4315 = vmatprep.subr.bf16.mxu0 %v4182
        %4316 = vmatpush1.bf16.msra.mxu0 %v4181
        %4317 = vmatprep.subr.bf16.mxu0 %v4178
        %4318 = vmatpush1.bf16.msra.mxu0 %v4177
        %4319 = vmatprep.subr.bf16.mxu0 %v4174
        %4320 = vmatpush1.bf16.msra.mxu0 %v4173
        %4321 = vmatprep.subr.bf16.mxu0 %v4170
        %4322 = vmatpush1.bf16.msra.mxu0 %v4169
        %4323 = vmatprep.subr.bf16.mxu0 %v4166
        %4324 = vmatpush1.bf16.msra.mxu0 %v4165
        %4325 = vmatprep.subr.bf16.mxu0 %v4162
        %4326 = vmatpush1.bf16.msra.mxu0 %v4161
        %4327 = vmatprep.subr.bf16.mxu0 %v4222
        %4328 = vmatpush2.bf16.msra.mxu0 %v4221
        %4329 = vmatprep.subr.bf16.mxu0 %v4218
        %4330 = vmatpush2.bf16.msra.mxu0 %v4217
        %4331 = vmatprep.subr.bf16.mxu0 %v4214
        %4332 = vmatpush2.bf16.msra.mxu0 %v4213
        %4333 = vmatprep.subr.bf16.mxu0 %v4210
        %4334 = vmatpush2.bf16.msra.mxu0 %v4209
        %4335 = vmatprep.subr.bf16.mxu0 %v4206
        %4336 = vmatpush2.bf16.msra.mxu0 %v4205
        %4337 = vmatprep.subr.bf16.mxu0 %v4202
        %4338 = vmatpush2.bf16.msra.mxu0 %v4201
        %4339 = vmatprep.subr.bf16.mxu0 %v4198
        %4340 = vmatpush2.bf16.msra.mxu0 %v4197
        %4341 = vmatprep.subr.bf16.mxu0 %v4194
        %4342 = vmatpush2.bf16.msra.mxu0 %v4193
        %4343 = vmatprep.mubr.bf16.mxu0 %v3936
        %4344 = vmatmul.mubr.bf16.gmra.mxu0 %v3935
        %v4345 = vpop.f32.mrf.mxu0
        %v4346 = vadd.f32 %v3901, %v4345
        %v4347 = vpop.f32.mrf.mxu0
        %v4348 = vadd.f32 %v3901, %v4347
        %v4349 = vpop.f32.mrf.mxu0
        %v4350 = vadd.f32 %v3905, %v4349
        %v4351 = vpop.f32.mrf.mxu0
        %v4352 = vadd.f32 %v3905, %v4351
        %4353 = vmatprep.mubr.bf16.mxu0 %v3939
        %4354 = vmatmul.mubr.bf16.gmra.mxu0 %v3938
        %v4355 = vpop.f32.mrf.mxu0
        %v4356 = vadd.f32 %v3909, %v4355
        %v4357 = vpop.f32.mrf.mxu0
        %v4358 = vadd.f32 %v3909, %v4357
        %v4359 = vpop.f32.mrf.mxu0
        %v4360 = vadd.f32 %v3913, %v4359
        %v4361 = vpop.f32.mrf.mxu0
        %v4362 = vadd.f32 %v3913, %v4361
        %4363 = vdwg.mxu0
        %4364 = vmatprep.subr.bf16.mxu0 0
        %4365 = vmatpush1.bf16.msra.mxu0 0
        %4366 = vmatprep.subr.bf16.mxu0 0
        %4367 = vmatpush1.bf16.msra.mxu0 0
        %4368 = vmatprep.subr.bf16.mxu0 0
        %4369 = vmatpush1.bf16.msra.mxu0 0
        %4370 = vmatprep.subr.bf16.mxu0 0
        %4371 = vmatpush1.bf16.msra.mxu0 0
        %4372 = vmatprep.subr.bf16.mxu0 0
        %4373 = vmatpush1.bf16.msra.mxu0 0
        %4374 = vmatprep.subr.bf16.mxu0 0
        %4375 = vmatpush1.bf16.msra.mxu0 0
        %4376 = vmatprep.subr.bf16.mxu0 %v4230
        %4377 = vmatpush1.bf16.msra.mxu0 %v4229
        %4378 = vmatprep.subr.bf16.mxu0 %v4226
        %4379 = vmatpush1.bf16.msra.mxu0 %v4225
        %4380 = vmatprep.subr.bf16.mxu0 0
        %4381 = vmatpush2.bf16.msra.mxu0 0
        %4382 = vmatprep.subr.bf16.mxu0 0
        %4383 = vmatpush2.bf16.msra.mxu0 0
        %4384 = vmatprep.subr.bf16.mxu0 0
        %4385 = vmatpush2.bf16.msra.mxu0 0
        %4386 = vmatprep.subr.bf16.mxu0 0
        %4387 = vmatpush2.bf16.msra.mxu0 0
        %4388 = vmatprep.subr.bf16.mxu0 0
        %4389 = vmatpush2.bf16.msra.mxu0 0
        %4390 = vmatprep.subr.bf16.mxu0 0
        %4391 = vmatpush2.bf16.msra.mxu0 0
        %4392 = vmatprep.subr.bf16.mxu0 0
        %4393 = vmatpush2.bf16.msra.mxu0 0
        %4394 = vmatprep.subr.bf16.mxu0 0
        %4395 = vmatpush2.bf16.msra.mxu0 0
        %4396 = vmatprep.mubr.bf16.mxu0 0
        %4397 = vmatmul.mubr.bf16.gmra.mxu0 %v4306
        %v4398 = vpop.f32.mrf.mxu0
        %v4399 = vadd.f32 %v4346, %v4398
        %v4400 = vpop.f32.mrf.mxu0
        %v4401 = vadd.f32 %v4348, %v4400
        %v4402 = vpop.f32.mrf.mxu0
        %v4403 = vadd.f32 %v4350, %v4402
        %v4404 = vpop.f32.mrf.mxu0
        %v4405 = vadd.f32 %v4352, %v4404
        %4406 = vmatprep.mubr.bf16.mxu0 0
        %4407 = vmatmul.mubr.bf16.gmra.mxu0 %v4309
        %v4408 = vpop.f32.mrf.mxu0
        %v4409 = vadd.f32 %v4356, %v4408
        %v4410 = vpop.f32.mrf.mxu0
        %v4411 = vadd.f32 %v4358, %v4410
        %v4412 = vpop.f32.mrf.mxu0
        %v4413 = vadd.f32 %v4360, %v4412
        %v4414 = vpop.f32.mrf.mxu0
        %v4415 = vadd.f32 %v4362, %v4414
        %4416 = vdwg.mxu0
        %4417 = vmatprep.subr.bf16.mxu0 %v4192
        %4418 = vmatpush1.bf16.msra.mxu0 %v4191
        %4419 = vmatprep.subr.bf16.mxu0 %v4188
        %4420 = vmatpush1.bf16.msra.mxu0 %v4187
        %4421 = vmatprep.subr.bf16.mxu0 %v4184
        %4422 = vmatpush1.bf16.msra.mxu0 %v4183
        %4423 = vmatprep.subr.bf16.mxu0 %v4180
        %4424 = vmatpush1.bf16.msra.mxu0 %v4179
        %4425 = vmatprep.subr.bf16.mxu0 %v4176
        %4426 = vmatpush1.bf16.msra.mxu0 %v4175
        %4427 = vmatprep.subr.bf16.mxu0 %v4172
        %4428 = vmatpush1.bf16.msra.mxu0 %v4171
        %4429 = vmatprep.subr.bf16.mxu0 %v4168
        %4430 = vmatpush1.bf16.msra.mxu0 %v4167
        %4431 = vmatprep.subr.bf16.mxu0 %v4164
        %4432 = vmatpush1.bf16.msra.mxu0 %v4163
        %4433 = vmatprep.subr.bf16.mxu0 %v4224
        %4434 = vmatpush2.bf16.msra.mxu0 %v4223
        %4435 = vmatprep.subr.bf16.mxu0 %v4220
        %4436 = vmatpush2.bf16.msra.mxu0 %v4219
        %4437 = vmatprep.subr.bf16.mxu0 %v4216
        %4438 = vmatpush2.bf16.msra.mxu0 %v4215
        %4439 = vmatprep.subr.bf16.mxu0 %v4212
        %4440 = vmatpush2.bf16.msra.mxu0 %v4211
        %4441 = vmatprep.subr.bf16.mxu0 %v4208
        %4442 = vmatpush2.bf16.msra.mxu0 %v4207
        %4443 = vmatprep.subr.bf16.mxu0 %v4204
        %4444 = vmatpush2.bf16.msra.mxu0 %v4203
        %4445 = vmatprep.subr.bf16.mxu0 %v4200
        %4446 = vmatpush2.bf16.msra.mxu0 %v4199
        %4447 = vmatprep.subr.bf16.mxu0 %v4196
        %4448 = vmatpush2.bf16.msra.mxu0 %v4195
        %4449 = vmatprep.mubr.bf16.mxu0 %v3936
        %4450 = vmatmul.mubr.bf16.gmra.mxu0 %v3935
        %v4451 = vpop.f32.mrf.mxu0
        %v4452 = vadd.f32 %v3901, %v4451
        %v4453 = vpop.f32.mrf.mxu0
        %v4454 = vadd.f32 %v3901, %v4453
        %v4455 = vpop.f32.mrf.mxu0
        %v4456 = vadd.f32 %v3905, %v4455
        %v4457 = vpop.f32.mrf.mxu0
        %v4458 = vadd.f32 %v3905, %v4457
        %4459 = vmatprep.mubr.bf16.mxu0 %v3939
        %4460 = vmatmul.mubr.bf16.gmra.mxu0 %v3938
        %v4461 = vpop.f32.mrf.mxu0
        %v4462 = vadd.f32 %v3909, %v4461
        %v4463 = vpop.f32.mrf.mxu0
        %v4464 = vadd.f32 %v3909, %v4463
        %v4465 = vpop.f32.mrf.mxu0
        %v4466 = vadd.f32 %v3913, %v4465
        %v4467 = vpop.f32.mrf.mxu0
        %v4468 = vadd.f32 %v3913, %v4467
        %4469 = vdwg.mxu0
        %4470 = vmatprep.subr.bf16.mxu0 0
        %4471 = vmatpush1.bf16.msra.mxu0 0
        %4472 = vmatprep.subr.bf16.mxu0 0
        %4473 = vmatpush1.bf16.msra.mxu0 0
        %4474 = vmatprep.subr.bf16.mxu0 0
        %4475 = vmatpush1.bf16.msra.mxu0 0
        %4476 = vmatprep.subr.bf16.mxu0 0
        %4477 = vmatpush1.bf16.msra.mxu0 0
        %4478 = vmatprep.subr.bf16.mxu0 0
        %4479 = vmatpush1.bf16.msra.mxu0 0
        %4480 = vmatprep.subr.bf16.mxu0 0
        %4481 = vmatpush1.bf16.msra.mxu0 0
        %4482 = vmatprep.subr.bf16.mxu0 %v4232
        %4483 = vmatpush1.bf16.msra.mxu0 %v4231
        %4484 = vmatprep.subr.bf16.mxu0 %v4228
        %4485 = vmatpush1.bf16.msra.mxu0 %v4227
        %4486 = vmatprep.subr.bf16.mxu0 0
        %4487 = vmatpush2.bf16.msra.mxu0 0
        %4488 = vmatprep.subr.bf16.mxu0 0
        %4489 = vmatpush2.bf16.msra.mxu0 0
        %4490 = vmatprep.subr.bf16.mxu0 0
        %4491 = vmatpush2.bf16.msra.mxu0 0
        %4492 = vmatprep.subr.bf16.mxu0 0
        %4493 = vmatpush2.bf16.msra.mxu0 0
        %4494 = vmatprep.subr.bf16.mxu0 0
        %4495 = vmatpush2.bf16.msra.mxu0 0
        %4496 = vmatprep.subr.bf16.mxu0 0
        %4497 = vmatpush2.bf16.msra.mxu0 0
        %4498 = vmatprep.subr.bf16.mxu0 0
        %4499 = vmatpush2.bf16.msra.mxu0 0
        %4500 = vmatprep.subr.bf16.mxu0 0
        %4501 = vmatpush2.bf16.msra.mxu0 0
        %4502 = vmatprep.mubr.bf16.mxu0 0
        %4503 = vmatmul.mubr.bf16.gmra.mxu0 %v4306
        %v4504 = vpop.f32.mrf.mxu0
        %v4505 = vadd.f32 %v4452, %v4504
        %v4506 = vpop.f32.mrf.mxu0
        %v4507 = vadd.f32 %v4454, %v4506
        %v4508 = vpop.f32.mrf.mxu0
        %v4509 = vadd.f32 %v4456, %v4508
        %v4510 = vpop.f32.mrf.mxu0
        %v4511 = vadd.f32 %v4458, %v4510
        %4512 = vmatprep.mubr.bf16.mxu0 0
        %4513 = vmatmul.mubr.bf16.gmra.mxu0 %v4309
        %v4514 = vpop.f32.mrf.mxu0
        %v4515 = vadd.f32 %v4462, %v4514
        %v4516 = vpop.f32.mrf.mxu0
        %v4517 = vadd.f32 %v4464, %v4516
        %v4518 = vpop.f32.mrf.mxu0
        %v4519 = vadd.f32 %v4466, %v4518
        %v4520 = vpop.f32.mrf.mxu0
        %v4521 = vadd.f32 %v4468, %v4520
        %4522 = vdwg.mxu0
        %v4523 = vld [vmem:[%s229] sm:$0xff]
        %v4524 = vld [vmem:[%s229 + $0x8] sm:$0xff]
        %v4525 = vld [vmem:[%s229 + $0x10] sm:$0xff]
        %v4526 = vld [vmem:[%s229 + $0x18] sm:$0xff]
        %v4527 = vld [vmem:[%s229 + $0x20] sm:$0xff]
        %v4528 = vld [vmem:[%s229 + $0x28] sm:$0xff]
        %v4529 = vld [vmem:[%s229 + $0x30] sm:$0xff]
        %v4530 = vld [vmem:[%s229 + $0x38] sm:$0xff]
        %v4531 = vadd.f32 %v4523, %v4399
        %v4532 = vadd.f32 %v4524, %v4401
        %v4533 = vadd.f32 %v4525, %v4403
        %v4534 = vadd.f32 %v4526, %v4405
        %v4535 = vadd.f32 %v4527, %v4409
        %v4536 = vadd.f32 %v4528, %v4411
        %v4537 = vadd.f32 %v4529, %v4413
        %v4538 = vadd.f32 %v4530, %v4415
        %4539 = vst [vmem:[%s261] sm:$0xff] %v4531
        %4540 = vst [vmem:[%s261 + $0x8] sm:$0xff] %v4532
        %4541 = vst [vmem:[%s261 + $0x10] sm:$0xff] %v4533
        %4542 = vst [vmem:[%s261 + $0x18] sm:$0xff] %v4534
        %4543 = vst [vmem:[%s261 + $0x20] sm:$0xff] %v4535
        %4544 = vst [vmem:[%s261 + $0x28] sm:$0xff] %v4536
        %4545 = vst [vmem:[%s261 + $0x30] sm:$0xff] %v4537
        %4546 = vst [vmem:[%s261 + $0x38] sm:$0xff] %v4538
        %v4547 = vld [vmem:[%s1051] sm:$0xff]
        %v4548 = vld [vmem:[%s1051 + $0x8] sm:$0xff]
        %v4549 = vld [vmem:[%s1051 + $0x10] sm:$0xff]
        %v4550 = vld [vmem:[%s1051 + $0x18] sm:$0xff]
        %v4551 = vld [vmem:[%s1051 + $0x20] sm:$0xff]
        %v4552 = vld [vmem:[%s1051 + $0x28] sm:$0xff]
        %v4553 = vld [vmem:[%s1051 + $0x30] sm:$0xff]
        %v4554 = vld [vmem:[%s1051 + $0x38] sm:$0xff]
        %v4555 = vadd.f32 %v4547, %v4505
        %v4556 = vadd.f32 %v4548, %v4507
        %v4557 = vadd.f32 %v4549, %v4509
        %v4558 = vadd.f32 %v4550, %v4511
        %v4559 = vadd.f32 %v4551, %v4515
        %v4560 = vadd.f32 %v4552, %v4517
        %v4561 = vadd.f32 %v4553, %v4519
        %v4562 = vadd.f32 %v4554, %v4521
        %s4563 = scalar_lea.vmem %s261, 64 [#allocation6]
        %4564 = vst [vmem:[%s4563] sm:$0xff] %v4555
        %4565 = vst [vmem:[%s4563 + $0x8] sm:$0xff] %v4556
        %4566 = vst [vmem:[%s4563 + $0x10] sm:$0xff] %v4557
        %4567 = vst [vmem:[%s4563 + $0x18] sm:$0xff] %v4558
        %4568 = vst [vmem:[%s4563 + $0x20] sm:$0xff] %v4559
        %4569 = vst [vmem:[%s4563 + $0x28] sm:$0xff] %v4560
        %4570 = vst [vmem:[%s4563 + $0x30] sm:$0xff] %v4561
        %4571 = vst [vmem:[%s4563 + $0x38] sm:$0xff] %v4562
        %s4572 = sand.u32 %s145, 1
        %s4573 = scalar_lea.sflag [#allocation5], %s4572
        %s4574 = sand.u32 %s145, 1
        %s4575 = smul.addr %s4574, 128
        %s4576 = scalar_lea.vmem [#allocation6], %s4575
        // Predicated region
        $region45: #{tpu_custom_call.1} parent=39 // pred_check
          %p4577 = pneg %p155
        $region46: #{tpu_custom_call.1} parent=39 // pred_check_branch
          %4579 = sbr.rel (%p4577) target = $region48
        $region47: #{tpu_custom_call.1} parent=39 // pred_region
          %s4580 = smul.u32 2, %s22
          %s4582 = ssub.s32 2048, 2048
          %4583 = vsyncadd %s4573, %s4582
          %s4584 = smul.addr %s4580, 8
          %s4585 = smul.addr %s4584, 128
          %s4586 = scalar_lea.hbm %s5, %s4585
          %s4587 = sshll.u32 %s4576, 4
          %s4588 = int_to_ptr.vmem [resolvable:$true] %s4587
          %4593 = dma.vmem_to_hbm [thread:$0]  %s4588, 2048, %s4586, %s4573, 256, 256, 16
        $region48: #{tpu_custom_call.1} parent=39 // pred_fallthru
          _
      $region40: #{tpu_custom_call.1} parent=5 // pred_fallthru
        _
      %p4594 = scmp.le.s32.totalorder 2, %s17
      // Predicated region
      $region49: #{tpu_custom_call.1} parent=5 // pred_check
        %p4595 = pneg %p4594
      $region50: #{tpu_custom_call.1} parent=5 // pred_check_branch
        %4597 = sbr.rel (%p4595) target = $region52
      $region51: #{tpu_custom_call.1} parent=5 // pred_region
        %s4598 = ssub.s32 %s17, 2
        // Predicated region
        $region53: #{tpu_custom_call.1} parent=51 // pred_check
          %p4599 = pneg %p161
        $region54: #{tpu_custom_call.1} parent=51 // pred_check_branch
          %4601 = sbr.rel (%p4599) target = $region56
        $region55: #{tpu_custom_call.1} parent=51 // pred_region
          %s4602 = sand.u32 %s146, 1
          %s4603 = scalar_lea.sflag [#allocation5], %s4602
          %s4604 = sand.u32 %s146, 1
          %s4605 = smul.addr %s4604, 128
          %s4606 = scalar_lea.vmem [#allocation6], %s4605
          %4607 = dma.done %s4603, 2048
        $region56: #{tpu_custom_call.1} parent=51 // pred_fallthru
          _
      $region52: #{tpu_custom_call.1} parent=5 // pred_fallthru
        _
    $region6: #{tpu_custom_call.1} parent=1 // loop_footer
      %s21 = sadd.s32 1, %s17
    $region7: #{tpu_custom_call.1} parent=1 // loop_footer_branch
      %16 = sbr.rel target = $region3
    $region8: #{tpu_custom_call.1} parent=1 // loop_exit
      _
    %4608 = vsyncpa [#allocation4], 1
    %s4609 = scalar_lea.sflag [#allocation4], 1
    %4610 = vsyncpa %s4609, 1
    %4611 = vsyncpa [#allocation5], 1
    %s4612 = scalar_lea.sflag [#allocation5], 1
    %4613 = vsyncpa %s4612, 1

</llo_original>
